<compile_context>
chip_gen: v7x
topology: tpu7x:2x2x1
jax: 0.10.0
libtpu: 0.0.40
codegen_flags: <defaults>
</compile_context>

<pallas_src>
import functools

import numpy as np
import jax
import jax.numpy as jnp
from jax.experimental import pallas as pl
from jax.experimental.pallas import tpu as pltpu


# ----------------------------- Pallas kernel ------------------------------- #

def _bottleneck_kernel(f_ref, p_ref, wf_ref, wp_ref, b_ref, o_ref, *,
                       neg_slope, n_priors, compute_dtype):
    """Fused concat + 1x1 bottleneck conv + bias + LeakyReLU.

    f_ref : (TM, Cin)       full-res feats rows (native dtype, cast in-kernel)
    p_ref : (TM, n_priors)  upsampled pyramid priors rows (f32)
    wf_ref: (Cin, Cout)     bottleneck weight block acting on feats (compute_dtype)
    wp_ref: (n_priors, Cout) bottleneck weight block acting on priors (f32)
    b_ref : (1, Cout)       bias (f32)
    o_ref : (TM, Cout)      output tile (native Cout, masked vst if < 128)
    """
    # Feats block: single MXU matmul; bf16 operands by default (3-4x MXU
    # throughput on v5e/v6e/v7x), f32 accumulation.  The cast is an in-kernel
    # VPU op -- no extra HBM pass of feats.
    acc = jnp.dot(f_ref[...].astype(compute_dtype), wf_ref[...],
                  preferred_element_type=jnp.float32)

    # Priors block: K = n_priors (typically 4) is far too small to justify an
    # MXU push + MRF drain, so unroll into VPU broadcast-FMAs (VALU has slack).
    p = p_ref[...].astype(jnp.float32)
    wp = wp_ref[...]
    for k in range(n_priors):
        acc = acc + p[:, k:k + 1] * wp[k:k + 1, :]

    acc = acc + b_ref[...]                                   # (1, Cout) broadcast
    o_ref[...] = jnp.where(acc > 0, acc, neg_slope * acc).astype(o_ref.dtype)


def _bottleneck_pallas(feats_nhwc, priors_nhwc, w, b, *, neg_slope=0.2,
                       compute_dtype=jnp.bfloat16, tile_rows=1024):
    """out[p, :] = leaky_relu(concat(priors, feats)[p, :] @ w + b) per pixel p."""
    n, h, wd, cin = feats_nhwc.shape
    n_pr = priors_nhwc.shape[-1]
    cout = w.shape[-1]
    out_dtype = feats_nhwc.dtype

    # Fold batch + spatial into the matmul M dimension.  No astype, no pad:
    # a dims-merging reshape is free, so the kernel reads feats straight from
    # its HBM layout.
    rows = n * h * wd
    f = feats_nhwc.reshape(rows, cin)
    p = priors_nhwc.reshape(rows, n_pr)

    # Split the bottleneck weight: rows [0:n_pr] act on priors (PyTorch cat
    # order is [stage outputs..., feats]), rows [n_pr:] act on feats.
    # Pre-cast once (tiny) so only activations are cast in-kernel.
    wp = w[:n_pr, :].astype(jnp.float32)
    wf = w[n_pr:, :].astype(compute_dtype)
    bb = b.reshape(1, cout).astype(jnp.float32)

    # Row tile: multiple of 8 (sublane); guarantee >= 2 grid steps so the
    # "parallel" axis can shard across both v7x TensorCores.
    tm = int(tile_rows)
    if rows <= tm:
        tm = max(8, ((pl.cdiv(rows, 2) + 7) // 8) * 8)

    # VMEM footprint guard (double-buffered activations/output + resident
    # weights, lane-padded) -- keeps us under v7x's 64 MiB physical VMEM and
    # raises the scoped limit only when the big-tile path actually needs it.
    def _ru(x, m):
        return ((x + m - 1) // m) * m

    def _vmem_estimate(tile_m):
        in_b = np.dtype(feats_nhwc.dtype).itemsize
        out_b = np.dtype(out_dtype).itemsize
        w_b = np.dtype(compute_dtype).itemsize
        act = 2 * tile_m * (_ru(cin, 128) * in_b + _ru(n_pr, 128) * 4)
        outp = 2 * tile_m * _ru(cout, 128) * out_b
        wts = 2 * (_ru(cin, 8) * _ru(cout, 128) * w_b
                   + _ru(n_pr, 8) * _ru(cout, 128) * 4
                   + 8 * _ru(cout, 128) * 4)
        return act + outp + wts

    budget = 48 * 1024 * 1024
    while _vmem_estimate(tm) > budget and tm > 256:
        tm = max(256, tm // 2)
    est = _vmem_estimate(tm)

    cp_kwargs = {"dimension_semantics": ("parallel",)}
    if est > 30 * 1024 * 1024:
        cp_kwargs["vmem_limit_bytes"] = min(int(est * 1.25), 64 * 1024 * 1024)
    # TODO(synk): on v7x with very large Cin*Cout, single-buffer the resident
    # weight blocks (pipeline_mode=pl.Buffered(1)) or add a K grid axis with a
    # VMEM accumulator instead of holding the whole weight resident.

    grid = (pl.cdiv(rows, tm),)

    out = pl.pallas_call(
        functools.partial(_bottleneck_kernel, neg_slope=neg_slope,
                          n_priors=n_pr, compute_dtype=compute_dtype),
        out_shape=jax.ShapeDtypeStruct((rows, cout), out_dtype),
        grid=grid,
        in_specs=[
            pl.BlockSpec((tm, cin), lambda i: (i, 0)),
            pl.BlockSpec((tm, n_pr), lambda i: (i, 0)),
            pl.BlockSpec((cin, cout), lambda i: (0, 0)),
            pl.BlockSpec((n_pr, cout), lambda i: (0, 0)),
            pl.BlockSpec((1, cout), lambda i: (0, 0)),
        ],
        out_specs=pl.BlockSpec((tm, cout), lambda i: (i, 0)),
        compiler_params=pltpu.CompilerParams(**cp_kwargs),
    )(f, p, wf, wp, bb)

    return out.reshape(n, h, wd, cout)


# ------------------------------ glue (plain JAX) --------------------------- #
# TODO(synk): the per-scale avg-pool / tiny 1x1 stage conv / nearest upsample
# run as XLA glue on coarse (<= H/4 x W/4, ct-channel) maps.  Fusing the
# nearest-upsample into the kernel (tile over (n, h) and replicate coarse
# rows in VMEM) would save the full-res priors HBM round trip; it only pays
# noticeably when Cin is small, so it is left as glue for now.

def _avg_pool_floor(x_nhwc, s):
    """AvgPool2d(kernel=s, stride=s, no padding): floor output size, tail dropped."""
    n, h, w, c = x_nhwc.shape
    ho, wo = h // s, w // s
    xc = x_nhwc[:, :ho * s, :wo * s, :]
    return xc.reshape(n, ho, s, wo, s, c).mean(axis=(2, 4))


def _nearest_idx(out_size, in_size):
    """PyTorch F.interpolate(mode='nearest') source index: floor(i * in / out)."""
    return (np.arange(out_size) * in_size) // out_size


# ----------------------------- module wrapper ------------------------------ #

class PyramidPoolingPallas:
    """Mirror of the PyTorch PyramidPooling module (forward pass only)."""

    def __init__(self, key, in_channels, out_channels, scales=(4, 8, 16, 32),
                 ct_channels=1, compute_dtype=jnp.bfloat16):
        self.in_channels = in_channels
        self.out_channels = out_channels
        self.scales = tuple(scales)
        self.ct = ct_channels
        self.compute_dtype = compute_dtype

        keys = jax.random.split(key, len(self.scales) + 1)
        # Stage 1x1 convs, bias=False. torch init: uniform(+-1/sqrt(fan_in)).
        bound = float(in_channels) ** -0.5
        self.stage_w = [
            jax.random.uniform(keys[i], (in_channels, ct_channels), jnp.float32,
                               -bound, bound)
            for i in range(len(self.scales))
        ]
        # Bottleneck 1x1 conv (bias=True). Input channel order matches
        # torch.cat([stage outputs..., feats], dim=1).
        cin_b = in_channels + len(self.scales) * ct_channels
        bound_b = float(cin_b) ** -0.5
        kw, kb = jax.random.split(keys[-1])
        self.bott_w = jax.random.uniform(kw, (cin_b, out_channels), jnp.float32,
                                         -bound_b, bound_b)
        self.bott_b = jax.random.uniform(kb, (out_channels,), jnp.float32,
                                         -bound_b, bound_b)

    def __call__(self, x_nchw):
        x = jnp.transpose(x_nchw, (0, 2, 3, 1))          # NCHW -> NHWC
        n, h, w, c = x.shape
        assert min(h, w) >= max(self.scales), \
            "spatial size must be >= the largest pooling scale"

        priors = []
        for s, ws in zip(self.scales, self.stage_w):
            pooled = _avg_pool_floor(x, s)               # (n, h//s, w//s, c)
            pr = jnp.einsum('nhwc,cd->nhwd', pooled, ws)  # 1x1 conv, no bias
            pr = jnp.where(pr > 0, pr, 0.2 * pr)          # LeakyReLU(0.2)
            ih = _nearest_idx(h, pooled.shape[1])
            iw = _nearest_idx(w, pooled.shape[2])
            pr = jnp.take(jnp.take(pr, ih, axis=1), iw, axis=2)
            priors.append(pr)
        priors_up = jnp.concatenate(priors, axis=-1)      # (n, h, w, S*ct)

        y = _bottleneck_pallas(x, priors_up, self.bott_w, self.bott_b,
                               neg_slope=0.2, compute_dtype=self.compute_dtype)
        return jnp.transpose(y, (0, 3, 1, 2))             # NHWC -> NCHW


# ------------------------- pure-JAX reference check ------------------------ #

def _ref_pyramid_pooling(x_nchw, m):
    x = jnp.transpose(x_nchw, (0, 2, 3, 1))               # NHWC
    n, h, w, c = x.shape
    priors = []
    for s, ws in zip(m.scales, m.stage_w):
        summed = jax.lax.reduce_window(x, 0.0, jax.lax.add,
                                       (1, s, s, 1), (1, s, s, 1), 'VALID')
        pooled = summed / float(s * s)
        pr = jax.lax.conv_general_dilated(
            pooled, ws.reshape(1, 1, c, m.ct), (1, 1), 'VALID',
            dimension_numbers=('NHWC', 'HWIO', 'NHWC'))
        pr = jnp.where(pr > 0, pr, 0.2 * pr)
        ih = _nearest_idx(h, pooled.shape[1])
        iw = _nearest_idx(w, pooled.shape[2])
        priors.append(pr[:, ih][:, :, iw])
    cat = jnp.concatenate(priors + [x], axis=-1)
    y = jax.lax.conv_general_dilated(
        cat, m.bott_w.reshape(1, 1, cat.shape[-1], m.out_channels), (1, 1),
        'VALID', dimension_numbers=('NHWC', 'HWIO', 'NHWC')) + m.bott_b
    y = jnp.where(y > 0, y, 0.2 * y)
    return jnp.transpose(y, (0, 3, 1, 2))


# ----------------------------------- main ----------------------------------- #

if __name__ == "__main__":
    key = jax.random.PRNGKey(0)
    kx, kp = jax.random.split(key)

    # NCHW input; spatial 32 so the default scales (4, 8, 16, 32) all pool to >= 1.
    x = jax.random.normal(kx, (2, 4, 32, 32), jnp.float32)

    # Exact-path check: f32 MXU operands, tight tolerance.
    mod_f32 = PyramidPoolingPallas(kp, in_channels=4, out_channels=8,
                                   scales=(4, 8, 16, 32), ct_channels=1,
                                   compute_dtype=jnp.float32)
    y_f32 = jax.block_until_ready(mod_f32(x))
    assert y_f32.shape == (2, 8, 32, 32), y_f32.shape

    y_ref = _ref_pyramid_pooling(x, mod_f32)
    err_f32 = float(jnp.max(jnp.abs(y_f32 - y_ref)))
    assert jnp.allclose(y_f32, y_ref, atol=1e-4, rtol=1e-4), err_f32

    # Default fast path: bf16 MXU operands cast in-kernel, f32 accumulation.
    mod_bf16 = PyramidPoolingPallas(kp, in_channels=4, out_channels=8,
                                    scales=(4, 8, 16, 32), ct_channels=1,
                                    compute_dtype=jnp.bfloat16)
    y_bf16 = jax.block_until_ready(mod_bf16(x))
    err_bf16 = float(jnp.max(jnp.abs(y_bf16 - y_ref)))
    assert err_bf16 < 5e-2, err_bf16

    print("KERNEL_OK")
</pallas_src>

<mosaic_0001>
module attributes {stable_mosaic.version = 11 : i64} {
  func.func @_bottleneck_kernel(%arg0: i32, %arg1: memref<1024x4xf32, #tpu.memory_space<vmem>>, %arg2: memref<1024x4xf32, #tpu.memory_space<vmem>>, %arg3: memref<4x8xf32, #tpu.memory_space<vmem>>, %arg4: memref<4x8xf32, #tpu.memory_space<vmem>>, %arg5: memref<1x8xf32, #tpu.memory_space<vmem>>, %arg6: memref<1024x8xf32, #tpu.memory_space<vmem>>) attributes {dimension_semantics = [#tpu.dimension_semantics<parallel>], iteration_bounds = array<i64: 2>, scalar_prefetch = 0 : i64, scratch_operands = 0 : i64, tpu.core_type = #tpu.core_type<tc>, window_params = [{transform_indices = @transform_0, window_bounds = array<i64: 1024, 4>}, {transform_indices = @transform_1, window_bounds = array<i64: 1024, 4>}, {pipeline_mode = #tpu.pipeline_mode<synchronous>, transform_indices = @transform_2, window_bounds = array<i64: 4, 8>}, {pipeline_mode = #tpu.pipeline_mode<synchronous>, transform_indices = @transform_3, window_bounds = array<i64: 4, 8>}, {pipeline_mode = #tpu.pipeline_mode<synchronous>, transform_indices = @transform_4, window_bounds = array<i64: 1, 8>}, {transform_indices = @transform_5, window_bounds = array<i64: 1024, 8>}]} {
    %c0 = arith.constant 0 : index
    %c0_0 = arith.constant 0 : index
    %0 = vector.load %arg1[%c0, %c0_0] : memref<1024x4xf32, #tpu.memory_space<vmem>>, vector<1024x4xf32>
    %c0_1 = arith.constant 0 : index
    %c0_2 = arith.constant 0 : index
    %1 = vector.load %arg3[%c0_1, %c0_2] : memref<4x8xf32, #tpu.memory_space<vmem>>, vector<4x8xf32>
    %cst = arith.constant dense<0.000000e+00> : vector<1024x8xf32>
    %2 = tpu.matmul %0, %1, %cst {dimension_numbers = #tpu.dot_dimension_numbers<[1], [0], [0], [1], [0, 0, 1, 1], [], []>} : vector<1024x4xf32>, vector<4x8xf32>, vector<1024x8xf32> -> vector<1024x8xf32>
    %c0_3 = arith.constant 0 : index
    %c0_4 = arith.constant 0 : index
    %3 = vector.load %arg2[%c0_3, %c0_4] : memref<1024x4xf32, #tpu.memory_space<vmem>>, vector<1024x4xf32>
    %c0_5 = arith.constant 0 : index
    %c0_6 = arith.constant 0 : index
    %4 = vector.load %arg4[%c0_5, %c0_6] : memref<4x8xf32, #tpu.memory_space<vmem>>, vector<4x8xf32>
    %5 = vector.extract_strided_slice %3 {offsets = [0, 0], sizes = [1024, 1], strides = [1, 1]} : vector<1024x4xf32> to vector<1024x1xf32>
    %6 = vector.extract_strided_slice %4 {offsets = [0, 0], sizes = [1, 8], strides = [1, 1]} : vector<4x8xf32> to vector<1x8xf32>
    %7 = vector.broadcast %5 : vector<1024x1xf32> to vector<1024x8xf32>
    %8 = vector.broadcast %6 : vector<1x8xf32> to vector<1024x8xf32>
    %9 = arith.mulf %7, %8 : vector<1024x8xf32>
    %10 = arith.addf %2, %9 : vector<1024x8xf32>
    %11 = vector.extract_strided_slice %3 {offsets = [0, 1], sizes = [1024, 1], strides = [1, 1]} : vector<1024x4xf32> to vector<1024x1xf32>
    %12 = vector.extract_strided_slice %4 {offsets = [1, 0], sizes = [1, 8], strides = [1, 1]} : vector<4x8xf32> to vector<1x8xf32>
    %13 = vector.broadcast %11 : vector<1024x1xf32> to vector<1024x8xf32>
    %14 = vector.broadcast %12 : vector<1x8xf32> to vector<1024x8xf32>
    %15 = arith.mulf %13, %14 : vector<1024x8xf32>
    %16 = arith.addf %10, %15 : vector<1024x8xf32>
    %17 = vector.extract_strided_slice %3 {offsets = [0, 2], sizes = [1024, 1], strides = [1, 1]} : vector<1024x4xf32> to vector<1024x1xf32>
    %18 = vector.extract_strided_slice %4 {offsets = [2, 0], sizes = [1, 8], strides = [1, 1]} : vector<4x8xf32> to vector<1x8xf32>
    %19 = vector.broadcast %17 : vector<1024x1xf32> to vector<1024x8xf32>
    %20 = vector.broadcast %18 : vector<1x8xf32> to vector<1024x8xf32>
    %21 = arith.mulf %19, %20 : vector<1024x8xf32>
    %22 = arith.addf %16, %21 : vector<1024x8xf32>
    %23 = vector.extract_strided_slice %3 {offsets = [0, 3], sizes = [1024, 1], strides = [1, 1]} : vector<1024x4xf32> to vector<1024x1xf32>
    %24 = vector.extract_strided_slice %4 {offsets = [3, 0], sizes = [1, 8], strides = [1, 1]} : vector<4x8xf32> to vector<1x8xf32>
    %25 = vector.broadcast %23 : vector<1024x1xf32> to vector<1024x8xf32>
    %26 = vector.broadcast %24 : vector<1x8xf32> to vector<1024x8xf32>
    %27 = arith.mulf %25, %26 : vector<1024x8xf32>
    %28 = arith.addf %22, %27 : vector<1024x8xf32>
    %c0_7 = arith.constant 0 : index
    %c0_8 = arith.constant 0 : index
    %29 = vector.load %arg5[%c0_7, %c0_8] : memref<1x8xf32, #tpu.memory_space<vmem>>, vector<1x8xf32>
    %30 = vector.broadcast %29 : vector<1x8xf32> to vector<1024x8xf32>
    %31 = arith.addf %28, %30 : vector<1024x8xf32>
    %cst_9 = arith.constant 0.000000e+00 : f32
    %32 = vector.broadcast %cst_9 : f32 to vector<1024x8xf32>
    %33 = arith.cmpf ogt, %31, %32 : vector<1024x8xf32>
    %cst_10 = arith.constant 2.000000e-01 : f32
    %34 = vector.broadcast %cst_10 : f32 to vector<1024x8xf32>
    %35 = arith.mulf %34, %31 : vector<1024x8xf32>
    %36 = arith.select %33, %31, %35 : vector<1024x8xi1>, vector<1024x8xf32>
    %c0_11 = arith.constant 0 : index
    %c0_12 = arith.constant 0 : index
    %37 = vector.load %arg6[%c0_11, %c0_12] : memref<1024x8xf32, #tpu.memory_space<vmem>>, vector<1024x8xf32>
    tpu.vector_store %arg6[%c0_11, %c0_12], %36 {strides = array<i32>} : memref<1024x8xf32, #tpu.memory_space<vmem>>, vector<1024x8xf32>,
    return
  }
  func.func @transform_0(%arg0: i32) -> (i32, i32) {
    %c0_i32 = arith.constant 0 : i32
    %c0_i32_0 = arith.constant 0 : i32
    return %arg0, %c0_i32 : i32, i32
  }
  func.func @transform_1(%arg0: i32) -> (i32, i32) {
    %c0_i32 = arith.constant 0 : i32
    %c0_i32_0 = arith.constant 0 : i32
    return %arg0, %c0_i32 : i32, i32
  }
  func.func @transform_2(%arg0: i32) -> (i32, i32) {
    %c0_i32 = arith.constant 0 : i32
    %c0_i32_0 = arith.constant 0 : i32
    %c0_i32_1 = arith.constant 0 : i32
    return %c0_i32, %c0_i32_0 : i32, i32
  }
  func.func @transform_3(%arg0: i32) -> (i32, i32) {
    %c0_i32 = arith.constant 0 : i32
    %c0_i32_0 = arith.constant 0 : i32
    %c0_i32_1 = arith.constant 0 : i32
    return %c0_i32, %c0_i32_0 : i32, i32
  }
  func.func @transform_4(%arg0: i32) -> (i32, i32) {
    %c0_i32 = arith.constant 0 : i32
    %c0_i32_0 = arith.constant 0 : i32
    %c0_i32_1 = arith.constant 0 : i32
    return %c0_i32, %c0_i32_0 : i32, i32
  }
  func.func @transform_5(%arg0: i32) -> (i32, i32) {
    %c0_i32 = arith.constant 0 : i32
    %c0_i32_0 = arith.constant 0 : i32
    return %arg0, %c0_i32 : i32, i32
  }
}

</mosaic_0001>

<llo_original>
// kernel: tpu_custom_call.1
$region0: #{tpu_custom_call.1}
  #allocation0 [shape = 'u32[]', space=smem, size = 0x4, offset = 0x4, fixed_abs, tag = 'smem constant byte address 0x4 - core index']
  #allocation1 [shape = 'u32[144,128]{1,0:T(1,128)}', space=vmem, size = 0x12000, scoped, tag = 'internal scratch']
  %s0 = inlined_call_operand.vmem [shape: f32[2048,4], index: 0, kind: input, shape index: {}]
  %s1 = inlined_call_operand.vmem [shape: f32[2048,4], index: 1, kind: input, shape index: {}]
  %s2 = inlined_call_operand.vmem [shape: f32[4,8], index: 2, kind: input, shape index: {}]
  %s3 = inlined_call_operand.vmem [shape: f32[4,8], index: 3, kind: input, shape index: {}]
  %s4 = inlined_call_operand.vmem [shape: f32[1,8], index: 4, kind: input, shape index: {}]
  %s5 = inlined_call_operand.vmem [shape: f32[2048,8], index: 5, kind: output, shape index: {}]
  %s6 = sld [smem:[#allocation0]]
  $region53: #{tpu_custom_call.1} parent=0
    _
  %s8 = ssub.s32 1, %s6
  %s9 = scalar_select 0, %s8, %s6
  loop: start=0, step=1, limit=4
  $region2: #{tpu_custom_call.1} parent=0 // loop_pre_header
    _
  $region3: #{tpu_custom_call.1} parent=0 // loop_header
    %s11 = sphi 0, %s15
    %p12 = scmp.ge.s32.totalorder %s11, 4
    %s21 = sphi 0, %s23
    %s24 = sphi 0, %s21
    %s25 = sphi 0, %s24
    %s41 = sphi 0, %s25
    %s47 = sphi 0, %s49
    %s50 = sphi 0, %s47
    %s51 = sphi 0, %s50
    %s67 = sphi 0, %s51
    %s71 = sphi 0, %s71
    %s73 = sphi 0, %s71
    %s74 = sphi 0, %s73
    %s88 = sphi 0, %s74
    %s92 = sphi 0, %s92
    %s94 = sphi 0, %s92
    %s95 = sphi 0, %s94
    %s109 = sphi 0, %s95
    %s113 = sphi 0, %s113
    %s115 = sphi 0, %s113
    %s116 = sphi 0, %s115
    %s130 = sphi 0, %s116
    %s136 = sphi 0, %s138
    %s139 = sphi 0, %s136
    %s140 = sphi 0, %s139
    %s156 = sphi 0, %s140
  $region4: #{tpu_custom_call.1} parent=0 // loop_header_branch
    %14 = sbr.rel (%p12) target = $region8
  $region5: #{tpu_custom_call.1} parent=0 // loop_body
    %s16 = ssub.s32 %s11, 1
    %s17 = ssub.s32 %s11, 2
    %s18 = sadd.s32 %s11, 1
    %s19 = ssub.s32 %s11, %s18
    %p20 = scmp.eq.s32.totalorder %s19, 0
    %s22 = sadd.s32 %s21, 1
    %s23 = scalar_select %p20, %s21, %s22
    %p26 = pneg %p20
    %p27 = scmp.eq.s32.totalorder %s11, 1
    %p28 = por %p26, %p27
    %p29 = scmp.ne.s32.totalorder %s21, %s24
    %p30 = scmp.eq.s32.totalorder %s11, 0
    %p31 = por %p29, %p30
    %p32 = scmp.ne.s32.totalorder %s21, %s24
    %p33 = scmp.eq.s32.totalorder %s16, 1
    %p34 = por %p32, %p33
    %p35 = scmp.ne.s32.totalorder %s24, %s25
    %p36 = scmp.eq.s32.totalorder %s16, 0
    %p37 = por %p35, %p36
    %p38 = scmp.ne.s32.totalorder %s24, %s25
    %p39 = scmp.eq.s32.totalorder %s17, 1
    %p40 = por %p38, %p39
    %p42 = scmp.ne.s32.totalorder %s25, %s41
    %p43 = scmp.eq.s32.totalorder %s17, 0
    %p44 = por %p42, %p43
    %s45 = ssub.s32 %s11, %s18
    %p46 = scmp.eq.s32.totalorder %s45, 0
    %s48 = sadd.s32 %s47, 1
    %s49 = scalar_select %p46, %s47, %s48
    %p52 = pneg %p46
    %p53 = scmp.eq.s32.totalorder %s11, 1
    %p54 = por %p52, %p53
    %p55 = scmp.ne.s32.totalorder %s47, %s50
    %p56 = scmp.eq.s32.totalorder %s11, 0
    %p57 = por %p55, %p56
    %p58 = scmp.ne.s32.totalorder %s47, %s50
    %p59 = scmp.eq.s32.totalorder %s16, 1
    %p60 = por %p58, %p59
    %p61 = scmp.ne.s32.totalorder %s50, %s51
    %p62 = scmp.eq.s32.totalorder %s16, 0
    %p63 = por %p61, %p62
    %p64 = scmp.ne.s32.totalorder %s50, %s51
    %p65 = scmp.eq.s32.totalorder %s17, 1
    %p66 = por %p64, %p65
    %p68 = scmp.ne.s32.totalorder %s51, %s67
    %p69 = scmp.eq.s32.totalorder %s17, 0
    %p70 = por %p68, %p69
    %s72 = sadd.s32 %s71, 1
    %p75 = scmp.eq.s32.totalorder %s11, 1
    %p76 = scmp.ne.s32.totalorder %s71, %s73
    %p77 = scmp.eq.s32.totalorder %s11, 0
    %p78 = por %p76, %p77
    %p79 = scmp.ne.s32.totalorder %s71, %s73
    %p80 = scmp.eq.s32.totalorder %s16, 1
    %p81 = por %p79, %p80
    %p82 = scmp.ne.s32.totalorder %s73, %s74
    %p83 = scmp.eq.s32.totalorder %s16, 0
    %p84 = por %p82, %p83
    %p85 = scmp.ne.s32.totalorder %s73, %s74
    %p86 = scmp.eq.s32.totalorder %s17, 1
    %p87 = por %p85, %p86
    %p89 = scmp.ne.s32.totalorder %s74, %s88
    %p90 = scmp.eq.s32.totalorder %s17, 0
    %p91 = por %p89, %p90
    %s93 = sadd.s32 %s92, 1
    %p96 = scmp.eq.s32.totalorder %s11, 1
    %p97 = scmp.ne.s32.totalorder %s92, %s94
    %p98 = scmp.eq.s32.totalorder %s11, 0
    %p99 = por %p97, %p98
    %p100 = scmp.ne.s32.totalorder %s92, %s94
    %p101 = scmp.eq.s32.totalorder %s16, 1
    %p102 = por %p100, %p101
    %p103 = scmp.ne.s32.totalorder %s94, %s95
    %p104 = scmp.eq.s32.totalorder %s16, 0
    %p105 = por %p103, %p104
    %p106 = scmp.ne.s32.totalorder %s94, %s95
    %p107 = scmp.eq.s32.totalorder %s17, 1
    %p108 = por %p106, %p107
    %p110 = scmp.ne.s32.totalorder %s95, %s109
    %p111 = scmp.eq.s32.totalorder %s17, 0
    %p112 = por %p110, %p111
    %s114 = sadd.s32 %s113, 1
    %p117 = scmp.eq.s32.totalorder %s11, 1
    %p118 = scmp.ne.s32.totalorder %s113, %s115
    %p119 = scmp.eq.s32.totalorder %s11, 0
    %p120 = por %p118, %p119
    %p121 = scmp.ne.s32.totalorder %s113, %s115
    %p122 = scmp.eq.s32.totalorder %s16, 1
    %p123 = por %p121, %p122
    %p124 = scmp.ne.s32.totalorder %s115, %s116
    %p125 = scmp.eq.s32.totalorder %s16, 0
    %p126 = por %p124, %p125
    %p127 = scmp.ne.s32.totalorder %s115, %s116
    %p128 = scmp.eq.s32.totalorder %s17, 1
    %p129 = por %p127, %p128
    %p131 = scmp.ne.s32.totalorder %s116, %s130
    %p132 = scmp.eq.s32.totalorder %s17, 0
    %p133 = por %p131, %p132
    %s134 = ssub.s32 %s11, %s18
    %p135 = scmp.eq.s32.totalorder %s134, 0
    %s137 = sadd.s32 %s136, 1
    %s138 = scalar_select %p135, %s136, %s137
    %p141 = pneg %p135
    %p142 = scmp.eq.s32.totalorder %s11, 1
    %p143 = por %p141, %p142
    %p144 = scmp.ne.s32.totalorder %s136, %s139
    %p145 = scmp.eq.s32.totalorder %s11, 0
    %p146 = por %p144, %p145
    %p147 = scmp.ne.s32.totalorder %s136, %s139
    %p148 = scmp.eq.s32.totalorder %s16, 1
    %p149 = por %p147, %p148
    %p150 = scmp.ne.s32.totalorder %s139, %s140
    %p151 = scmp.eq.s32.totalorder %s16, 0
    %p152 = por %p150, %p151
    %p153 = scmp.ne.s32.totalorder %s139, %s140
    %p154 = scmp.eq.s32.totalorder %s17, 1
    %p155 = por %p153, %p154
    %p157 = scmp.ne.s32.totalorder %s140, %s156
    %p158 = scmp.eq.s32.totalorder %s17, 0
    %p159 = por %p157, %p158
    %p160 = scmp.le.s32.totalorder 1, %s11
    %p161 = scmp.lt.s32.totalorder %s11, 3
    %p162 = pnand %p160, %p161
    %p163 = pneg %p162
    // Predicated region
    $region9: #{tpu_custom_call.1} parent=5 // pred_check
      _
    $region10: #{tpu_custom_call.1} parent=5 // pred_check_branch
      %165 = sbr.rel (%p162) target = $region12
    $region11: #{tpu_custom_call.1} parent=5 // pred_region
      %s166 = ssub.s32 %s11, 1
      // Predicated region
      $region13: #{tpu_custom_call.1} parent=11 // pred_check
        %p167 = pneg %p84
      $region14: #{tpu_custom_call.1} parent=11 // pred_check_branch
        %169 = sbr.rel (%p167) target = $region16
      $region15: #{tpu_custom_call.1} parent=11 // pred_region
        _
      $region16: #{tpu_custom_call.1} parent=11 // pred_fallthru
        _
      // Predicated region
      $region17: #{tpu_custom_call.1} parent=11 // pred_check
        %p170 = pneg %p105
      $region18: #{tpu_custom_call.1} parent=11 // pred_check_branch
        %172 = sbr.rel (%p170) target = $region20
      $region19: #{tpu_custom_call.1} parent=11 // pred_region
        _
      $region20: #{tpu_custom_call.1} parent=11 // pred_fallthru
        _
      // Predicated region
      $region21: #{tpu_custom_call.1} parent=11 // pred_check
        %p173 = pneg %p126
      $region22: #{tpu_custom_call.1} parent=11 // pred_check_branch
        %175 = sbr.rel (%p173) target = $region24
      $region23: #{tpu_custom_call.1} parent=11 // pred_region
        _
      $region24: #{tpu_custom_call.1} parent=11 // pred_fallthru
        _
    $region12: #{tpu_custom_call.1} parent=5 // pred_fallthru
      _
    %p176 = scmp.lt.s32.totalorder %s11, 2
    // Predicated region
    $region25: #{tpu_custom_call.1} parent=5 // pred_check
      %p177 = pneg %p176
    $region26: #{tpu_custom_call.1} parent=5 // pred_check_branch
      %179 = sbr.rel (%p177) target = $region28
    $region27: #{tpu_custom_call.1} parent=5 // pred_region
      // Predicated region
      $region29: #{tpu_custom_call.1} parent=27 // pred_check
        %p180 = pneg %p31
      $region30: #{tpu_custom_call.1} parent=27 // pred_check_branch
        %182 = sbr.rel (%p180) target = $region32
      $region31: #{tpu_custom_call.1} parent=27 // pred_region
        %s183 = smul.u32 128, %s11
        %p184 = scmp.lt.s32.totalorder %s183, 255
        %s185 = scalar_select %p184, %s183, 255
        %s186 = smul.addr %s185, 8
        %s187 = scalar_lea.vmem %s0, %s186
        %s188 = smul.u32 128, %s11
      $region32: #{tpu_custom_call.1} parent=27 // pred_fallthru
        _
      // Predicated region
      $region33: #{tpu_custom_call.1} parent=27 // pred_check
        %p189 = pneg %p57
      $region34: #{tpu_custom_call.1} parent=27 // pred_check_branch
        %191 = sbr.rel (%p189) target = $region36
      $region35: #{tpu_custom_call.1} parent=27 // pred_region
        %s192 = smul.u32 128, %s11
        %p193 = scmp.lt.s32.totalorder %s192, 255
        %s194 = scalar_select %p193, %s192, 255
        %s195 = smul.addr %s194, 8
        %s196 = scalar_lea.vmem %s1, %s195
        %s197 = smul.u32 128, %s11
      $region36: #{tpu_custom_call.1} parent=27 // pred_fallthru
        _
    $region28: #{tpu_custom_call.1} parent=5 // pred_fallthru
      _
    %p198 = scmp.le.s32.totalorder 1, %s11
    %p199 = scmp.lt.s32.totalorder %s11, 3
    %p200 = pnand %p198, %p199
    %p201 = pneg %p200
    // Predicated region
    $region37: #{tpu_custom_call.1} parent=5 // pred_check
      _
    $region38: #{tpu_custom_call.1} parent=5 // pred_check_branch
      %203 = sbr.rel (%p200) target = $region40
    $region39: #{tpu_custom_call.1} parent=5 // pred_region
      %s204 = ssub.s32 %s11, 1
      %s205 = smul.u32 128, %s16
      %p206 = scmp.lt.s32.totalorder %s205, 255
      %s207 = scalar_select %p206, %s205, 255
      %s208 = smul.addr %s207, 8
      %s209 = scalar_lea.vmem %s0, %s208
      %p210 = pneg %p37
      %p211 = pneg %p34
      %s212 = smul.u32 128, %s16
      %p213 = scmp.lt.s32.totalorder %s212, 255
      %s214 = scalar_select %p213, %s212, 255
      %s215 = smul.addr %s214, 8
      %s216 = scalar_lea.vmem %s1, %s215
      %p217 = pneg %p63
      %p218 = pneg %p60
      %p219 = pneg %p84
      %p220 = pneg %p81
      %p221 = pneg %p105
      %p222 = pneg %p102
      %p223 = pneg %p126
      %p224 = pneg %p123
      %p225 = pneg %p152
      %p226 = pneg %p149
      %s227 = smul.u32 128, %s16
      %p228 = scmp.lt.s32.totalorder %s227, 255
      %s229 = scalar_select %p228, %s227, 255
      %s230 = smul.addr %s229, 8
      %s231 = scalar_lea.vmem %s5, %s230
      %s232 = smul.u32 128, %s16
      %p233 = scmp.lt.s32.totalorder %s232, 255
      %s234 = scalar_select %p233, %s232, 255
      %s235 = smul.addr %s234, 8
      %s236 = scalar_lea.vmem %s0, %s235
      %s237 = smul.u32 128, %s16
      %s238 = smul.u32 128, %s16
      %p239 = scmp.lt.s32.totalorder %s238, 255
      %s240 = scalar_select %p239, %s238, 255
      %s241 = smul.addr %s240, 8
      %s242 = scalar_lea.vmem %s1, %s241
      %s243 = smul.u32 128, %s16
      %s244 = smul.u32 128, %s16
      %p245 = scmp.lt.s32.totalorder %s244, 255
      %s246 = scalar_select %p245, %s244, 255
      %s247 = smul.addr %s246, 8
      %s248 = scalar_lea.vmem %s5, %s247
      %s249 = smul.u32 128, %s16
      %v250 = vld [vmem:[%s236] sm:$0xff]
      %v251 = vld [vmem:[%s236 + $0x8] sm:$0xff]
      %v252 = vld [vmem:[%s236 + $0x10] sm:$0xff]
      %v253 = vld [vmem:[%s236 + $0x18] sm:$0xff]
      %v254 = vld [vmem:[%s236 + $0x20] sm:$0xff]
      %v255 = vld [vmem:[%s236 + $0x28] sm:$0xff]
      %v256 = vld [vmem:[%s236 + $0x30] sm:$0xff]
      %v257 = vld [vmem:[%s236 + $0x38] sm:$0xff]
      %v258 = vld [vmem:[%s236 + $0x40] sm:$0xff]
      %v259 = vld [vmem:[%s236 + $0x48] sm:$0xff]
      %v260 = vld [vmem:[%s236 + $0x50] sm:$0xff]
      %v261 = vld [vmem:[%s236 + $0x58] sm:$0xff]
      %v262 = vld [vmem:[%s236 + $0x60] sm:$0xff]
      %v263 = vld [vmem:[%s236 + $0x68] sm:$0xff]
      %v264 = vld [vmem:[%s236 + $0x70] sm:$0xff]
      %v265 = vld [vmem:[%s236 + $0x78] sm:$0xff]
      %v266 = vld [vmem:[%s236 + $0x80] sm:$0xff]
      %v267 = vld [vmem:[%s236 + $0x88] sm:$0xff]
      %v268 = vld [vmem:[%s236 + $0x90] sm:$0xff]
      %v269 = vld [vmem:[%s236 + $0x98] sm:$0xff]
      %v270 = vld [vmem:[%s236 + $0xa0] sm:$0xff]
      %v271 = vld [vmem:[%s236 + $0xa8] sm:$0xff]
      %v272 = vld [vmem:[%s236 + $0xb0] sm:$0xff]
      %v273 = vld [vmem:[%s236 + $0xb8] sm:$0xff]
      %v274 = vld [vmem:[%s236 + $0xc0] sm:$0xff]
      %v275 = vld [vmem:[%s236 + $0xc8] sm:$0xff]
      %v276 = vld [vmem:[%s236 + $0xd0] sm:$0xff]
      %v277 = vld [vmem:[%s236 + $0xd8] sm:$0xff]
      %v278 = vld [vmem:[%s236 + $0xe0] sm:$0xff]
      %v279 = vld [vmem:[%s236 + $0xe8] sm:$0xff]
      %v280 = vld [vmem:[%s236 + $0xf0] sm:$0xff]
      %v281 = vld [vmem:[%s236 + $0xf8] sm:$0xff]
      %v282 = vld [vmem:[%s236 + $0x100] sm:$0xff]
      %v283 = vld [vmem:[%s236 + $0x108] sm:$0xff]
      %v284 = vld [vmem:[%s236 + $0x110] sm:$0xff]
      %v285 = vld [vmem:[%s236 + $0x118] sm:$0xff]
      %v286 = vld [vmem:[%s236 + $0x120] sm:$0xff]
      %v287 = vld [vmem:[%s236 + $0x128] sm:$0xff]
      %v288 = vld [vmem:[%s236 + $0x130] sm:$0xff]
      %v289 = vld [vmem:[%s236 + $0x138] sm:$0xff]
      %v290 = vld [vmem:[%s236 + $0x140] sm:$0xff]
      %v291 = vld [vmem:[%s236 + $0x148] sm:$0xff]
      %v292 = vld [vmem:[%s236 + $0x150] sm:$0xff]
      %v293 = vld [vmem:[%s236 + $0x158] sm:$0xff]
      %v294 = vld [vmem:[%s236 + $0x160] sm:$0xff]
      %v295 = vld [vmem:[%s236 + $0x168] sm:$0xff]
      %v296 = vld [vmem:[%s236 + $0x170] sm:$0xff]
      %v297 = vld [vmem:[%s236 + $0x178] sm:$0xff]
      %v298 = vld [vmem:[%s236 + $0x180] sm:$0xff]
      %v299 = vld [vmem:[%s236 + $0x188] sm:$0xff]
      %v300 = vld [vmem:[%s236 + $0x190] sm:$0xff]
      %v301 = vld [vmem:[%s236 + $0x198] sm:$0xff]
      %v302 = vld [vmem:[%s236 + $0x1a0] sm:$0xff]
      %v303 = vld [vmem:[%s236 + $0x1a8] sm:$0xff]
      %v304 = vld [vmem:[%s236 + $0x1b0] sm:$0xff]
      %v305 = vld [vmem:[%s236 + $0x1b8] sm:$0xff]
      %v306 = vld [vmem:[%s236 + $0x1c0] sm:$0xff]
      %v307 = vld [vmem:[%s236 + $0x1c8] sm:$0xff]
      %v308 = vld [vmem:[%s236 + $0x1d0] sm:$0xff]
      %v309 = vld [vmem:[%s236 + $0x1d8] sm:$0xff]
      %v310 = vld [vmem:[%s236 + $0x1e0] sm:$0xff]
      %v311 = vld [vmem:[%s236 + $0x1e8] sm:$0xff]
      %v312 = vld [vmem:[%s236 + $0x1f0] sm:$0xff]
      %v313 = vld [vmem:[%s236 + $0x1f8] sm:$0xff]
      %v314 = vld [vmem:[%s236 + $0x200] sm:$0xff]
      %v315 = vld [vmem:[%s236 + $0x208] sm:$0xff]
      %v316 = vld [vmem:[%s236 + $0x210] sm:$0xff]
      %v317 = vld [vmem:[%s236 + $0x218] sm:$0xff]
      %v318 = vld [vmem:[%s236 + $0x220] sm:$0xff]
      %v319 = vld [vmem:[%s236 + $0x228] sm:$0xff]
      %v320 = vld [vmem:[%s236 + $0x230] sm:$0xff]
      %v321 = vld [vmem:[%s236 + $0x238] sm:$0xff]
      %v322 = vld [vmem:[%s236 + $0x240] sm:$0xff]
      %v323 = vld [vmem:[%s236 + $0x248] sm:$0xff]
      %v324 = vld [vmem:[%s236 + $0x250] sm:$0xff]
      %v325 = vld [vmem:[%s236 + $0x258] sm:$0xff]
      %v326 = vld [vmem:[%s236 + $0x260] sm:$0xff]
      %v327 = vld [vmem:[%s236 + $0x268] sm:$0xff]
      %v328 = vld [vmem:[%s236 + $0x270] sm:$0xff]
      %v329 = vld [vmem:[%s236 + $0x278] sm:$0xff]
      %v330 = vld [vmem:[%s236 + $0x280] sm:$0xff]
      %v331 = vld [vmem:[%s236 + $0x288] sm:$0xff]
      %v332 = vld [vmem:[%s236 + $0x290] sm:$0xff]
      %v333 = vld [vmem:[%s236 + $0x298] sm:$0xff]
      %v334 = vld [vmem:[%s236 + $0x2a0] sm:$0xff]
      %v335 = vld [vmem:[%s236 + $0x2a8] sm:$0xff]
      %v336 = vld [vmem:[%s236 + $0x2b0] sm:$0xff]
      %v337 = vld [vmem:[%s236 + $0x2b8] sm:$0xff]
      %v338 = vld [vmem:[%s236 + $0x2c0] sm:$0xff]
      %v339 = vld [vmem:[%s236 + $0x2c8] sm:$0xff]
      %v340 = vld [vmem:[%s236 + $0x2d0] sm:$0xff]
      %v341 = vld [vmem:[%s236 + $0x2d8] sm:$0xff]
      %v342 = vld [vmem:[%s236 + $0x2e0] sm:$0xff]
      %v343 = vld [vmem:[%s236 + $0x2e8] sm:$0xff]
      %v344 = vld [vmem:[%s236 + $0x2f0] sm:$0xff]
      %v345 = vld [vmem:[%s236 + $0x2f8] sm:$0xff]
      %v346 = vld [vmem:[%s236 + $0x300] sm:$0xff]
      %v347 = vld [vmem:[%s236 + $0x308] sm:$0xff]
      %v348 = vld [vmem:[%s236 + $0x310] sm:$0xff]
      %v349 = vld [vmem:[%s236 + $0x318] sm:$0xff]
      %v350 = vld [vmem:[%s236 + $0x320] sm:$0xff]
      %v351 = vld [vmem:[%s236 + $0x328] sm:$0xff]
      %v352 = vld [vmem:[%s236 + $0x330] sm:$0xff]
      %v353 = vld [vmem:[%s236 + $0x338] sm:$0xff]
      %v354 = vld [vmem:[%s236 + $0x340] sm:$0xff]
      %v355 = vld [vmem:[%s236 + $0x348] sm:$0xff]
      %v356 = vld [vmem:[%s236 + $0x350] sm:$0xff]
      %v357 = vld [vmem:[%s236 + $0x358] sm:$0xff]
      %v358 = vld [vmem:[%s236 + $0x360] sm:$0xff]
      %v359 = vld [vmem:[%s236 + $0x368] sm:$0xff]
      %v360 = vld [vmem:[%s236 + $0x370] sm:$0xff]
      %v361 = vld [vmem:[%s236 + $0x378] sm:$0xff]
      %v362 = vld [vmem:[%s236 + $0x380] sm:$0xff]
      %v363 = vld [vmem:[%s236 + $0x388] sm:$0xff]
      %v364 = vld [vmem:[%s236 + $0x390] sm:$0xff]
      %v365 = vld [vmem:[%s236 + $0x398] sm:$0xff]
      %v366 = vld [vmem:[%s236 + $0x3a0] sm:$0xff]
      %v367 = vld [vmem:[%s236 + $0x3a8] sm:$0xff]
      %v368 = vld [vmem:[%s236 + $0x3b0] sm:$0xff]
      %v369 = vld [vmem:[%s236 + $0x3b8] sm:$0xff]
      %v370 = vld [vmem:[%s236 + $0x3c0] sm:$0xff]
      %v371 = vld [vmem:[%s236 + $0x3c8] sm:$0xff]
      %v372 = vld [vmem:[%s236 + $0x3d0] sm:$0xff]
      %v373 = vld [vmem:[%s236 + $0x3d8] sm:$0xff]
      %v374 = vld [vmem:[%s236 + $0x3e0] sm:$0xff]
      %v375 = vld [vmem:[%s236 + $0x3e8] sm:$0xff]
      %v376 = vld [vmem:[%s236 + $0x3f0] sm:$0xff]
      %v377 = vld [vmem:[%s236 + $0x3f8] sm:$0xff]
      %v378 = vld [vmem:[%s2] sm:$0xf]
      %v379 = vld [vmem:[%s242] sm:$0xff]
      %v380 = vld [vmem:[%s242 + $0x8] sm:$0xff]
      %v381 = vld [vmem:[%s242 + $0x10] sm:$0xff]
      %v382 = vld [vmem:[%s242 + $0x18] sm:$0xff]
      %v383 = vld [vmem:[%s242 + $0x20] sm:$0xff]
      %v384 = vld [vmem:[%s242 + $0x28] sm:$0xff]
      %v385 = vld [vmem:[%s242 + $0x30] sm:$0xff]
      %v386 = vld [vmem:[%s242 + $0x38] sm:$0xff]
      %v387 = vld [vmem:[%s242 + $0x40] sm:$0xff]
      %v388 = vld [vmem:[%s242 + $0x48] sm:$0xff]
      %v389 = vld [vmem:[%s242 + $0x50] sm:$0xff]
      %v390 = vld [vmem:[%s242 + $0x58] sm:$0xff]
      %v391 = vld [vmem:[%s242 + $0x60] sm:$0xff]
      %v392 = vld [vmem:[%s242 + $0x68] sm:$0xff]
      %v393 = vld [vmem:[%s242 + $0x70] sm:$0xff]
      %v394 = vld [vmem:[%s242 + $0x78] sm:$0xff]
      %v395 = vld [vmem:[%s242 + $0x80] sm:$0xff]
      %v396 = vld [vmem:[%s242 + $0x88] sm:$0xff]
      %v397 = vld [vmem:[%s242 + $0x90] sm:$0xff]
      %v398 = vld [vmem:[%s242 + $0x98] sm:$0xff]
      %v399 = vld [vmem:[%s242 + $0xa0] sm:$0xff]
      %v400 = vld [vmem:[%s242 + $0xa8] sm:$0xff]
      %v401 = vld [vmem:[%s242 + $0xb0] sm:$0xff]
      %v402 = vld [vmem:[%s242 + $0xb8] sm:$0xff]
      %v403 = vld [vmem:[%s242 + $0xc0] sm:$0xff]
      %v404 = vld [vmem:[%s242 + $0xc8] sm:$0xff]
      %v405 = vld [vmem:[%s242 + $0xd0] sm:$0xff]
      %v406 = vld [vmem:[%s242 + $0xd8] sm:$0xff]
      %v407 = vld [vmem:[%s242 + $0xe0] sm:$0xff]
      %v408 = vld [vmem:[%s242 + $0xe8] sm:$0xff]
      %v409 = vld [vmem:[%s242 + $0xf0] sm:$0xff]
      %v410 = vld [vmem:[%s242 + $0xf8] sm:$0xff]
      %v411 = vld [vmem:[%s242 + $0x100] sm:$0xff]
      %v412 = vld [vmem:[%s242 + $0x108] sm:$0xff]
      %v413 = vld [vmem:[%s242 + $0x110] sm:$0xff]
      %v414 = vld [vmem:[%s242 + $0x118] sm:$0xff]
      %v415 = vld [vmem:[%s242 + $0x120] sm:$0xff]
      %v416 = vld [vmem:[%s242 + $0x128] sm:$0xff]
      %v417 = vld [vmem:[%s242 + $0x130] sm:$0xff]
      %v418 = vld [vmem:[%s242 + $0x138] sm:$0xff]
      %v419 = vld [vmem:[%s242 + $0x140] sm:$0xff]
      %v420 = vld [vmem:[%s242 + $0x148] sm:$0xff]
      %v421 = vld [vmem:[%s242 + $0x150] sm:$0xff]
      %v422 = vld [vmem:[%s242 + $0x158] sm:$0xff]
      %v423 = vld [vmem:[%s242 + $0x160] sm:$0xff]
      %v424 = vld [vmem:[%s242 + $0x168] sm:$0xff]
      %v425 = vld [vmem:[%s242 + $0x170] sm:$0xff]
      %v426 = vld [vmem:[%s242 + $0x178] sm:$0xff]
      %v427 = vld [vmem:[%s242 + $0x180] sm:$0xff]
      %v428 = vld [vmem:[%s242 + $0x188] sm:$0xff]
      %v429 = vld [vmem:[%s242 + $0x190] sm:$0xff]
      %v430 = vld [vmem:[%s242 + $0x198] sm:$0xff]
      %v431 = vld [vmem:[%s242 + $0x1a0] sm:$0xff]
      %v432 = vld [vmem:[%s242 + $0x1a8] sm:$0xff]
      %v433 = vld [vmem:[%s242 + $0x1b0] sm:$0xff]
      %v434 = vld [vmem:[%s242 + $0x1b8] sm:$0xff]
      %v435 = vld [vmem:[%s242 + $0x1c0] sm:$0xff]
      %v436 = vld [vmem:[%s242 + $0x1c8] sm:$0xff]
      %v437 = vld [vmem:[%s242 + $0x1d0] sm:$0xff]
      %v438 = vld [vmem:[%s242 + $0x1d8] sm:$0xff]
      %v439 = vld [vmem:[%s242 + $0x1e0] sm:$0xff]
      %v440 = vld [vmem:[%s242 + $0x1e8] sm:$0xff]
      %v441 = vld [vmem:[%s242 + $0x1f0] sm:$0xff]
      %v442 = vld [vmem:[%s242 + $0x1f8] sm:$0xff]
      %v443 = vld [vmem:[%s242 + $0x200] sm:$0xff]
      %v444 = vld [vmem:[%s242 + $0x208] sm:$0xff]
      %v445 = vld [vmem:[%s242 + $0x210] sm:$0xff]
      %v446 = vld [vmem:[%s242 + $0x218] sm:$0xff]
      %v447 = vld [vmem:[%s242 + $0x220] sm:$0xff]
      %v448 = vld [vmem:[%s242 + $0x228] sm:$0xff]
      %v449 = vld [vmem:[%s242 + $0x230] sm:$0xff]
      %v450 = vld [vmem:[%s242 + $0x238] sm:$0xff]
      %v451 = vld [vmem:[%s242 + $0x240] sm:$0xff]
      %v452 = vld [vmem:[%s242 + $0x248] sm:$0xff]
      %v453 = vld [vmem:[%s242 + $0x250] sm:$0xff]
      %v454 = vld [vmem:[%s242 + $0x258] sm:$0xff]
      %v455 = vld [vmem:[%s242 + $0x260] sm:$0xff]
      %v456 = vld [vmem:[%s242 + $0x268] sm:$0xff]
      %v457 = vld [vmem:[%s242 + $0x270] sm:$0xff]
      %v458 = vld [vmem:[%s242 + $0x278] sm:$0xff]
      %v459 = vld [vmem:[%s242 + $0x280] sm:$0xff]
      %v460 = vld [vmem:[%s242 + $0x288] sm:$0xff]
      %v461 = vld [vmem:[%s242 + $0x290] sm:$0xff]
      %v462 = vld [vmem:[%s242 + $0x298] sm:$0xff]
      %v463 = vld [vmem:[%s242 + $0x2a0] sm:$0xff]
      %v464 = vld [vmem:[%s242 + $0x2a8] sm:$0xff]
      %v465 = vld [vmem:[%s242 + $0x2b0] sm:$0xff]
      %v466 = vld [vmem:[%s242 + $0x2b8] sm:$0xff]
      %v467 = vld [vmem:[%s242 + $0x2c0] sm:$0xff]
      %v468 = vld [vmem:[%s242 + $0x2c8] sm:$0xff]
      %v469 = vld [vmem:[%s242 + $0x2d0] sm:$0xff]
      %v470 = vld [vmem:[%s242 + $0x2d8] sm:$0xff]
      %v471 = vld [vmem:[%s242 + $0x2e0] sm:$0xff]
      %v472 = vld [vmem:[%s242 + $0x2e8] sm:$0xff]
      %v473 = vld [vmem:[%s242 + $0x2f0] sm:$0xff]
      %v474 = vld [vmem:[%s242 + $0x2f8] sm:$0xff]
      %v475 = vld [vmem:[%s242 + $0x300] sm:$0xff]
      %v476 = vld [vmem:[%s242 + $0x308] sm:$0xff]
      %v477 = vld [vmem:[%s242 + $0x310] sm:$0xff]
      %v478 = vld [vmem:[%s242 + $0x318] sm:$0xff]
      %v479 = vld [vmem:[%s242 + $0x320] sm:$0xff]
      %v480 = vld [vmem:[%s242 + $0x328] sm:$0xff]
      %v481 = vld [vmem:[%s242 + $0x330] sm:$0xff]
      %v482 = vld [vmem:[%s242 + $0x338] sm:$0xff]
      %v483 = vld [vmem:[%s242 + $0x340] sm:$0xff]
      %v484 = vld [vmem:[%s242 + $0x348] sm:$0xff]
      %v485 = vld [vmem:[%s242 + $0x350] sm:$0xff]
      %v486 = vld [vmem:[%s242 + $0x358] sm:$0xff]
      %v487 = vld [vmem:[%s242 + $0x360] sm:$0xff]
      %v488 = vld [vmem:[%s242 + $0x368] sm:$0xff]
      %v489 = vld [vmem:[%s242 + $0x370] sm:$0xff]
      %v490 = vld [vmem:[%s242 + $0x378] sm:$0xff]
      %v491 = vld [vmem:[%s242 + $0x380] sm:$0xff]
      %v492 = vld [vmem:[%s242 + $0x388] sm:$0xff]
      %v493 = vld [vmem:[%s242 + $0x390] sm:$0xff]
      %v494 = vld [vmem:[%s242 + $0x398] sm:$0xff]
      %v495 = vld [vmem:[%s242 + $0x3a0] sm:$0xff]
      %v496 = vld [vmem:[%s242 + $0x3a8] sm:$0xff]
      %v497 = vld [vmem:[%s242 + $0x3b0] sm:$0xff]
      %v498 = vld [vmem:[%s242 + $0x3b8] sm:$0xff]
      %v499 = vld [vmem:[%s242 + $0x3c0] sm:$0xff]
      %v500 = vld [vmem:[%s242 + $0x3c8] sm:$0xff]
      %v501 = vld [vmem:[%s242 + $0x3d0] sm:$0xff]
      %v502 = vld [vmem:[%s242 + $0x3d8] sm:$0xff]
      %v503 = vld [vmem:[%s242 + $0x3e0] sm:$0xff]
      %v504 = vld [vmem:[%s242 + $0x3e8] sm:$0xff]
      %v505 = vld [vmem:[%s242 + $0x3f0] sm:$0xff]
      %v506 = vld [vmem:[%s242 + $0x3f8] sm:$0xff]
      %v507 = vld [vmem:[%s3] sm:$0xf]
      %509 = vset.pattern.permute.xlu0 0
      %510 = vperm.xlu0 %509, %v379
      %v511 = vpop.permute.xlu0 %510
      %514 = vset.pattern.permute.xlu0 0
      %515 = vperm.xlu0 %514, %v380
      %v516 = vpop.permute.xlu0 %515
      %519 = vset.pattern.permute.xlu0 0
      %520 = vperm.xlu0 %519, %v381
      %v521 = vpop.permute.xlu0 %520
      %524 = vset.pattern.permute.xlu0 0
      %525 = vperm.xlu0 %524, %v382
      %v526 = vpop.permute.xlu0 %525
      %529 = vset.pattern.permute.xlu0 0
      %530 = vperm.xlu0 %529, %v383
      %v531 = vpop.permute.xlu0 %530
      %534 = vset.pattern.permute.xlu0 0
      %535 = vperm.xlu0 %534, %v384
      %v536 = vpop.permute.xlu0 %535
      %539 = vset.pattern.permute.xlu0 0
      %540 = vperm.xlu0 %539, %v385
      %v541 = vpop.permute.xlu0 %540
      %544 = vset.pattern.permute.xlu0 0
      %545 = vperm.xlu0 %544, %v386
      %v546 = vpop.permute.xlu0 %545
      %549 = vset.pattern.permute.xlu0 0
      %550 = vperm.xlu0 %549, %v387
      %v551 = vpop.permute.xlu0 %550
      %554 = vset.pattern.permute.xlu0 0
      %555 = vperm.xlu0 %554, %v388
      %v556 = vpop.permute.xlu0 %555
      %559 = vset.pattern.permute.xlu0 0
      %560 = vperm.xlu0 %559, %v389
      %v561 = vpop.permute.xlu0 %560
      %564 = vset.pattern.permute.xlu0 0
      %565 = vperm.xlu0 %564, %v390
      %v566 = vpop.permute.xlu0 %565
      %569 = vset.pattern.permute.xlu0 0
      %570 = vperm.xlu0 %569, %v391
      %v571 = vpop.permute.xlu0 %570
      %574 = vset.pattern.permute.xlu0 0
      %575 = vperm.xlu0 %574, %v392
      %v576 = vpop.permute.xlu0 %575
      %579 = vset.pattern.permute.xlu0 0
      %580 = vperm.xlu0 %579, %v393
      %v581 = vpop.permute.xlu0 %580
      %584 = vset.pattern.permute.xlu0 0
      %585 = vperm.xlu0 %584, %v394
      %v586 = vpop.permute.xlu0 %585
      %589 = vset.pattern.permute.xlu0 0
      %590 = vperm.xlu0 %589, %v395
      %v591 = vpop.permute.xlu0 %590
      %594 = vset.pattern.permute.xlu0 0
      %595 = vperm.xlu0 %594, %v396
      %v596 = vpop.permute.xlu0 %595
      %599 = vset.pattern.permute.xlu0 0
      %600 = vperm.xlu0 %599, %v397
      %v601 = vpop.permute.xlu0 %600
      %604 = vset.pattern.permute.xlu0 0
      %605 = vperm.xlu0 %604, %v398
      %v606 = vpop.permute.xlu0 %605
      %609 = vset.pattern.permute.xlu0 0
      %610 = vperm.xlu0 %609, %v399
      %v611 = vpop.permute.xlu0 %610
      %614 = vset.pattern.permute.xlu0 0
      %615 = vperm.xlu0 %614, %v400
      %v616 = vpop.permute.xlu0 %615
      %619 = vset.pattern.permute.xlu0 0
      %620 = vperm.xlu0 %619, %v401
      %v621 = vpop.permute.xlu0 %620
      %624 = vset.pattern.permute.xlu0 0
      %625 = vperm.xlu0 %624, %v402
      %v626 = vpop.permute.xlu0 %625
      %629 = vset.pattern.permute.xlu0 0
      %630 = vperm.xlu0 %629, %v403
      %v631 = vpop.permute.xlu0 %630
      %634 = vset.pattern.permute.xlu0 0
      %635 = vperm.xlu0 %634, %v404
      %v636 = vpop.permute.xlu0 %635
      %639 = vset.pattern.permute.xlu0 0
      %640 = vperm.xlu0 %639, %v405
      %v641 = vpop.permute.xlu0 %640
      %644 = vset.pattern.permute.xlu0 0
      %645 = vperm.xlu0 %644, %v406
      %v646 = vpop.permute.xlu0 %645
      %649 = vset.pattern.permute.xlu0 0
      %650 = vperm.xlu0 %649, %v407
      %v651 = vpop.permute.xlu0 %650
      %654 = vset.pattern.permute.xlu0 0
      %655 = vperm.xlu0 %654, %v408
      %v656 = vpop.permute.xlu0 %655
      %659 = vset.pattern.permute.xlu0 0
      %660 = vperm.xlu0 %659, %v409
      %v661 = vpop.permute.xlu0 %660
      %664 = vset.pattern.permute.xlu0 0
      %665 = vperm.xlu0 %664, %v410
      %v666 = vpop.permute.xlu0 %665
      %669 = vset.pattern.permute.xlu0 0
      %670 = vperm.xlu0 %669, %v411
      %v671 = vpop.permute.xlu0 %670
      %674 = vset.pattern.permute.xlu0 0
      %675 = vperm.xlu0 %674, %v412
      %v676 = vpop.permute.xlu0 %675
      %679 = vset.pattern.permute.xlu0 0
      %680 = vperm.xlu0 %679, %v413
      %v681 = vpop.permute.xlu0 %680
      %684 = vset.pattern.permute.xlu0 0
      %685 = vperm.xlu0 %684, %v414
      %v686 = vpop.permute.xlu0 %685
      %689 = vset.pattern.permute.xlu0 0
      %690 = vperm.xlu0 %689, %v415
      %v691 = vpop.permute.xlu0 %690
      %694 = vset.pattern.permute.xlu0 0
      %695 = vperm.xlu0 %694, %v416
      %v696 = vpop.permute.xlu0 %695
      %699 = vset.pattern.permute.xlu0 0
      %700 = vperm.xlu0 %699, %v417
      %v701 = vpop.permute.xlu0 %700
      %704 = vset.pattern.permute.xlu0 0
      %705 = vperm.xlu0 %704, %v418
      %v706 = vpop.permute.xlu0 %705
      %709 = vset.pattern.permute.xlu0 0
      %710 = vperm.xlu0 %709, %v419
      %v711 = vpop.permute.xlu0 %710
      %714 = vset.pattern.permute.xlu0 0
      %715 = vperm.xlu0 %714, %v420
      %v716 = vpop.permute.xlu0 %715
      %719 = vset.pattern.permute.xlu0 0
      %720 = vperm.xlu0 %719, %v421
      %v721 = vpop.permute.xlu0 %720
      %724 = vset.pattern.permute.xlu0 0
      %725 = vperm.xlu0 %724, %v422
      %v726 = vpop.permute.xlu0 %725
      %729 = vset.pattern.permute.xlu0 0
      %730 = vperm.xlu0 %729, %v423
      %v731 = vpop.permute.xlu0 %730
      %734 = vset.pattern.permute.xlu0 0
      %735 = vperm.xlu0 %734, %v424
      %v736 = vpop.permute.xlu0 %735
      %739 = vset.pattern.permute.xlu0 0
      %740 = vperm.xlu0 %739, %v425
      %v741 = vpop.permute.xlu0 %740
      %744 = vset.pattern.permute.xlu0 0
      %745 = vperm.xlu0 %744, %v426
      %v746 = vpop.permute.xlu0 %745
      %749 = vset.pattern.permute.xlu0 0
      %750 = vperm.xlu0 %749, %v427
      %v751 = vpop.permute.xlu0 %750
      %754 = vset.pattern.permute.xlu0 0
      %755 = vperm.xlu0 %754, %v428
      %v756 = vpop.permute.xlu0 %755
      %759 = vset.pattern.permute.xlu0 0
      %760 = vperm.xlu0 %759, %v429
      %v761 = vpop.permute.xlu0 %760
      %764 = vset.pattern.permute.xlu0 0
      %765 = vperm.xlu0 %764, %v430
      %v766 = vpop.permute.xlu0 %765
      %769 = vset.pattern.permute.xlu0 0
      %770 = vperm.xlu0 %769, %v431
      %v771 = vpop.permute.xlu0 %770
      %774 = vset.pattern.permute.xlu0 0
      %775 = vperm.xlu0 %774, %v432
      %v776 = vpop.permute.xlu0 %775
      %779 = vset.pattern.permute.xlu0 0
      %780 = vperm.xlu0 %779, %v433
      %v781 = vpop.permute.xlu0 %780
      %784 = vset.pattern.permute.xlu0 0
      %785 = vperm.xlu0 %784, %v434
      %v786 = vpop.permute.xlu0 %785
      %789 = vset.pattern.permute.xlu0 0
      %790 = vperm.xlu0 %789, %v435
      %v791 = vpop.permute.xlu0 %790
      %794 = vset.pattern.permute.xlu0 0
      %795 = vperm.xlu0 %794, %v436
      %v796 = vpop.permute.xlu0 %795
      %799 = vset.pattern.permute.xlu0 0
      %800 = vperm.xlu0 %799, %v437
      %v801 = vpop.permute.xlu0 %800
      %804 = vset.pattern.permute.xlu0 0
      %805 = vperm.xlu0 %804, %v438
      %v806 = vpop.permute.xlu0 %805
      %809 = vset.pattern.permute.xlu0 0
      %810 = vperm.xlu0 %809, %v439
      %v811 = vpop.permute.xlu0 %810
      %814 = vset.pattern.permute.xlu0 0
      %815 = vperm.xlu0 %814, %v440
      %v816 = vpop.permute.xlu0 %815
      %819 = vset.pattern.permute.xlu0 0
      %820 = vperm.xlu0 %819, %v441
      %v821 = vpop.permute.xlu0 %820
      %824 = vset.pattern.permute.xlu0 0
      %825 = vperm.xlu0 %824, %v442
      %v826 = vpop.permute.xlu0 %825
      %829 = vset.pattern.permute.xlu0 0
      %830 = vperm.xlu0 %829, %v443
      %v831 = vpop.permute.xlu0 %830
      %834 = vset.pattern.permute.xlu0 0
      %835 = vperm.xlu0 %834, %v444
      %v836 = vpop.permute.xlu0 %835
      %839 = vset.pattern.permute.xlu0 0
      %840 = vperm.xlu0 %839, %v445
      %v841 = vpop.permute.xlu0 %840
      %844 = vset.pattern.permute.xlu0 0
      %845 = vperm.xlu0 %844, %v446
      %v846 = vpop.permute.xlu0 %845
      %849 = vset.pattern.permute.xlu0 0
      %850 = vperm.xlu0 %849, %v447
      %v851 = vpop.permute.xlu0 %850
      %854 = vset.pattern.permute.xlu0 0
      %855 = vperm.xlu0 %854, %v448
      %v856 = vpop.permute.xlu0 %855
      %859 = vset.pattern.permute.xlu0 0
      %860 = vperm.xlu0 %859, %v449
      %v861 = vpop.permute.xlu0 %860
      %864 = vset.pattern.permute.xlu0 0
      %865 = vperm.xlu0 %864, %v450
      %v866 = vpop.permute.xlu0 %865
      %869 = vset.pattern.permute.xlu0 0
      %870 = vperm.xlu0 %869, %v451
      %v871 = vpop.permute.xlu0 %870
      %874 = vset.pattern.permute.xlu0 0
      %875 = vperm.xlu0 %874, %v452
      %v876 = vpop.permute.xlu0 %875
      %879 = vset.pattern.permute.xlu0 0
      %880 = vperm.xlu0 %879, %v453
      %v881 = vpop.permute.xlu0 %880
      %884 = vset.pattern.permute.xlu0 0
      %885 = vperm.xlu0 %884, %v454
      %v886 = vpop.permute.xlu0 %885
      %889 = vset.pattern.permute.xlu0 0
      %890 = vperm.xlu0 %889, %v455
      %v891 = vpop.permute.xlu0 %890
      %894 = vset.pattern.permute.xlu0 0
      %895 = vperm.xlu0 %894, %v456
      %v896 = vpop.permute.xlu0 %895
      %899 = vset.pattern.permute.xlu0 0
      %900 = vperm.xlu0 %899, %v457
      %v901 = vpop.permute.xlu0 %900
      %904 = vset.pattern.permute.xlu0 0
      %905 = vperm.xlu0 %904, %v458
      %v906 = vpop.permute.xlu0 %905
      %909 = vset.pattern.permute.xlu0 0
      %910 = vperm.xlu0 %909, %v459
      %v911 = vpop.permute.xlu0 %910
      %914 = vset.pattern.permute.xlu0 0
      %915 = vperm.xlu0 %914, %v460
      %v916 = vpop.permute.xlu0 %915
      %919 = vset.pattern.permute.xlu0 0
      %920 = vperm.xlu0 %919, %v461
      %v921 = vpop.permute.xlu0 %920
      %924 = vset.pattern.permute.xlu0 0
      %925 = vperm.xlu0 %924, %v462
      %v926 = vpop.permute.xlu0 %925
      %929 = vset.pattern.permute.xlu0 0
      %930 = vperm.xlu0 %929, %v463
      %v931 = vpop.permute.xlu0 %930
      %934 = vset.pattern.permute.xlu0 0
      %935 = vperm.xlu0 %934, %v464
      %v936 = vpop.permute.xlu0 %935
      %939 = vset.pattern.permute.xlu0 0
      %940 = vperm.xlu0 %939, %v465
      %v941 = vpop.permute.xlu0 %940
      %944 = vset.pattern.permute.xlu0 0
      %945 = vperm.xlu0 %944, %v466
      %v946 = vpop.permute.xlu0 %945
      %949 = vset.pattern.permute.xlu0 0
      %950 = vperm.xlu0 %949, %v467
      %v951 = vpop.permute.xlu0 %950
      %954 = vset.pattern.permute.xlu0 0
      %955 = vperm.xlu0 %954, %v468
      %v956 = vpop.permute.xlu0 %955
      %959 = vset.pattern.permute.xlu0 0
      %960 = vperm.xlu0 %959, %v469
      %v961 = vpop.permute.xlu0 %960
      %964 = vset.pattern.permute.xlu0 0
      %965 = vperm.xlu0 %964, %v470
      %v966 = vpop.permute.xlu0 %965
      %969 = vset.pattern.permute.xlu0 0
      %970 = vperm.xlu0 %969, %v471
      %v971 = vpop.permute.xlu0 %970
      %974 = vset.pattern.permute.xlu0 0
      %975 = vperm.xlu0 %974, %v472
      %v976 = vpop.permute.xlu0 %975
      %979 = vset.pattern.permute.xlu0 0
      %980 = vperm.xlu0 %979, %v473
      %v981 = vpop.permute.xlu0 %980
      %984 = vset.pattern.permute.xlu0 0
      %985 = vperm.xlu0 %984, %v474
      %v986 = vpop.permute.xlu0 %985
      %989 = vset.pattern.permute.xlu0 0
      %990 = vperm.xlu0 %989, %v475
      %v991 = vpop.permute.xlu0 %990
      %994 = vset.pattern.permute.xlu0 0
      %995 = vperm.xlu0 %994, %v476
      %v996 = vpop.permute.xlu0 %995
      %999 = vset.pattern.permute.xlu0 0
      %1000 = vperm.xlu0 %999, %v477
      %v1001 = vpop.permute.xlu0 %1000
      %1004 = vset.pattern.permute.xlu0 0
      %1005 = vperm.xlu0 %1004, %v478
      %v1006 = vpop.permute.xlu0 %1005
      %1009 = vset.pattern.permute.xlu0 0
      %1010 = vperm.xlu0 %1009, %v479
      %v1011 = vpop.permute.xlu0 %1010
      %1014 = vset.pattern.permute.xlu0 0
      %1015 = vperm.xlu0 %1014, %v480
      %v1016 = vpop.permute.xlu0 %1015
      %1019 = vset.pattern.permute.xlu0 0
      %1020 = vperm.xlu0 %1019, %v481
      %v1021 = vpop.permute.xlu0 %1020
      %1024 = vset.pattern.permute.xlu0 0
      %1025 = vperm.xlu0 %1024, %v482
      %v1026 = vpop.permute.xlu0 %1025
      %1029 = vset.pattern.permute.xlu0 0
      %1030 = vperm.xlu0 %1029, %v483
      %v1031 = vpop.permute.xlu0 %1030
      %1034 = vset.pattern.permute.xlu0 0
      %1035 = vperm.xlu0 %1034, %v484
      %v1036 = vpop.permute.xlu0 %1035
      %1039 = vset.pattern.permute.xlu0 0
      %1040 = vperm.xlu0 %1039, %v485
      %v1041 = vpop.permute.xlu0 %1040
      %1044 = vset.pattern.permute.xlu0 0
      %1045 = vperm.xlu0 %1044, %v486
      %v1046 = vpop.permute.xlu0 %1045
      %1049 = vset.pattern.permute.xlu0 0
      %1050 = vperm.xlu0 %1049, %v487
      %v1051 = vpop.permute.xlu0 %1050
      %1054 = vset.pattern.permute.xlu0 0
      %1055 = vperm.xlu0 %1054, %v488
      %v1056 = vpop.permute.xlu0 %1055
      %1059 = vset.pattern.permute.xlu0 0
      %1060 = vperm.xlu0 %1059, %v489
      %v1061 = vpop.permute.xlu0 %1060
      %1064 = vset.pattern.permute.xlu0 0
      %1065 = vperm.xlu0 %1064, %v490
      %v1066 = vpop.permute.xlu0 %1065
      %1069 = vset.pattern.permute.xlu0 0
      %1070 = vperm.xlu0 %1069, %v491
      %v1071 = vpop.permute.xlu0 %1070
      %1074 = vset.pattern.permute.xlu0 0
      %1075 = vperm.xlu0 %1074, %v492
      %v1076 = vpop.permute.xlu0 %1075
      %1079 = vset.pattern.permute.xlu0 0
      %1080 = vperm.xlu0 %1079, %v493
      %v1081 = vpop.permute.xlu0 %1080
      %1084 = vset.pattern.permute.xlu0 0
      %1085 = vperm.xlu0 %1084, %v494
      %v1086 = vpop.permute.xlu0 %1085
      %1089 = vset.pattern.permute.xlu0 0
      %1090 = vperm.xlu0 %1089, %v495
      %v1091 = vpop.permute.xlu0 %1090
      %1094 = vset.pattern.permute.xlu0 0
      %1095 = vperm.xlu0 %1094, %v496
      %v1096 = vpop.permute.xlu0 %1095
      %1099 = vset.pattern.permute.xlu0 0
      %1100 = vperm.xlu0 %1099, %v497
      %v1101 = vpop.permute.xlu0 %1100
      %1104 = vset.pattern.permute.xlu0 0
      %1105 = vperm.xlu0 %1104, %v498
      %v1106 = vpop.permute.xlu0 %1105
      %1109 = vset.pattern.permute.xlu0 0
      %1110 = vperm.xlu0 %1109, %v499
      %v1111 = vpop.permute.xlu0 %1110
      %1114 = vset.pattern.permute.xlu0 0
      %1115 = vperm.xlu0 %1114, %v500
      %v1116 = vpop.permute.xlu0 %1115
      %1119 = vset.pattern.permute.xlu0 0
      %1120 = vperm.xlu0 %1119, %v501
      %v1121 = vpop.permute.xlu0 %1120
      %1124 = vset.pattern.permute.xlu0 0
      %1125 = vperm.xlu0 %1124, %v502
      %v1126 = vpop.permute.xlu0 %1125
      %1129 = vset.pattern.permute.xlu0 0
      %1130 = vperm.xlu0 %1129, %v503
      %v1131 = vpop.permute.xlu0 %1130
      %1134 = vset.pattern.permute.xlu0 0
      %1135 = vperm.xlu0 %1134, %v504
      %v1136 = vpop.permute.xlu0 %1135
      %1139 = vset.pattern.permute.xlu0 0
      %1140 = vperm.xlu0 %1139, %v505
      %v1141 = vpop.permute.xlu0 %1140
      %1144 = vset.pattern.permute.xlu0 0
      %1145 = vperm.xlu0 %1144, %v506
      %v1146 = vpop.permute.xlu0 %1145
      %v1148 = vlaneseq
      %v1149 = vshrl.u32 %v1148, 7
      %v1150 = vsub.s32 0, %v1149
      %v1151 = vrot.slane %v507, %v1150
      %v1152 = vmul.f32 %v511, %v1151
      %v1153 = vmul.f32 %v516, %v1151
      %v1154 = vmul.f32 %v521, %v1151
      %v1155 = vmul.f32 %v526, %v1151
      %v1156 = vmul.f32 %v531, %v1151
      %v1157 = vmul.f32 %v536, %v1151
      %v1158 = vmul.f32 %v541, %v1151
      %v1159 = vmul.f32 %v546, %v1151
      %v1160 = vmul.f32 %v551, %v1151
      %v1161 = vmul.f32 %v556, %v1151
      %v1162 = vmul.f32 %v561, %v1151
      %v1163 = vmul.f32 %v566, %v1151
      %v1164 = vmul.f32 %v571, %v1151
      %v1165 = vmul.f32 %v576, %v1151
      %v1166 = vmul.f32 %v581, %v1151
      %v1167 = vmul.f32 %v586, %v1151
      %v1168 = vmul.f32 %v591, %v1151
      %v1169 = vmul.f32 %v596, %v1151
      %v1170 = vmul.f32 %v601, %v1151
      %v1171 = vmul.f32 %v606, %v1151
      %v1172 = vmul.f32 %v611, %v1151
      %v1173 = vmul.f32 %v616, %v1151
      %v1174 = vmul.f32 %v621, %v1151
      %v1175 = vmul.f32 %v626, %v1151
      %v1176 = vmul.f32 %v631, %v1151
      %v1177 = vmul.f32 %v636, %v1151
      %v1178 = vmul.f32 %v641, %v1151
      %v1179 = vmul.f32 %v646, %v1151
      %v1180 = vmul.f32 %v651, %v1151
      %v1181 = vmul.f32 %v656, %v1151
      %v1182 = vmul.f32 %v661, %v1151
      %v1183 = vmul.f32 %v666, %v1151
      %v1184 = vmul.f32 %v671, %v1151
      %v1185 = vmul.f32 %v676, %v1151
      %v1186 = vmul.f32 %v681, %v1151
      %v1187 = vmul.f32 %v686, %v1151
      %v1188 = vmul.f32 %v691, %v1151
      %v1189 = vmul.f32 %v696, %v1151
      %v1190 = vmul.f32 %v701, %v1151
      %v1191 = vmul.f32 %v706, %v1151
      %v1192 = vmul.f32 %v711, %v1151
      %v1193 = vmul.f32 %v716, %v1151
      %v1194 = vmul.f32 %v721, %v1151
      %v1195 = vmul.f32 %v726, %v1151
      %v1196 = vmul.f32 %v731, %v1151
      %v1197 = vmul.f32 %v736, %v1151
      %v1198 = vmul.f32 %v741, %v1151
      %v1199 = vmul.f32 %v746, %v1151
      %v1200 = vmul.f32 %v751, %v1151
      %v1201 = vmul.f32 %v756, %v1151
      %v1202 = vmul.f32 %v761, %v1151
      %v1203 = vmul.f32 %v766, %v1151
      %v1204 = vmul.f32 %v771, %v1151
      %v1205 = vmul.f32 %v776, %v1151
      %v1206 = vmul.f32 %v781, %v1151
      %v1207 = vmul.f32 %v786, %v1151
      %v1208 = vmul.f32 %v791, %v1151
      %v1209 = vmul.f32 %v796, %v1151
      %v1210 = vmul.f32 %v801, %v1151
      %v1211 = vmul.f32 %v806, %v1151
      %v1212 = vmul.f32 %v811, %v1151
      %v1213 = vmul.f32 %v816, %v1151
      %v1214 = vmul.f32 %v821, %v1151
      %v1215 = vmul.f32 %v826, %v1151
      %v1216 = vmul.f32 %v831, %v1151
      %v1217 = vmul.f32 %v836, %v1151
      %v1218 = vmul.f32 %v841, %v1151
      %v1219 = vmul.f32 %v846, %v1151
      %v1220 = vmul.f32 %v851, %v1151
      %v1221 = vmul.f32 %v856, %v1151
      %v1222 = vmul.f32 %v861, %v1151
      %v1223 = vmul.f32 %v866, %v1151
      %v1224 = vmul.f32 %v871, %v1151
      %v1225 = vmul.f32 %v876, %v1151
      %v1226 = vmul.f32 %v881, %v1151
      %v1227 = vmul.f32 %v886, %v1151
      %v1228 = vmul.f32 %v891, %v1151
      %v1229 = vmul.f32 %v896, %v1151
      %v1230 = vmul.f32 %v901, %v1151
      %v1231 = vmul.f32 %v906, %v1151
      %v1232 = vmul.f32 %v911, %v1151
      %v1233 = vmul.f32 %v916, %v1151
      %v1234 = vmul.f32 %v921, %v1151
      %v1235 = vmul.f32 %v926, %v1151
      %v1236 = vmul.f32 %v931, %v1151
      %v1237 = vmul.f32 %v936, %v1151
      %v1238 = vmul.f32 %v941, %v1151
      %v1239 = vmul.f32 %v946, %v1151
      %v1240 = vmul.f32 %v951, %v1151
      %v1241 = vmul.f32 %v956, %v1151
      %v1242 = vmul.f32 %v961, %v1151
      %v1243 = vmul.f32 %v966, %v1151
      %v1244 = vmul.f32 %v971, %v1151
      %v1245 = vmul.f32 %v976, %v1151
      %v1246 = vmul.f32 %v981, %v1151
      %v1247 = vmul.f32 %v986, %v1151
      %v1248 = vmul.f32 %v991, %v1151
      %v1249 = vmul.f32 %v996, %v1151
      %v1250 = vmul.f32 %v1001, %v1151
      %v1251 = vmul.f32 %v1006, %v1151
      %v1252 = vmul.f32 %v1011, %v1151
      %v1253 = vmul.f32 %v1016, %v1151
      %v1254 = vmul.f32 %v1021, %v1151
      %v1255 = vmul.f32 %v1026, %v1151
      %v1256 = vmul.f32 %v1031, %v1151
      %v1257 = vmul.f32 %v1036, %v1151
      %v1258 = vmul.f32 %v1041, %v1151
      %v1259 = vmul.f32 %v1046, %v1151
      %v1260 = vmul.f32 %v1051, %v1151
      %v1261 = vmul.f32 %v1056, %v1151
      %v1262 = vmul.f32 %v1061, %v1151
      %v1263 = vmul.f32 %v1066, %v1151
      %v1264 = vmul.f32 %v1071, %v1151
      %v1265 = vmul.f32 %v1076, %v1151
      %v1266 = vmul.f32 %v1081, %v1151
      %v1267 = vmul.f32 %v1086, %v1151
      %v1268 = vmul.f32 %v1091, %v1151
      %v1269 = vmul.f32 %v1096, %v1151
      %v1270 = vmul.f32 %v1101, %v1151
      %v1271 = vmul.f32 %v1106, %v1151
      %v1272 = vmul.f32 %v1111, %v1151
      %v1273 = vmul.f32 %v1116, %v1151
      %v1274 = vmul.f32 %v1121, %v1151
      %v1275 = vmul.f32 %v1126, %v1151
      %v1276 = vmul.f32 %v1131, %v1151
      %v1277 = vmul.f32 %v1136, %v1151
      %v1278 = vmul.f32 %v1141, %v1151
      %v1279 = vmul.f32 %v1146, %v1151
      %vm1280 = vcmask 31744
      %v1282 = vsel %vm1280, %v250, 0
      %v1285 = vsel %vm1280, %v251, 0
      %v1288 = vsel %vm1280, %v252, 0
      %v1291 = vsel %vm1280, %v253, 0
      %v1294 = vsel %vm1280, %v254, 0
      %v1297 = vsel %vm1280, %v255, 0
      %v1300 = vsel %vm1280, %v256, 0
      %v1303 = vsel %vm1280, %v257, 0
      %v1306 = vsel %vm1280, %v258, 0
      %v1309 = vsel %vm1280, %v259, 0
      %v1312 = vsel %vm1280, %v260, 0
      %v1315 = vsel %vm1280, %v261, 0
      %v1318 = vsel %vm1280, %v262, 0
      %v1321 = vsel %vm1280, %v263, 0
      %v1324 = vsel %vm1280, %v264, 0
      %v1327 = vsel %vm1280, %v265, 0
      %v1330 = vsel %vm1280, %v266, 0
      %v1333 = vsel %vm1280, %v267, 0
      %v1336 = vsel %vm1280, %v268, 0
      %v1339 = vsel %vm1280, %v269, 0
      %v1342 = vsel %vm1280, %v270, 0
      %v1345 = vsel %vm1280, %v271, 0
      %v1348 = vsel %vm1280, %v272, 0
      %v1351 = vsel %vm1280, %v273, 0
      %v1354 = vsel %vm1280, %v274, 0
      %v1357 = vsel %vm1280, %v275, 0
      %v1360 = vsel %vm1280, %v276, 0
      %v1363 = vsel %vm1280, %v277, 0
      %v1366 = vsel %vm1280, %v278, 0
      %v1369 = vsel %vm1280, %v279, 0
      %v1372 = vsel %vm1280, %v280, 0
      %v1375 = vsel %vm1280, %v281, 0
      %v1378 = vsel %vm1280, %v282, 0
      %v1381 = vsel %vm1280, %v283, 0
      %v1384 = vsel %vm1280, %v284, 0
      %v1387 = vsel %vm1280, %v285, 0
      %v1390 = vsel %vm1280, %v286, 0
      %v1393 = vsel %vm1280, %v287, 0
      %v1396 = vsel %vm1280, %v288, 0
      %v1399 = vsel %vm1280, %v289, 0
      %v1402 = vsel %vm1280, %v290, 0
      %v1405 = vsel %vm1280, %v291, 0
      %v1408 = vsel %vm1280, %v292, 0
      %v1411 = vsel %vm1280, %v293, 0
      %v1414 = vsel %vm1280, %v294, 0
      %v1417 = vsel %vm1280, %v295, 0
      %v1420 = vsel %vm1280, %v296, 0
      %v1423 = vsel %vm1280, %v297, 0
      %v1426 = vsel %vm1280, %v298, 0
      %v1429 = vsel %vm1280, %v299, 0
      %v1432 = vsel %vm1280, %v300, 0
      %v1435 = vsel %vm1280, %v301, 0
      %v1438 = vsel %vm1280, %v302, 0
      %v1441 = vsel %vm1280, %v303, 0
      %v1444 = vsel %vm1280, %v304, 0
      %v1447 = vsel %vm1280, %v305, 0
      %v1450 = vsel %vm1280, %v306, 0
      %v1453 = vsel %vm1280, %v307, 0
      %v1456 = vsel %vm1280, %v308, 0
      %v1459 = vsel %vm1280, %v309, 0
      %v1462 = vsel %vm1280, %v310, 0
      %v1465 = vsel %vm1280, %v311, 0
      %v1468 = vsel %vm1280, %v312, 0
      %v1471 = vsel %vm1280, %v313, 0
      %v1474 = vsel %vm1280, %v314, 0
      %v1477 = vsel %vm1280, %v315, 0
      %v1480 = vsel %vm1280, %v316, 0
      %v1483 = vsel %vm1280, %v317, 0
      %v1486 = vsel %vm1280, %v318, 0
      %v1489 = vsel %vm1280, %v319, 0
      %v1492 = vsel %vm1280, %v320, 0
      %v1495 = vsel %vm1280, %v321, 0
      %v1498 = vsel %vm1280, %v322, 0
      %v1501 = vsel %vm1280, %v323, 0
      %v1504 = vsel %vm1280, %v324, 0
      %v1507 = vsel %vm1280, %v325, 0
      %v1510 = vsel %vm1280, %v326, 0
      %v1513 = vsel %vm1280, %v327, 0
      %v1516 = vsel %vm1280, %v328, 0
      %v1519 = vsel %vm1280, %v329, 0
      %v1522 = vsel %vm1280, %v330, 0
      %v1525 = vsel %vm1280, %v331, 0
      %v1528 = vsel %vm1280, %v332, 0
      %v1531 = vsel %vm1280, %v333, 0
      %v1534 = vsel %vm1280, %v334, 0
      %v1537 = vsel %vm1280, %v335, 0
      %v1540 = vsel %vm1280, %v336, 0
      %v1543 = vsel %vm1280, %v337, 0
      %v1546 = vsel %vm1280, %v338, 0
      %v1549 = vsel %vm1280, %v339, 0
      %v1552 = vsel %vm1280, %v340, 0
      %v1555 = vsel %vm1280, %v341, 0
      %v1558 = vsel %vm1280, %v342, 0
      %v1561 = vsel %vm1280, %v343, 0
      %v1564 = vsel %vm1280, %v344, 0
      %v1567 = vsel %vm1280, %v345, 0
      %v1570 = vsel %vm1280, %v346, 0
      %v1573 = vsel %vm1280, %v347, 0
      %v1576 = vsel %vm1280, %v348, 0
      %v1579 = vsel %vm1280, %v349, 0
      %v1582 = vsel %vm1280, %v350, 0
      %v1585 = vsel %vm1280, %v351, 0
      %v1588 = vsel %vm1280, %v352, 0
      %v1591 = vsel %vm1280, %v353, 0
      %v1594 = vsel %vm1280, %v354, 0
      %v1597 = vsel %vm1280, %v355, 0
      %v1600 = vsel %vm1280, %v356, 0
      %v1603 = vsel %vm1280, %v357, 0
      %v1606 = vsel %vm1280, %v358, 0
      %v1609 = vsel %vm1280, %v359, 0
      %v1612 = vsel %vm1280, %v360, 0
      %v1615 = vsel %vm1280, %v361, 0
      %v1618 = vsel %vm1280, %v362, 0
      %v1621 = vsel %vm1280, %v363, 0
      %v1624 = vsel %vm1280, %v364, 0
      %v1627 = vsel %vm1280, %v365, 0
      %v1630 = vsel %vm1280, %v366, 0
      %v1633 = vsel %vm1280, %v367, 0
      %v1636 = vsel %vm1280, %v368, 0
      %v1639 = vsel %vm1280, %v369, 0
      %v1642 = vsel %vm1280, %v370, 0
      %v1645 = vsel %vm1280, %v371, 0
      %v1648 = vsel %vm1280, %v372, 0
      %v1651 = vsel %vm1280, %v373, 0
      %v1654 = vsel %vm1280, %v374, 0
      %v1657 = vsel %vm1280, %v375, 0
      %v1660 = vsel %vm1280, %v376, 0
      %v1663 = vsel %vm1280, %v377, 0
      %vm1665 = vcmask 1043456
      %v1667 = vsel %vm1665, %v378, 0
      %1669 = vmatprep.subr.mxu0 0.0
      %1670 = vmatpush1.msra.mxu0 %v1667
      %1671 = vmatprep.subr.mxu0 0.0
      %1672 = vmatpush1.msra.mxu0 0.0
      %1673 = vmatprep.subr.mxu0 0.0
      %1674 = vmatpush1.msra.mxu0 0.0
      %1675 = vmatprep.subr.mxu0 0.0
      %1676 = vmatpush1.msra.mxu0 0.0
      %1677 = vmatprep.subr.mxu0 0.0
      %1678 = vmatpush1.msra.mxu0 0.0
      %1679 = vmatprep.subr.mxu0 0.0
      %1680 = vmatpush1.msra.mxu0 0.0
      %1681 = vmatprep.subr.mxu0 0.0
      %1682 = vmatpush1.msra.mxu0 0.0
      %1683 = vmatprep.subr.mxu0 0.0
      %1684 = vmatpush1.msra.mxu0 0.0
      %1685 = vmatprep.subr.mxu0 0.0
      %1686 = vmatpush1.msra.mxu0 0.0
      %1687 = vmatprep.subr.mxu0 0.0
      %1688 = vmatpush1.msra.mxu0 0.0
      %1689 = vmatprep.subr.mxu0 0.0
      %1690 = vmatpush1.msra.mxu0 0.0
      %1691 = vmatprep.subr.mxu0 0.0
      %1692 = vmatpush1.msra.mxu0 0.0
      %1693 = vmatprep.subr.mxu0 0.0
      %1694 = vmatpush1.msra.mxu0 0.0
      %1695 = vmatprep.subr.mxu0 0.0
      %1696 = vmatpush1.msra.mxu0 0.0
      %1697 = vmatprep.subr.mxu0 0.0
      %1698 = vmatpush1.msra.mxu0 0.0
      %1699 = vmatprep.subr.mxu0 0.0
      %1700 = vmatpush1.msra.mxu0 0.0
      %1701 = vmatprep.subr.mxu0 0.0
      %1702 = vmatpush1.msra.mxu0 0.0
      %1703 = vmatprep.subr.mxu0 0.0
      %1704 = vmatpush1.msra.mxu0 0.0
      %1705 = vmatprep.subr.mxu0 0.0
      %1706 = vmatpush1.msra.mxu0 0.0
      %1707 = vmatprep.subr.mxu0 0.0
      %1708 = vmatpush1.msra.mxu0 0.0
      %1709 = vmatprep.subr.mxu0 0.0
      %1710 = vmatpush1.msra.mxu0 0.0
      %1711 = vmatprep.subr.mxu0 0.0
      %1712 = vmatpush1.msra.mxu0 0.0
      %1713 = vmatprep.subr.mxu0 0.0
      %1714 = vmatpush1.msra.mxu0 0.0
      %1715 = vmatprep.subr.mxu0 0.0
      %1716 = vmatpush1.msra.mxu0 0.0
      %1717 = vmatprep.subr.mxu0 0.0
      %1718 = vmatpush1.msra.mxu0 0.0
      %1719 = vmatprep.subr.mxu0 0.0
      %1720 = vmatpush1.msra.mxu0 0.0
      %1721 = vmatprep.subr.mxu0 0.0
      %1722 = vmatpush1.msra.mxu0 0.0
      %1723 = vmatprep.subr.mxu0 0.0
      %1724 = vmatpush1.msra.mxu0 0.0
      %1725 = vmatprep.subr.mxu0 0.0
      %1726 = vmatpush1.msra.mxu0 0.0
      %1727 = vmatprep.subr.mxu0 0.0
      %1728 = vmatpush1.msra.mxu0 0.0
      %1729 = vmatprep.subr.mxu0 0.0
      %1730 = vmatpush1.msra.mxu0 0.0
      %1731 = vmatprep.subr.mxu0 0.0
      %1732 = vmatpush1.msra.mxu0 0.0
      %1733 = vmatprep.mubr.f32.mxu0 0.0
      %1734 = vmatmul.mubr.f32.gmra.mrb[0].mxu0 %v1282
      %v1735 = vpop.f32.mrb[0].mxu0
      %v1736 = vadd.f32 %v1152, %v1735
      %v1737 = vpop.f32.mrb[0].mxu0
      %1738 = vmatprep.mubr.f32.mxu0 0.0
      %1739 = vmatmul.mubr.f32.gmra.mrb[0].mxu0 %v1285
      %v1740 = vpop.f32.mrb[0].mxu0
      %v1741 = vadd.f32 %v1153, %v1740
      %v1742 = vpop.f32.mrb[0].mxu0
      %1743 = vmatprep.mubr.f32.mxu0 0.0
      %1744 = vmatmul.mubr.f32.gmra.mrb[0].mxu0 %v1288
      %v1745 = vpop.f32.mrb[0].mxu0
      %v1746 = vadd.f32 %v1154, %v1745
      %v1747 = vpop.f32.mrb[0].mxu0
      %1748 = vmatprep.mubr.f32.mxu0 0.0
      %1749 = vmatmul.mubr.f32.gmra.mrb[0].mxu0 %v1291
      %v1750 = vpop.f32.mrb[0].mxu0
      %v1751 = vadd.f32 %v1155, %v1750
      %v1752 = vpop.f32.mrb[0].mxu0
      %1753 = vmatprep.mubr.f32.mxu0 0.0
      %1754 = vmatmul.mubr.f32.gmra.mrb[0].mxu0 %v1294
      %v1755 = vpop.f32.mrb[0].mxu0
      %v1756 = vadd.f32 %v1156, %v1755
      %v1757 = vpop.f32.mrb[0].mxu0
      %1758 = vmatprep.mubr.f32.mxu0 0.0
      %1759 = vmatmul.mubr.f32.gmra.mrb[0].mxu0 %v1297
      %v1760 = vpop.f32.mrb[0].mxu0
      %v1761 = vadd.f32 %v1157, %v1760
      %v1762 = vpop.f32.mrb[0].mxu0
      %1763 = vmatprep.mubr.f32.mxu0 0.0
      %1764 = vmatmul.mubr.f32.gmra.mrb[0].mxu0 %v1300
      %v1765 = vpop.f32.mrb[0].mxu0
      %v1766 = vadd.f32 %v1158, %v1765
      %v1767 = vpop.f32.mrb[0].mxu0
      %1768 = vmatprep.mubr.f32.mxu0 0.0
      %1769 = vmatmul.mubr.f32.gmra.mrb[0].mxu0 %v1303
      %v1770 = vpop.f32.mrb[0].mxu0
      %v1771 = vadd.f32 %v1159, %v1770
      %v1772 = vpop.f32.mrb[0].mxu0
      %1773 = vmatprep.mubr.f32.mxu0 0.0
      %1774 = vmatmul.mubr.f32.gmra.mrb[0].mxu0 %v1306
      %v1775 = vpop.f32.mrb[0].mxu0
      %v1776 = vadd.f32 %v1160, %v1775
      %v1777 = vpop.f32.mrb[0].mxu0
      %1778 = vmatprep.mubr.f32.mxu0 0.0
      %1779 = vmatmul.mubr.f32.gmra.mrb[0].mxu0 %v1309
      %v1780 = vpop.f32.mrb[0].mxu0
      %v1781 = vadd.f32 %v1161, %v1780
      %v1782 = vpop.f32.mrb[0].mxu0
      %1783 = vmatprep.mubr.f32.mxu0 0.0
      %1784 = vmatmul.mubr.f32.gmra.mrb[0].mxu0 %v1312
      %v1785 = vpop.f32.mrb[0].mxu0
      %v1786 = vadd.f32 %v1162, %v1785
      %v1787 = vpop.f32.mrb[0].mxu0
      %1788 = vmatprep.mubr.f32.mxu0 0.0
      %1789 = vmatmul.mubr.f32.gmra.mrb[0].mxu0 %v1315
      %v1790 = vpop.f32.mrb[0].mxu0
      %v1791 = vadd.f32 %v1163, %v1790
      %v1792 = vpop.f32.mrb[0].mxu0
      %1793 = vmatprep.mubr.f32.mxu0 0.0
      %1794 = vmatmul.mubr.f32.gmra.mrb[0].mxu0 %v1318
      %v1795 = vpop.f32.mrb[0].mxu0
      %v1796 = vadd.f32 %v1164, %v1795
      %v1797 = vpop.f32.mrb[0].mxu0
      %1798 = vmatprep.mubr.f32.mxu0 0.0
      %1799 = vmatmul.mubr.f32.gmra.mrb[0].mxu0 %v1321
      %v1800 = vpop.f32.mrb[0].mxu0
      %v1801 = vadd.f32 %v1165, %v1800
      %v1802 = vpop.f32.mrb[0].mxu0
      %1803 = vmatprep.mubr.f32.mxu0 0.0
      %1804 = vmatmul.mubr.f32.gmra.mrb[0].mxu0 %v1324
      %v1805 = vpop.f32.mrb[0].mxu0
      %v1806 = vadd.f32 %v1166, %v1805
      %v1807 = vpop.f32.mrb[0].mxu0
      %1808 = vmatprep.mubr.f32.mxu0 0.0
      %1809 = vmatmul.mubr.f32.gmra.mrb[0].mxu0 %v1327
      %v1810 = vpop.f32.mrb[0].mxu0
      %v1811 = vadd.f32 %v1167, %v1810
      %v1812 = vpop.f32.mrb[0].mxu0
      %1813 = vmatprep.mubr.f32.mxu0 0.0
      %1814 = vmatmul.mubr.f32.gmra.mrb[0].mxu0 %v1330
      %v1815 = vpop.f32.mrb[0].mxu0
      %v1816 = vadd.f32 %v1168, %v1815
      %v1817 = vpop.f32.mrb[0].mxu0
      %1818 = vmatprep.mubr.f32.mxu0 0.0
      %1819 = vmatmul.mubr.f32.gmra.mrb[0].mxu0 %v1333
      %v1820 = vpop.f32.mrb[0].mxu0
      %v1821 = vadd.f32 %v1169, %v1820
      %v1822 = vpop.f32.mrb[0].mxu0
      %1823 = vmatprep.mubr.f32.mxu0 0.0
      %1824 = vmatmul.mubr.f32.gmra.mrb[0].mxu0 %v1336
      %v1825 = vpop.f32.mrb[0].mxu0
      %v1826 = vadd.f32 %v1170, %v1825
      %v1827 = vpop.f32.mrb[0].mxu0
      %1828 = vmatprep.mubr.f32.mxu0 0.0
      %1829 = vmatmul.mubr.f32.gmra.mrb[0].mxu0 %v1339
      %v1830 = vpop.f32.mrb[0].mxu0
      %v1831 = vadd.f32 %v1171, %v1830
      %v1832 = vpop.f32.mrb[0].mxu0
      %1833 = vmatprep.mubr.f32.mxu0 0.0
      %1834 = vmatmul.mubr.f32.gmra.mrb[0].mxu0 %v1342
      %v1835 = vpop.f32.mrb[0].mxu0
      %v1836 = vadd.f32 %v1172, %v1835
      %v1837 = vpop.f32.mrb[0].mxu0
      %1838 = vmatprep.mubr.f32.mxu0 0.0
      %1839 = vmatmul.mubr.f32.gmra.mrb[0].mxu0 %v1345
      %v1840 = vpop.f32.mrb[0].mxu0
      %v1841 = vadd.f32 %v1173, %v1840
      %v1842 = vpop.f32.mrb[0].mxu0
      %1843 = vmatprep.mubr.f32.mxu0 0.0
      %1844 = vmatmul.mubr.f32.gmra.mrb[0].mxu0 %v1348
      %v1845 = vpop.f32.mrb[0].mxu0
      %v1846 = vadd.f32 %v1174, %v1845
      %v1847 = vpop.f32.mrb[0].mxu0
      %1848 = vmatprep.mubr.f32.mxu0 0.0
      %1849 = vmatmul.mubr.f32.gmra.mrb[0].mxu0 %v1351
      %v1850 = vpop.f32.mrb[0].mxu0
      %v1851 = vadd.f32 %v1175, %v1850
      %v1852 = vpop.f32.mrb[0].mxu0
      %1853 = vmatprep.mubr.f32.mxu0 0.0
      %1854 = vmatmul.mubr.f32.gmra.mrb[0].mxu0 %v1354
      %v1855 = vpop.f32.mrb[0].mxu0
      %v1856 = vadd.f32 %v1176, %v1855
      %v1857 = vpop.f32.mrb[0].mxu0
      %1858 = vmatprep.mubr.f32.mxu0 0.0
      %1859 = vmatmul.mubr.f32.gmra.mrb[0].mxu0 %v1357
      %v1860 = vpop.f32.mrb[0].mxu0
      %v1861 = vadd.f32 %v1177, %v1860
      %v1862 = vpop.f32.mrb[0].mxu0
      %1863 = vmatprep.mubr.f32.mxu0 0.0
      %1864 = vmatmul.mubr.f32.gmra.mrb[0].mxu0 %v1360
      %v1865 = vpop.f32.mrb[0].mxu0
      %v1866 = vadd.f32 %v1178, %v1865
      %v1867 = vpop.f32.mrb[0].mxu0
      %1868 = vmatprep.mubr.f32.mxu0 0.0
      %1869 = vmatmul.mubr.f32.gmra.mrb[0].mxu0 %v1363
      %v1870 = vpop.f32.mrb[0].mxu0
      %v1871 = vadd.f32 %v1179, %v1870
      %v1872 = vpop.f32.mrb[0].mxu0
      %1873 = vmatprep.mubr.f32.mxu0 0.0
      %1874 = vmatmul.mubr.f32.gmra.mrb[0].mxu0 %v1366
      %v1875 = vpop.f32.mrb[0].mxu0
      %v1876 = vadd.f32 %v1180, %v1875
      %v1877 = vpop.f32.mrb[0].mxu0
      %1878 = vmatprep.mubr.f32.mxu0 0.0
      %1879 = vmatmul.mubr.f32.gmra.mrb[0].mxu0 %v1369
      %v1880 = vpop.f32.mrb[0].mxu0
      %v1881 = vadd.f32 %v1181, %v1880
      %v1882 = vpop.f32.mrb[0].mxu0
      %1883 = vmatprep.mubr.f32.mxu0 0.0
      %1884 = vmatmul.mubr.f32.gmra.mrb[0].mxu0 %v1372
      %v1885 = vpop.f32.mrb[0].mxu0
      %v1886 = vadd.f32 %v1182, %v1885
      %v1887 = vpop.f32.mrb[0].mxu0
      %1888 = vmatprep.mubr.f32.mxu0 0.0
      %1889 = vmatmul.mubr.f32.gmra.mrb[0].mxu0 %v1375
      %v1890 = vpop.f32.mrb[0].mxu0
      %v1891 = vadd.f32 %v1183, %v1890
      %v1892 = vpop.f32.mrb[0].mxu0
      %1893 = vmatprep.mubr.f32.mxu0 0.0
      %1894 = vmatmul.mubr.f32.gmra.mrb[0].mxu0 %v1378
      %v1895 = vpop.f32.mrb[0].mxu0
      %v1896 = vadd.f32 %v1184, %v1895
      %v1897 = vpop.f32.mrb[0].mxu0
      %1898 = vmatprep.mubr.f32.mxu0 0.0
      %1899 = vmatmul.mubr.f32.gmra.mrb[0].mxu0 %v1381
      %v1900 = vpop.f32.mrb[0].mxu0
      %v1901 = vadd.f32 %v1185, %v1900
      %v1902 = vpop.f32.mrb[0].mxu0
      %1903 = vmatprep.mubr.f32.mxu0 0.0
      %1904 = vmatmul.mubr.f32.gmra.mrb[0].mxu0 %v1384
      %v1905 = vpop.f32.mrb[0].mxu0
      %v1906 = vadd.f32 %v1186, %v1905
      %v1907 = vpop.f32.mrb[0].mxu0
      %1908 = vmatprep.mubr.f32.mxu0 0.0
      %1909 = vmatmul.mubr.f32.gmra.mrb[0].mxu0 %v1387
      %v1910 = vpop.f32.mrb[0].mxu0
      %v1911 = vadd.f32 %v1187, %v1910
      %v1912 = vpop.f32.mrb[0].mxu0
      %1913 = vmatprep.mubr.f32.mxu0 0.0
      %1914 = vmatmul.mubr.f32.gmra.mrb[0].mxu0 %v1390
      %v1915 = vpop.f32.mrb[0].mxu0
      %v1916 = vadd.f32 %v1188, %v1915
      %v1917 = vpop.f32.mrb[0].mxu0
      %1918 = vmatprep.mubr.f32.mxu0 0.0
      %1919 = vmatmul.mubr.f32.gmra.mrb[0].mxu0 %v1393
      %v1920 = vpop.f32.mrb[0].mxu0
      %v1921 = vadd.f32 %v1189, %v1920
      %v1922 = vpop.f32.mrb[0].mxu0
      %1923 = vmatprep.mubr.f32.mxu0 0.0
      %1924 = vmatmul.mubr.f32.gmra.mrb[0].mxu0 %v1396
      %v1925 = vpop.f32.mrb[0].mxu0
      %v1926 = vadd.f32 %v1190, %v1925
      %v1927 = vpop.f32.mrb[0].mxu0
      %1928 = vmatprep.mubr.f32.mxu0 0.0
      %1929 = vmatmul.mubr.f32.gmra.mrb[0].mxu0 %v1399
      %v1930 = vpop.f32.mrb[0].mxu0
      %v1931 = vadd.f32 %v1191, %v1930
      %v1932 = vpop.f32.mrb[0].mxu0
      %1933 = vmatprep.mubr.f32.mxu0 0.0
      %1934 = vmatmul.mubr.f32.gmra.mrb[0].mxu0 %v1402
      %v1935 = vpop.f32.mrb[0].mxu0
      %v1936 = vadd.f32 %v1192, %v1935
      %v1937 = vpop.f32.mrb[0].mxu0
      %1938 = vmatprep.mubr.f32.mxu0 0.0
      %1939 = vmatmul.mubr.f32.gmra.mrb[0].mxu0 %v1405
      %v1940 = vpop.f32.mrb[0].mxu0
      %v1941 = vadd.f32 %v1193, %v1940
      %v1942 = vpop.f32.mrb[0].mxu0
      %1943 = vmatprep.mubr.f32.mxu0 0.0
      %1944 = vmatmul.mubr.f32.gmra.mrb[0].mxu0 %v1408
      %v1945 = vpop.f32.mrb[0].mxu0
      %v1946 = vadd.f32 %v1194, %v1945
      %v1947 = vpop.f32.mrb[0].mxu0
      %1948 = vmatprep.mubr.f32.mxu0 0.0
      %1949 = vmatmul.mubr.f32.gmra.mrb[0].mxu0 %v1411
      %v1950 = vpop.f32.mrb[0].mxu0
      %v1951 = vadd.f32 %v1195, %v1950
      %v1952 = vpop.f32.mrb[0].mxu0
      %1953 = vmatprep.mubr.f32.mxu0 0.0
      %1954 = vmatmul.mubr.f32.gmra.mrb[0].mxu0 %v1414
      %v1955 = vpop.f32.mrb[0].mxu0
      %v1956 = vadd.f32 %v1196, %v1955
      %v1957 = vpop.f32.mrb[0].mxu0
      %1958 = vmatprep.mubr.f32.mxu0 0.0
      %1959 = vmatmul.mubr.f32.gmra.mrb[0].mxu0 %v1417
      %v1960 = vpop.f32.mrb[0].mxu0
      %v1961 = vadd.f32 %v1197, %v1960
      %v1962 = vpop.f32.mrb[0].mxu0
      %1963 = vmatprep.mubr.f32.mxu0 0.0
      %1964 = vmatmul.mubr.f32.gmra.mrb[0].mxu0 %v1420
      %v1965 = vpop.f32.mrb[0].mxu0
      %v1966 = vadd.f32 %v1198, %v1965
      %v1967 = vpop.f32.mrb[0].mxu0
      %1968 = vmatprep.mubr.f32.mxu0 0.0
      %1969 = vmatmul.mubr.f32.gmra.mrb[0].mxu0 %v1423
      %v1970 = vpop.f32.mrb[0].mxu0
      %v1971 = vadd.f32 %v1199, %v1970
      %v1972 = vpop.f32.mrb[0].mxu0
      %1973 = vmatprep.mubr.f32.mxu0 0.0
      %1974 = vmatmul.mubr.f32.gmra.mrb[0].mxu0 %v1426
      %v1975 = vpop.f32.mrb[0].mxu0
      %v1976 = vadd.f32 %v1200, %v1975
      %v1977 = vpop.f32.mrb[0].mxu0
      %1978 = vmatprep.mubr.f32.mxu0 0.0
      %1979 = vmatmul.mubr.f32.gmra.mrb[0].mxu0 %v1429
      %v1980 = vpop.f32.mrb[0].mxu0
      %v1981 = vadd.f32 %v1201, %v1980
      %v1982 = vpop.f32.mrb[0].mxu0
      %1983 = vmatprep.mubr.f32.mxu0 0.0
      %1984 = vmatmul.mubr.f32.gmra.mrb[0].mxu0 %v1432
      %v1985 = vpop.f32.mrb[0].mxu0
      %v1986 = vadd.f32 %v1202, %v1985
      %v1987 = vpop.f32.mrb[0].mxu0
      %1988 = vmatprep.mubr.f32.mxu0 0.0
      %1989 = vmatmul.mubr.f32.gmra.mrb[0].mxu0 %v1435
      %v1990 = vpop.f32.mrb[0].mxu0
      %v1991 = vadd.f32 %v1203, %v1990
      %v1992 = vpop.f32.mrb[0].mxu0
      %1993 = vmatprep.mubr.f32.mxu0 0.0
      %1994 = vmatmul.mubr.f32.gmra.mrb[0].mxu0 %v1438
      %v1995 = vpop.f32.mrb[0].mxu0
      %v1996 = vadd.f32 %v1204, %v1995
      %v1997 = vpop.f32.mrb[0].mxu0
      %1998 = vmatprep.mubr.f32.mxu0 0.0
      %1999 = vmatmul.mubr.f32.gmra.mrb[0].mxu0 %v1441
      %v2000 = vpop.f32.mrb[0].mxu0
      %v2001 = vadd.f32 %v1205, %v2000
      %v2002 = vpop.f32.mrb[0].mxu0
      %2003 = vmatprep.mubr.f32.mxu0 0.0
      %2004 = vmatmul.mubr.f32.gmra.mrb[0].mxu0 %v1444
      %v2005 = vpop.f32.mrb[0].mxu0
      %v2006 = vadd.f32 %v1206, %v2005
      %v2007 = vpop.f32.mrb[0].mxu0
      %2008 = vmatprep.mubr.f32.mxu0 0.0
      %2009 = vmatmul.mubr.f32.gmra.mrb[0].mxu0 %v1447
      %v2010 = vpop.f32.mrb[0].mxu0
      %v2011 = vadd.f32 %v1207, %v2010
      %v2012 = vpop.f32.mrb[0].mxu0
      %2013 = vmatprep.mubr.f32.mxu0 0.0
      %2014 = vmatmul.mubr.f32.gmra.mrb[0].mxu0 %v1450
      %v2015 = vpop.f32.mrb[0].mxu0
      %v2016 = vadd.f32 %v1208, %v2015
      %v2017 = vpop.f32.mrb[0].mxu0
      %2018 = vmatprep.mubr.f32.mxu0 0.0
      %2019 = vmatmul.mubr.f32.gmra.mrb[0].mxu0 %v1453
      %v2020 = vpop.f32.mrb[0].mxu0
      %v2021 = vadd.f32 %v1209, %v2020
      %v2022 = vpop.f32.mrb[0].mxu0
      %2023 = vmatprep.mubr.f32.mxu0 0.0
      %2024 = vmatmul.mubr.f32.gmra.mrb[0].mxu0 %v1456
      %v2025 = vpop.f32.mrb[0].mxu0
      %v2026 = vadd.f32 %v1210, %v2025
      %v2027 = vpop.f32.mrb[0].mxu0
      %2028 = vmatprep.mubr.f32.mxu0 0.0
      %2029 = vmatmul.mubr.f32.gmra.mrb[0].mxu0 %v1459
      %v2030 = vpop.f32.mrb[0].mxu0
      %v2031 = vadd.f32 %v1211, %v2030
      %v2032 = vpop.f32.mrb[0].mxu0
      %2033 = vmatprep.mubr.f32.mxu0 0.0
      %2034 = vmatmul.mubr.f32.gmra.mrb[0].mxu0 %v1462
      %v2035 = vpop.f32.mrb[0].mxu0
      %v2036 = vadd.f32 %v1212, %v2035
      %v2037 = vpop.f32.mrb[0].mxu0
      %2038 = vmatprep.mubr.f32.mxu0 0.0
      %2039 = vmatmul.mubr.f32.gmra.mrb[0].mxu0 %v1465
      %v2040 = vpop.f32.mrb[0].mxu0
      %v2041 = vadd.f32 %v1213, %v2040
      %v2042 = vpop.f32.mrb[0].mxu0
      %2043 = vmatprep.mubr.f32.mxu0 0.0
      %2044 = vmatmul.mubr.f32.gmra.mrb[0].mxu0 %v1468
      %v2045 = vpop.f32.mrb[0].mxu0
      %v2046 = vadd.f32 %v1214, %v2045
      %v2047 = vpop.f32.mrb[0].mxu0
      %2048 = vmatprep.mubr.f32.mxu0 0.0
      %2049 = vmatmul.mubr.f32.gmra.mrb[0].mxu0 %v1471
      %v2050 = vpop.f32.mrb[0].mxu0
      %v2051 = vadd.f32 %v1215, %v2050
      %v2052 = vpop.f32.mrb[0].mxu0
      %2053 = vmatprep.mubr.f32.mxu0 0.0
      %2054 = vmatmul.mubr.f32.gmra.mrb[0].mxu0 %v1474
      %v2055 = vpop.f32.mrb[0].mxu0
      %v2056 = vadd.f32 %v1216, %v2055
      %v2057 = vpop.f32.mrb[0].mxu0
      %2058 = vmatprep.mubr.f32.mxu0 0.0
      %2059 = vmatmul.mubr.f32.gmra.mrb[0].mxu0 %v1477
      %v2060 = vpop.f32.mrb[0].mxu0
      %v2061 = vadd.f32 %v1217, %v2060
      %v2062 = vpop.f32.mrb[0].mxu0
      %2063 = vmatprep.mubr.f32.mxu0 0.0
      %2064 = vmatmul.mubr.f32.gmra.mrb[0].mxu0 %v1480
      %v2065 = vpop.f32.mrb[0].mxu0
      %v2066 = vadd.f32 %v1218, %v2065
      %v2067 = vpop.f32.mrb[0].mxu0
      %2068 = vmatprep.mubr.f32.mxu0 0.0
      %2069 = vmatmul.mubr.f32.gmra.mrb[0].mxu0 %v1483
      %v2070 = vpop.f32.mrb[0].mxu0
      %v2071 = vadd.f32 %v1219, %v2070
      %v2072 = vpop.f32.mrb[0].mxu0
      %2073 = vmatprep.mubr.f32.mxu0 0.0
      %2074 = vmatmul.mubr.f32.gmra.mrb[0].mxu0 %v1486
      %v2075 = vpop.f32.mrb[0].mxu0
      %v2076 = vadd.f32 %v1220, %v2075
      %v2077 = vpop.f32.mrb[0].mxu0
      %2078 = vmatprep.mubr.f32.mxu0 0.0
      %2079 = vmatmul.mubr.f32.gmra.mrb[0].mxu0 %v1489
      %v2080 = vpop.f32.mrb[0].mxu0
      %v2081 = vadd.f32 %v1221, %v2080
      %v2082 = vpop.f32.mrb[0].mxu0
      %2083 = vmatprep.mubr.f32.mxu0 0.0
      %2084 = vmatmul.mubr.f32.gmra.mrb[0].mxu0 %v1492
      %v2085 = vpop.f32.mrb[0].mxu0
      %v2086 = vadd.f32 %v1222, %v2085
      %v2087 = vpop.f32.mrb[0].mxu0
      %2088 = vmatprep.mubr.f32.mxu0 0.0
      %2089 = vmatmul.mubr.f32.gmra.mrb[0].mxu0 %v1495
      %v2090 = vpop.f32.mrb[0].mxu0
      %v2091 = vadd.f32 %v1223, %v2090
      %v2092 = vpop.f32.mrb[0].mxu0
      %2093 = vmatprep.mubr.f32.mxu0 0.0
      %2094 = vmatmul.mubr.f32.gmra.mrb[0].mxu0 %v1498
      %v2095 = vpop.f32.mrb[0].mxu0
      %v2096 = vadd.f32 %v1224, %v2095
      %v2097 = vpop.f32.mrb[0].mxu0
      %2098 = vmatprep.mubr.f32.mxu0 0.0
      %2099 = vmatmul.mubr.f32.gmra.mrb[0].mxu0 %v1501
      %v2100 = vpop.f32.mrb[0].mxu0
      %v2101 = vadd.f32 %v1225, %v2100
      %v2102 = vpop.f32.mrb[0].mxu0
      %2103 = vmatprep.mubr.f32.mxu0 0.0
      %2104 = vmatmul.mubr.f32.gmra.mrb[0].mxu0 %v1504
      %v2105 = vpop.f32.mrb[0].mxu0
      %v2106 = vadd.f32 %v1226, %v2105
      %v2107 = vpop.f32.mrb[0].mxu0
      %2108 = vmatprep.mubr.f32.mxu0 0.0
      %2109 = vmatmul.mubr.f32.gmra.mrb[0].mxu0 %v1507
      %v2110 = vpop.f32.mrb[0].mxu0
      %v2111 = vadd.f32 %v1227, %v2110
      %v2112 = vpop.f32.mrb[0].mxu0
      %2113 = vmatprep.mubr.f32.mxu0 0.0
      %2114 = vmatmul.mubr.f32.gmra.mrb[0].mxu0 %v1510
      %v2115 = vpop.f32.mrb[0].mxu0
      %v2116 = vadd.f32 %v1228, %v2115
      %v2117 = vpop.f32.mrb[0].mxu0
      %2118 = vmatprep.mubr.f32.mxu0 0.0
      %2119 = vmatmul.mubr.f32.gmra.mrb[0].mxu0 %v1513
      %v2120 = vpop.f32.mrb[0].mxu0
      %v2121 = vadd.f32 %v1229, %v2120
      %v2122 = vpop.f32.mrb[0].mxu0
      %2123 = vmatprep.mubr.f32.mxu0 0.0
      %2124 = vmatmul.mubr.f32.gmra.mrb[0].mxu0 %v1516
      %v2125 = vpop.f32.mrb[0].mxu0
      %v2126 = vadd.f32 %v1230, %v2125
      %v2127 = vpop.f32.mrb[0].mxu0
      %2128 = vmatprep.mubr.f32.mxu0 0.0
      %2129 = vmatmul.mubr.f32.gmra.mrb[0].mxu0 %v1519
      %v2130 = vpop.f32.mrb[0].mxu0
      %v2131 = vadd.f32 %v1231, %v2130
      %v2132 = vpop.f32.mrb[0].mxu0
      %2133 = vmatprep.mubr.f32.mxu0 0.0
      %2134 = vmatmul.mubr.f32.gmra.mrb[0].mxu0 %v1522
      %v2135 = vpop.f32.mrb[0].mxu0
      %v2136 = vadd.f32 %v1232, %v2135
      %v2137 = vpop.f32.mrb[0].mxu0
      %2138 = vmatprep.mubr.f32.mxu0 0.0
      %2139 = vmatmul.mubr.f32.gmra.mrb[0].mxu0 %v1525
      %v2140 = vpop.f32.mrb[0].mxu0
      %v2141 = vadd.f32 %v1233, %v2140
      %v2142 = vpop.f32.mrb[0].mxu0
      %2143 = vmatprep.mubr.f32.mxu0 0.0
      %2144 = vmatmul.mubr.f32.gmra.mrb[0].mxu0 %v1528
      %v2145 = vpop.f32.mrb[0].mxu0
      %v2146 = vadd.f32 %v1234, %v2145
      %v2147 = vpop.f32.mrb[0].mxu0
      %2148 = vmatprep.mubr.f32.mxu0 0.0
      %2149 = vmatmul.mubr.f32.gmra.mrb[0].mxu0 %v1531
      %v2150 = vpop.f32.mrb[0].mxu0
      %v2151 = vadd.f32 %v1235, %v2150
      %v2152 = vpop.f32.mrb[0].mxu0
      %2153 = vmatprep.mubr.f32.mxu0 0.0
      %2154 = vmatmul.mubr.f32.gmra.mrb[0].mxu0 %v1534
      %v2155 = vpop.f32.mrb[0].mxu0
      %v2156 = vadd.f32 %v1236, %v2155
      %v2157 = vpop.f32.mrb[0].mxu0
      %2158 = vmatprep.mubr.f32.mxu0 0.0
      %2159 = vmatmul.mubr.f32.gmra.mrb[0].mxu0 %v1537
      %v2160 = vpop.f32.mrb[0].mxu0
      %v2161 = vadd.f32 %v1237, %v2160
      %v2162 = vpop.f32.mrb[0].mxu0
      %2163 = vmatprep.mubr.f32.mxu0 0.0
      %2164 = vmatmul.mubr.f32.gmra.mrb[0].mxu0 %v1540
      %v2165 = vpop.f32.mrb[0].mxu0
      %v2166 = vadd.f32 %v1238, %v2165
      %v2167 = vpop.f32.mrb[0].mxu0
      %2168 = vmatprep.mubr.f32.mxu0 0.0
      %2169 = vmatmul.mubr.f32.gmra.mrb[0].mxu0 %v1543
      %v2170 = vpop.f32.mrb[0].mxu0
      %v2171 = vadd.f32 %v1239, %v2170
      %v2172 = vpop.f32.mrb[0].mxu0
      %2173 = vmatprep.mubr.f32.mxu0 0.0
      %2174 = vmatmul.mubr.f32.gmra.mrb[0].mxu0 %v1546
      %v2175 = vpop.f32.mrb[0].mxu0
      %v2176 = vadd.f32 %v1240, %v2175
      %v2177 = vpop.f32.mrb[0].mxu0
      %2178 = vmatprep.mubr.f32.mxu0 0.0
      %2179 = vmatmul.mubr.f32.gmra.mrb[0].mxu0 %v1549
      %v2180 = vpop.f32.mrb[0].mxu0
      %v2181 = vadd.f32 %v1241, %v2180
      %v2182 = vpop.f32.mrb[0].mxu0
      %2183 = vmatprep.mubr.f32.mxu0 0.0
      %2184 = vmatmul.mubr.f32.gmra.mrb[0].mxu0 %v1552
      %v2185 = vpop.f32.mrb[0].mxu0
      %v2186 = vadd.f32 %v1242, %v2185
      %v2187 = vpop.f32.mrb[0].mxu0
      %2188 = vmatprep.mubr.f32.mxu0 0.0
      %2189 = vmatmul.mubr.f32.gmra.mrb[0].mxu0 %v1555
      %v2190 = vpop.f32.mrb[0].mxu0
      %v2191 = vadd.f32 %v1243, %v2190
      %v2192 = vpop.f32.mrb[0].mxu0
      %2193 = vmatprep.mubr.f32.mxu0 0.0
      %2194 = vmatmul.mubr.f32.gmra.mrb[0].mxu0 %v1558
      %v2195 = vpop.f32.mrb[0].mxu0
      %v2196 = vadd.f32 %v1244, %v2195
      %v2197 = vpop.f32.mrb[0].mxu0
      %2198 = vmatprep.mubr.f32.mxu0 0.0
      %2199 = vmatmul.mubr.f32.gmra.mrb[0].mxu0 %v1561
      %v2200 = vpop.f32.mrb[0].mxu0
      %v2201 = vadd.f32 %v1245, %v2200
      %v2202 = vpop.f32.mrb[0].mxu0
      %2203 = vmatprep.mubr.f32.mxu0 0.0
      %2204 = vmatmul.mubr.f32.gmra.mrb[0].mxu0 %v1564
      %v2205 = vpop.f32.mrb[0].mxu0
      %v2206 = vadd.f32 %v1246, %v2205
      %v2207 = vpop.f32.mrb[0].mxu0
      %2208 = vmatprep.mubr.f32.mxu0 0.0
      %2209 = vmatmul.mubr.f32.gmra.mrb[0].mxu0 %v1567
      %v2210 = vpop.f32.mrb[0].mxu0
      %v2211 = vadd.f32 %v1247, %v2210
      %v2212 = vpop.f32.mrb[0].mxu0
      %2213 = vmatprep.mubr.f32.mxu0 0.0
      %2214 = vmatmul.mubr.f32.gmra.mrb[0].mxu0 %v1570
      %v2215 = vpop.f32.mrb[0].mxu0
      %v2216 = vadd.f32 %v1248, %v2215
      %v2217 = vpop.f32.mrb[0].mxu0
      %2218 = vmatprep.mubr.f32.mxu0 0.0
      %2219 = vmatmul.mubr.f32.gmra.mrb[0].mxu0 %v1573
      %v2220 = vpop.f32.mrb[0].mxu0
      %v2221 = vadd.f32 %v1249, %v2220
      %v2222 = vpop.f32.mrb[0].mxu0
      %2223 = vmatprep.mubr.f32.mxu0 0.0
      %2224 = vmatmul.mubr.f32.gmra.mrb[0].mxu0 %v1576
      %v2225 = vpop.f32.mrb[0].mxu0
      %v2226 = vadd.f32 %v1250, %v2225
      %v2227 = vpop.f32.mrb[0].mxu0
      %2228 = vmatprep.mubr.f32.mxu0 0.0
      %2229 = vmatmul.mubr.f32.gmra.mrb[0].mxu0 %v1579
      %v2230 = vpop.f32.mrb[0].mxu0
      %v2231 = vadd.f32 %v1251, %v2230
      %v2232 = vpop.f32.mrb[0].mxu0
      %2233 = vmatprep.mubr.f32.mxu0 0.0
      %2234 = vmatmul.mubr.f32.gmra.mrb[0].mxu0 %v1582
      %v2235 = vpop.f32.mrb[0].mxu0
      %v2236 = vadd.f32 %v1252, %v2235
      %v2237 = vpop.f32.mrb[0].mxu0
      %2238 = vmatprep.mubr.f32.mxu0 0.0
      %2239 = vmatmul.mubr.f32.gmra.mrb[0].mxu0 %v1585
      %v2240 = vpop.f32.mrb[0].mxu0
      %v2241 = vadd.f32 %v1253, %v2240
      %v2242 = vpop.f32.mrb[0].mxu0
      %2243 = vmatprep.mubr.f32.mxu0 0.0
      %2244 = vmatmul.mubr.f32.gmra.mrb[0].mxu0 %v1588
      %v2245 = vpop.f32.mrb[0].mxu0
      %v2246 = vadd.f32 %v1254, %v2245
      %v2247 = vpop.f32.mrb[0].mxu0
      %2248 = vmatprep.mubr.f32.mxu0 0.0
      %2249 = vmatmul.mubr.f32.gmra.mrb[0].mxu0 %v1591
      %v2250 = vpop.f32.mrb[0].mxu0
      %v2251 = vadd.f32 %v1255, %v2250
      %v2252 = vpop.f32.mrb[0].mxu0
      %2253 = vmatprep.mubr.f32.mxu0 0.0
      %2254 = vmatmul.mubr.f32.gmra.mrb[0].mxu0 %v1594
      %v2255 = vpop.f32.mrb[0].mxu0
      %v2256 = vadd.f32 %v1256, %v2255
      %v2257 = vpop.f32.mrb[0].mxu0
      %2258 = vmatprep.mubr.f32.mxu0 0.0
      %2259 = vmatmul.mubr.f32.gmra.mrb[0].mxu0 %v1597
      %v2260 = vpop.f32.mrb[0].mxu0
      %v2261 = vadd.f32 %v1257, %v2260
      %v2262 = vpop.f32.mrb[0].mxu0
      %2263 = vmatprep.mubr.f32.mxu0 0.0
      %2264 = vmatmul.mubr.f32.gmra.mrb[0].mxu0 %v1600
      %v2265 = vpop.f32.mrb[0].mxu0
      %v2266 = vadd.f32 %v1258, %v2265
      %v2267 = vpop.f32.mrb[0].mxu0
      %2268 = vmatprep.mubr.f32.mxu0 0.0
      %2269 = vmatmul.mubr.f32.gmra.mrb[0].mxu0 %v1603
      %v2270 = vpop.f32.mrb[0].mxu0
      %v2271 = vadd.f32 %v1259, %v2270
      %v2272 = vpop.f32.mrb[0].mxu0
      %2273 = vmatprep.mubr.f32.mxu0 0.0
      %2274 = vmatmul.mubr.f32.gmra.mrb[0].mxu0 %v1606
      %v2275 = vpop.f32.mrb[0].mxu0
      %v2276 = vadd.f32 %v1260, %v2275
      %v2277 = vpop.f32.mrb[0].mxu0
      %2278 = vmatprep.mubr.f32.mxu0 0.0
      %2279 = vmatmul.mubr.f32.gmra.mrb[0].mxu0 %v1609
      %v2280 = vpop.f32.mrb[0].mxu0
      %v2281 = vadd.f32 %v1261, %v2280
      %v2282 = vpop.f32.mrb[0].mxu0
      %2283 = vmatprep.mubr.f32.mxu0 0.0
      %2284 = vmatmul.mubr.f32.gmra.mrb[0].mxu0 %v1612
      %v2285 = vpop.f32.mrb[0].mxu0
      %v2286 = vadd.f32 %v1262, %v2285
      %v2287 = vpop.f32.mrb[0].mxu0
      %2288 = vmatprep.mubr.f32.mxu0 0.0
      %2289 = vmatmul.mubr.f32.gmra.mrb[0].mxu0 %v1615
      %v2290 = vpop.f32.mrb[0].mxu0
      %v2291 = vadd.f32 %v1263, %v2290
      %v2292 = vpop.f32.mrb[0].mxu0
      %2293 = vmatprep.mubr.f32.mxu0 0.0
      %2294 = vmatmul.mubr.f32.gmra.mrb[0].mxu0 %v1618
      %v2295 = vpop.f32.mrb[0].mxu0
      %v2296 = vadd.f32 %v1264, %v2295
      %v2297 = vpop.f32.mrb[0].mxu0
      %2298 = vmatprep.mubr.f32.mxu0 0.0
      %2299 = vmatmul.mubr.f32.gmra.mrb[0].mxu0 %v1621
      %v2300 = vpop.f32.mrb[0].mxu0
      %v2301 = vadd.f32 %v1265, %v2300
      %v2302 = vpop.f32.mrb[0].mxu0
      %2303 = vmatprep.mubr.f32.mxu0 0.0
      %2304 = vmatmul.mubr.f32.gmra.mrb[0].mxu0 %v1624
      %v2305 = vpop.f32.mrb[0].mxu0
      %v2306 = vadd.f32 %v1266, %v2305
      %v2307 = vpop.f32.mrb[0].mxu0
      %2308 = vmatprep.mubr.f32.mxu0 0.0
      %2309 = vmatmul.mubr.f32.gmra.mrb[0].mxu0 %v1627
      %v2310 = vpop.f32.mrb[0].mxu0
      %v2311 = vadd.f32 %v1267, %v2310
      %v2312 = vpop.f32.mrb[0].mxu0
      %2313 = vmatprep.mubr.f32.mxu0 0.0
      %2314 = vmatmul.mubr.f32.gmra.mrb[0].mxu0 %v1630
      %v2315 = vpop.f32.mrb[0].mxu0
      %v2316 = vadd.f32 %v1268, %v2315
      %v2317 = vpop.f32.mrb[0].mxu0
      %2318 = vmatprep.mubr.f32.mxu0 0.0
      %2319 = vmatmul.mubr.f32.gmra.mrb[0].mxu0 %v1633
      %v2320 = vpop.f32.mrb[0].mxu0
      %v2321 = vadd.f32 %v1269, %v2320
      %v2322 = vpop.f32.mrb[0].mxu0
      %2323 = vmatprep.mubr.f32.mxu0 0.0
      %2324 = vmatmul.mubr.f32.gmra.mrb[0].mxu0 %v1636
      %v2325 = vpop.f32.mrb[0].mxu0
      %v2326 = vadd.f32 %v1270, %v2325
      %v2327 = vpop.f32.mrb[0].mxu0
      %2328 = vmatprep.mubr.f32.mxu0 0.0
      %2329 = vmatmul.mubr.f32.gmra.mrb[0].mxu0 %v1639
      %v2330 = vpop.f32.mrb[0].mxu0
      %v2331 = vadd.f32 %v1271, %v2330
      %v2332 = vpop.f32.mrb[0].mxu0
      %2333 = vmatprep.mubr.f32.mxu0 0.0
      %2334 = vmatmul.mubr.f32.gmra.mrb[0].mxu0 %v1642
      %v2335 = vpop.f32.mrb[0].mxu0
      %v2336 = vadd.f32 %v1272, %v2335
      %v2337 = vpop.f32.mrb[0].mxu0
      %2338 = vmatprep.mubr.f32.mxu0 0.0
      %2339 = vmatmul.mubr.f32.gmra.mrb[0].mxu0 %v1645
      %v2340 = vpop.f32.mrb[0].mxu0
      %v2341 = vadd.f32 %v1273, %v2340
      %v2342 = vpop.f32.mrb[0].mxu0
      %2343 = vmatprep.mubr.f32.mxu0 0.0
      %2344 = vmatmul.mubr.f32.gmra.mrb[0].mxu0 %v1648
      %v2345 = vpop.f32.mrb[0].mxu0
      %v2346 = vadd.f32 %v1274, %v2345
      %v2347 = vpop.f32.mrb[0].mxu0
      %2348 = vmatprep.mubr.f32.mxu0 0.0
      %2349 = vmatmul.mubr.f32.gmra.mrb[0].mxu0 %v1651
      %v2350 = vpop.f32.mrb[0].mxu0
      %v2351 = vadd.f32 %v1275, %v2350
      %v2352 = vpop.f32.mrb[0].mxu0
      %2353 = vmatprep.mubr.f32.mxu0 0.0
      %2354 = vmatmul.mubr.f32.gmra.mrb[0].mxu0 %v1654
      %v2355 = vpop.f32.mrb[0].mxu0
      %v2356 = vadd.f32 %v1276, %v2355
      %v2357 = vpop.f32.mrb[0].mxu0
      %2358 = vmatprep.mubr.f32.mxu0 0.0
      %2359 = vmatmul.mubr.f32.gmra.mrb[0].mxu0 %v1657
      %v2360 = vpop.f32.mrb[0].mxu0
      %v2361 = vadd.f32 %v1277, %v2360
      %v2362 = vpop.f32.mrb[0].mxu0
      %2363 = vmatprep.mubr.f32.mxu0 0.0
      %2364 = vmatmul.mubr.f32.gmra.mrb[0].mxu0 %v1660
      %v2365 = vpop.f32.mrb[0].mxu0
      %v2366 = vadd.f32 %v1278, %v2365
      %v2367 = vpop.f32.mrb[0].mxu0
      %2368 = vmatprep.mubr.f32.mxu0 0.0
      %2369 = vmatmul.mubr.f32.gmra.mrb[0].mxu0 %v1663
      %v2370 = vpop.f32.mrb[0].mxu0
      %v2371 = vadd.f32 %v1279, %v2370
      %v2372 = vpop.f32.mrb[0].mxu0
      %2373 = vdwg.mxu0
      %2374 = vset.pattern.permute.xlu0 1
      %2375 = vperm.xlu0 %2374, %v379
      %v2376 = vpop.permute.xlu0 %2375
      %2378 = vset.pattern.permute.xlu0 1
      %2379 = vperm.xlu0 %2378, %v380
      %v2380 = vpop.permute.xlu0 %2379
      %2382 = vset.pattern.permute.xlu0 1
      %2383 = vperm.xlu0 %2382, %v381
      %v2384 = vpop.permute.xlu0 %2383
      %2386 = vset.pattern.permute.xlu0 1
      %2387 = vperm.xlu0 %2386, %v382
      %v2388 = vpop.permute.xlu0 %2387
      %2390 = vset.pattern.permute.xlu0 1
      %2391 = vperm.xlu0 %2390, %v383
      %v2392 = vpop.permute.xlu0 %2391
      %2394 = vset.pattern.permute.xlu0 1
      %2395 = vperm.xlu0 %2394, %v384
      %v2396 = vpop.permute.xlu0 %2395
      %2398 = vset.pattern.permute.xlu0 1
      %2399 = vperm.xlu0 %2398, %v385
      %v2400 = vpop.permute.xlu0 %2399
      %2402 = vset.pattern.permute.xlu0 1
      %2403 = vperm.xlu0 %2402, %v386
      %v2404 = vpop.permute.xlu0 %2403
      %2406 = vset.pattern.permute.xlu0 1
      %2407 = vperm.xlu0 %2406, %v387
      %v2408 = vpop.permute.xlu0 %2407
      %2410 = vset.pattern.permute.xlu0 1
      %2411 = vperm.xlu0 %2410, %v388
      %v2412 = vpop.permute.xlu0 %2411
      %2414 = vset.pattern.permute.xlu0 1
      %2415 = vperm.xlu0 %2414, %v389
      %v2416 = vpop.permute.xlu0 %2415
      %2418 = vset.pattern.permute.xlu0 1
      %2419 = vperm.xlu0 %2418, %v390
      %v2420 = vpop.permute.xlu0 %2419
      %2422 = vset.pattern.permute.xlu0 1
      %2423 = vperm.xlu0 %2422, %v391
      %v2424 = vpop.permute.xlu0 %2423
      %2426 = vset.pattern.permute.xlu0 1
      %2427 = vperm.xlu0 %2426, %v392
      %v2428 = vpop.permute.xlu0 %2427
      %2430 = vset.pattern.permute.xlu0 1
      %2431 = vperm.xlu0 %2430, %v393
      %v2432 = vpop.permute.xlu0 %2431
      %2434 = vset.pattern.permute.xlu0 1
      %2435 = vperm.xlu0 %2434, %v394
      %v2436 = vpop.permute.xlu0 %2435
      %2438 = vset.pattern.permute.xlu0 1
      %2439 = vperm.xlu0 %2438, %v395
      %v2440 = vpop.permute.xlu0 %2439
      %2442 = vset.pattern.permute.xlu0 1
      %2443 = vperm.xlu0 %2442, %v396
      %v2444 = vpop.permute.xlu0 %2443
      %2446 = vset.pattern.permute.xlu0 1
      %2447 = vperm.xlu0 %2446, %v397
      %v2448 = vpop.permute.xlu0 %2447
      %2450 = vset.pattern.permute.xlu0 1
      %2451 = vperm.xlu0 %2450, %v398
      %v2452 = vpop.permute.xlu0 %2451
      %2454 = vset.pattern.permute.xlu0 1
      %2455 = vperm.xlu0 %2454, %v399
      %v2456 = vpop.permute.xlu0 %2455
      %2458 = vset.pattern.permute.xlu0 1
      %2459 = vperm.xlu0 %2458, %v400
      %v2460 = vpop.permute.xlu0 %2459
      %2462 = vset.pattern.permute.xlu0 1
      %2463 = vperm.xlu0 %2462, %v401
      %v2464 = vpop.permute.xlu0 %2463
      %2466 = vset.pattern.permute.xlu0 1
      %2467 = vperm.xlu0 %2466, %v402
      %v2468 = vpop.permute.xlu0 %2467
      %2470 = vset.pattern.permute.xlu0 1
      %2471 = vperm.xlu0 %2470, %v403
      %v2472 = vpop.permute.xlu0 %2471
      %2474 = vset.pattern.permute.xlu0 1
      %2475 = vperm.xlu0 %2474, %v404
      %v2476 = vpop.permute.xlu0 %2475
      %2478 = vset.pattern.permute.xlu0 1
      %2479 = vperm.xlu0 %2478, %v405
      %v2480 = vpop.permute.xlu0 %2479
      %2482 = vset.pattern.permute.xlu0 1
      %2483 = vperm.xlu0 %2482, %v406
      %v2484 = vpop.permute.xlu0 %2483
      %2486 = vset.pattern.permute.xlu0 1
      %2487 = vperm.xlu0 %2486, %v407
      %v2488 = vpop.permute.xlu0 %2487
      %2490 = vset.pattern.permute.xlu0 1
      %2491 = vperm.xlu0 %2490, %v408
      %v2492 = vpop.permute.xlu0 %2491
      %2494 = vset.pattern.permute.xlu0 1
      %2495 = vperm.xlu0 %2494, %v409
      %v2496 = vpop.permute.xlu0 %2495
      %2498 = vset.pattern.permute.xlu0 1
      %2499 = vperm.xlu0 %2498, %v410
      %v2500 = vpop.permute.xlu0 %2499
      %2502 = vset.pattern.permute.xlu0 1
      %2503 = vperm.xlu0 %2502, %v411
      %v2504 = vpop.permute.xlu0 %2503
      %2506 = vset.pattern.permute.xlu0 1
      %2507 = vperm.xlu0 %2506, %v412
      %v2508 = vpop.permute.xlu0 %2507
      %2510 = vset.pattern.permute.xlu0 1
      %2511 = vperm.xlu0 %2510, %v413
      %v2512 = vpop.permute.xlu0 %2511
      %2514 = vset.pattern.permute.xlu0 1
      %2515 = vperm.xlu0 %2514, %v414
      %v2516 = vpop.permute.xlu0 %2515
      %2518 = vset.pattern.permute.xlu0 1
      %2519 = vperm.xlu0 %2518, %v415
      %v2520 = vpop.permute.xlu0 %2519
      %2522 = vset.pattern.permute.xlu0 1
      %2523 = vperm.xlu0 %2522, %v416
      %v2524 = vpop.permute.xlu0 %2523
      %2526 = vset.pattern.permute.xlu0 1
      %2527 = vperm.xlu0 %2526, %v417
      %v2528 = vpop.permute.xlu0 %2527
      %2530 = vset.pattern.permute.xlu0 1
      %2531 = vperm.xlu0 %2530, %v418
      %v2532 = vpop.permute.xlu0 %2531
      %2534 = vset.pattern.permute.xlu0 1
      %2535 = vperm.xlu0 %2534, %v419
      %v2536 = vpop.permute.xlu0 %2535
      %2538 = vset.pattern.permute.xlu0 1
      %2539 = vperm.xlu0 %2538, %v420
      %v2540 = vpop.permute.xlu0 %2539
      %2542 = vset.pattern.permute.xlu0 1
      %2543 = vperm.xlu0 %2542, %v421
      %v2544 = vpop.permute.xlu0 %2543
      %2546 = vset.pattern.permute.xlu0 1
      %2547 = vperm.xlu0 %2546, %v422
      %v2548 = vpop.permute.xlu0 %2547
      %2550 = vset.pattern.permute.xlu0 1
      %2551 = vperm.xlu0 %2550, %v423
      %v2552 = vpop.permute.xlu0 %2551
      %2554 = vset.pattern.permute.xlu0 1
      %2555 = vperm.xlu0 %2554, %v424
      %v2556 = vpop.permute.xlu0 %2555
      %2558 = vset.pattern.permute.xlu0 1
      %2559 = vperm.xlu0 %2558, %v425
      %v2560 = vpop.permute.xlu0 %2559
      %2562 = vset.pattern.permute.xlu0 1
      %2563 = vperm.xlu0 %2562, %v426
      %v2564 = vpop.permute.xlu0 %2563
      %2566 = vset.pattern.permute.xlu0 1
      %2567 = vperm.xlu0 %2566, %v427
      %v2568 = vpop.permute.xlu0 %2567
      %2570 = vset.pattern.permute.xlu0 1
      %2571 = vperm.xlu0 %2570, %v428
      %v2572 = vpop.permute.xlu0 %2571
      %2574 = vset.pattern.permute.xlu0 1
      %2575 = vperm.xlu0 %2574, %v429
      %v2576 = vpop.permute.xlu0 %2575
      %2578 = vset.pattern.permute.xlu0 1
      %2579 = vperm.xlu0 %2578, %v430
      %v2580 = vpop.permute.xlu0 %2579
      %2582 = vset.pattern.permute.xlu0 1
      %2583 = vperm.xlu0 %2582, %v431
      %v2584 = vpop.permute.xlu0 %2583
      %2586 = vset.pattern.permute.xlu0 1
      %2587 = vperm.xlu0 %2586, %v432
      %v2588 = vpop.permute.xlu0 %2587
      %2590 = vset.pattern.permute.xlu0 1
      %2591 = vperm.xlu0 %2590, %v433
      %v2592 = vpop.permute.xlu0 %2591
      %2594 = vset.pattern.permute.xlu0 1
      %2595 = vperm.xlu0 %2594, %v434
      %v2596 = vpop.permute.xlu0 %2595
      %2598 = vset.pattern.permute.xlu0 1
      %2599 = vperm.xlu0 %2598, %v435
      %v2600 = vpop.permute.xlu0 %2599
      %2602 = vset.pattern.permute.xlu0 1
      %2603 = vperm.xlu0 %2602, %v436
      %v2604 = vpop.permute.xlu0 %2603
      %2606 = vset.pattern.permute.xlu0 1
      %2607 = vperm.xlu0 %2606, %v437
      %v2608 = vpop.permute.xlu0 %2607
      %2610 = vset.pattern.permute.xlu0 1
      %2611 = vperm.xlu0 %2610, %v438
      %v2612 = vpop.permute.xlu0 %2611
      %2614 = vset.pattern.permute.xlu0 1
      %2615 = vperm.xlu0 %2614, %v439
      %v2616 = vpop.permute.xlu0 %2615
      %2618 = vset.pattern.permute.xlu0 1
      %2619 = vperm.xlu0 %2618, %v440
      %v2620 = vpop.permute.xlu0 %2619
      %2622 = vset.pattern.permute.xlu0 1
      %2623 = vperm.xlu0 %2622, %v441
      %v2624 = vpop.permute.xlu0 %2623
      %2626 = vset.pattern.permute.xlu0 1
      %2627 = vperm.xlu0 %2626, %v442
      %v2628 = vpop.permute.xlu0 %2627
      %2630 = vset.pattern.permute.xlu0 1
      %2631 = vperm.xlu0 %2630, %v443
      %v2632 = vpop.permute.xlu0 %2631
      %2634 = vset.pattern.permute.xlu0 1
      %2635 = vperm.xlu0 %2634, %v444
      %v2636 = vpop.permute.xlu0 %2635
      %2638 = vset.pattern.permute.xlu0 1
      %2639 = vperm.xlu0 %2638, %v445
      %v2640 = vpop.permute.xlu0 %2639
      %2642 = vset.pattern.permute.xlu0 1
      %2643 = vperm.xlu0 %2642, %v446
      %v2644 = vpop.permute.xlu0 %2643
      %2646 = vset.pattern.permute.xlu0 1
      %2647 = vperm.xlu0 %2646, %v447
      %v2648 = vpop.permute.xlu0 %2647
      %2650 = vset.pattern.permute.xlu0 1
      %2651 = vperm.xlu0 %2650, %v448
      %v2652 = vpop.permute.xlu0 %2651
      %2654 = vset.pattern.permute.xlu0 1
      %2655 = vperm.xlu0 %2654, %v449
      %v2656 = vpop.permute.xlu0 %2655
      %2658 = vset.pattern.permute.xlu0 1
      %2659 = vperm.xlu0 %2658, %v450
      %v2660 = vpop.permute.xlu0 %2659
      %2662 = vset.pattern.permute.xlu0 1
      %2663 = vperm.xlu0 %2662, %v451
      %v2664 = vpop.permute.xlu0 %2663
      %2666 = vset.pattern.permute.xlu0 1
      %2667 = vperm.xlu0 %2666, %v452
      %v2668 = vpop.permute.xlu0 %2667
      %2670 = vset.pattern.permute.xlu0 1
      %2671 = vperm.xlu0 %2670, %v453
      %v2672 = vpop.permute.xlu0 %2671
      %2674 = vset.pattern.permute.xlu0 1
      %2675 = vperm.xlu0 %2674, %v454
      %v2676 = vpop.permute.xlu0 %2675
      %2678 = vset.pattern.permute.xlu0 1
      %2679 = vperm.xlu0 %2678, %v455
      %v2680 = vpop.permute.xlu0 %2679
      %2682 = vset.pattern.permute.xlu0 1
      %2683 = vperm.xlu0 %2682, %v456
      %v2684 = vpop.permute.xlu0 %2683
      %2686 = vset.pattern.permute.xlu0 1
      %2687 = vperm.xlu0 %2686, %v457
      %v2688 = vpop.permute.xlu0 %2687
      %2690 = vset.pattern.permute.xlu0 1
      %2691 = vperm.xlu0 %2690, %v458
      %v2692 = vpop.permute.xlu0 %2691
      %2694 = vset.pattern.permute.xlu0 1
      %2695 = vperm.xlu0 %2694, %v459
      %v2696 = vpop.permute.xlu0 %2695
      %2698 = vset.pattern.permute.xlu0 1
      %2699 = vperm.xlu0 %2698, %v460
      %v2700 = vpop.permute.xlu0 %2699
      %2702 = vset.pattern.permute.xlu0 1
      %2703 = vperm.xlu0 %2702, %v461
      %v2704 = vpop.permute.xlu0 %2703
      %2706 = vset.pattern.permute.xlu0 1
      %2707 = vperm.xlu0 %2706, %v462
      %v2708 = vpop.permute.xlu0 %2707
      %2710 = vset.pattern.permute.xlu0 1
      %2711 = vperm.xlu0 %2710, %v463
      %v2712 = vpop.permute.xlu0 %2711
      %2714 = vset.pattern.permute.xlu0 1
      %2715 = vperm.xlu0 %2714, %v464
      %v2716 = vpop.permute.xlu0 %2715
      %2718 = vset.pattern.permute.xlu0 1
      %2719 = vperm.xlu0 %2718, %v465
      %v2720 = vpop.permute.xlu0 %2719
      %2722 = vset.pattern.permute.xlu0 1
      %2723 = vperm.xlu0 %2722, %v466
      %v2724 = vpop.permute.xlu0 %2723
      %2726 = vset.pattern.permute.xlu0 1
      %2727 = vperm.xlu0 %2726, %v467
      %v2728 = vpop.permute.xlu0 %2727
      %2730 = vset.pattern.permute.xlu0 1
      %2731 = vperm.xlu0 %2730, %v468
      %v2732 = vpop.permute.xlu0 %2731
      %2734 = vset.pattern.permute.xlu0 1
      %2735 = vperm.xlu0 %2734, %v469
      %v2736 = vpop.permute.xlu0 %2735
      %2738 = vset.pattern.permute.xlu0 1
      %2739 = vperm.xlu0 %2738, %v470
      %v2740 = vpop.permute.xlu0 %2739
      %2742 = vset.pattern.permute.xlu0 1
      %2743 = vperm.xlu0 %2742, %v471
      %v2744 = vpop.permute.xlu0 %2743
      %2746 = vset.pattern.permute.xlu0 1
      %2747 = vperm.xlu0 %2746, %v472
      %v2748 = vpop.permute.xlu0 %2747
      %2750 = vset.pattern.permute.xlu0 1
      %2751 = vperm.xlu0 %2750, %v473
      %v2752 = vpop.permute.xlu0 %2751
      %2754 = vset.pattern.permute.xlu0 1
      %2755 = vperm.xlu0 %2754, %v474
      %v2756 = vpop.permute.xlu0 %2755
      %2758 = vset.pattern.permute.xlu0 1
      %2759 = vperm.xlu0 %2758, %v475
      %v2760 = vpop.permute.xlu0 %2759
      %2762 = vset.pattern.permute.xlu0 1
      %2763 = vperm.xlu0 %2762, %v476
      %v2764 = vpop.permute.xlu0 %2763
      %2766 = vset.pattern.permute.xlu0 1
      %2767 = vperm.xlu0 %2766, %v477
      %v2768 = vpop.permute.xlu0 %2767
      %2770 = vset.pattern.permute.xlu0 1
      %2771 = vperm.xlu0 %2770, %v478
      %v2772 = vpop.permute.xlu0 %2771
      %2774 = vset.pattern.permute.xlu0 1
      %2775 = vperm.xlu0 %2774, %v479
      %v2776 = vpop.permute.xlu0 %2775
      %2778 = vset.pattern.permute.xlu0 1
      %2779 = vperm.xlu0 %2778, %v480
      %v2780 = vpop.permute.xlu0 %2779
      %2782 = vset.pattern.permute.xlu0 1
      %2783 = vperm.xlu0 %2782, %v481
      %v2784 = vpop.permute.xlu0 %2783
      %2786 = vset.pattern.permute.xlu0 1
      %2787 = vperm.xlu0 %2786, %v482
      %v2788 = vpop.permute.xlu0 %2787
      %2790 = vset.pattern.permute.xlu0 1
      %2791 = vperm.xlu0 %2790, %v483
      %v2792 = vpop.permute.xlu0 %2791
      %2794 = vset.pattern.permute.xlu0 1
      %2795 = vperm.xlu0 %2794, %v484
      %v2796 = vpop.permute.xlu0 %2795
      %2798 = vset.pattern.permute.xlu0 1
      %2799 = vperm.xlu0 %2798, %v485
      %v2800 = vpop.permute.xlu0 %2799
      %2802 = vset.pattern.permute.xlu0 1
      %2803 = vperm.xlu0 %2802, %v486
      %v2804 = vpop.permute.xlu0 %2803
      %2806 = vset.pattern.permute.xlu0 1
      %2807 = vperm.xlu0 %2806, %v487
      %v2808 = vpop.permute.xlu0 %2807
      %2810 = vset.pattern.permute.xlu0 1
      %2811 = vperm.xlu0 %2810, %v488
      %v2812 = vpop.permute.xlu0 %2811
      %2814 = vset.pattern.permute.xlu0 1
      %2815 = vperm.xlu0 %2814, %v489
      %v2816 = vpop.permute.xlu0 %2815
      %2818 = vset.pattern.permute.xlu0 1
      %2819 = vperm.xlu0 %2818, %v490
      %v2820 = vpop.permute.xlu0 %2819
      %2822 = vset.pattern.permute.xlu0 1
      %2823 = vperm.xlu0 %2822, %v491
      %v2824 = vpop.permute.xlu0 %2823
      %2826 = vset.pattern.permute.xlu0 1
      %2827 = vperm.xlu0 %2826, %v492
      %v2828 = vpop.permute.xlu0 %2827
      %2830 = vset.pattern.permute.xlu0 1
      %2831 = vperm.xlu0 %2830, %v493
      %v2832 = vpop.permute.xlu0 %2831
      %2834 = vset.pattern.permute.xlu0 1
      %2835 = vperm.xlu0 %2834, %v494
      %v2836 = vpop.permute.xlu0 %2835
      %2838 = vset.pattern.permute.xlu0 1
      %2839 = vperm.xlu0 %2838, %v495
      %v2840 = vpop.permute.xlu0 %2839
      %2842 = vset.pattern.permute.xlu0 1
      %2843 = vperm.xlu0 %2842, %v496
      %v2844 = vpop.permute.xlu0 %2843
      %2846 = vset.pattern.permute.xlu0 1
      %2847 = vperm.xlu0 %2846, %v497
      %v2848 = vpop.permute.xlu0 %2847
      %2850 = vset.pattern.permute.xlu0 1
      %2851 = vperm.xlu0 %2850, %v498
      %v2852 = vpop.permute.xlu0 %2851
      %2854 = vset.pattern.permute.xlu0 1
      %2855 = vperm.xlu0 %2854, %v499
      %v2856 = vpop.permute.xlu0 %2855
      %2858 = vset.pattern.permute.xlu0 1
      %2859 = vperm.xlu0 %2858, %v500
      %v2860 = vpop.permute.xlu0 %2859
      %2862 = vset.pattern.permute.xlu0 1
      %2863 = vperm.xlu0 %2862, %v501
      %v2864 = vpop.permute.xlu0 %2863
      %2866 = vset.pattern.permute.xlu0 1
      %2867 = vperm.xlu0 %2866, %v502
      %v2868 = vpop.permute.xlu0 %2867
      %2870 = vset.pattern.permute.xlu0 1
      %2871 = vperm.xlu0 %2870, %v503
      %v2872 = vpop.permute.xlu0 %2871
      %2874 = vset.pattern.permute.xlu0 1
      %2875 = vperm.xlu0 %2874, %v504
      %v2876 = vpop.permute.xlu0 %2875
      %2878 = vset.pattern.permute.xlu0 1
      %2879 = vperm.xlu0 %2878, %v505
      %v2880 = vpop.permute.xlu0 %2879
      %2882 = vset.pattern.permute.xlu0 1
      %2883 = vperm.xlu0 %2882, %v506
      %v2884 = vpop.permute.xlu0 %2883
      %v2886 = vlaneseq
      %v2887 = vshrl.u32 %v2886, 7
      %v2888 = vsub.s32 1, %v2887
      %v2889 = vrot.slane %v507, %v2888
      %v2890 = vmul.f32 %v2376, %v2889
      %v2891 = vmul.f32 %v2380, %v2889
      %v2892 = vmul.f32 %v2384, %v2889
      %v2893 = vmul.f32 %v2388, %v2889
      %v2894 = vmul.f32 %v2392, %v2889
      %v2895 = vmul.f32 %v2396, %v2889
      %v2896 = vmul.f32 %v2400, %v2889
      %v2897 = vmul.f32 %v2404, %v2889
      %v2898 = vmul.f32 %v2408, %v2889
      %v2899 = vmul.f32 %v2412, %v2889
      %v2900 = vmul.f32 %v2416, %v2889
      %v2901 = vmul.f32 %v2420, %v2889
      %v2902 = vmul.f32 %v2424, %v2889
      %v2903 = vmul.f32 %v2428, %v2889
      %v2904 = vmul.f32 %v2432, %v2889
      %v2905 = vmul.f32 %v2436, %v2889
      %v2906 = vmul.f32 %v2440, %v2889
      %v2907 = vmul.f32 %v2444, %v2889
      %v2908 = vmul.f32 %v2448, %v2889
      %v2909 = vmul.f32 %v2452, %v2889
      %v2910 = vmul.f32 %v2456, %v2889
      %v2911 = vmul.f32 %v2460, %v2889
      %v2912 = vmul.f32 %v2464, %v2889
      %v2913 = vmul.f32 %v2468, %v2889
      %v2914 = vmul.f32 %v2472, %v2889
      %v2915 = vmul.f32 %v2476, %v2889
      %v2916 = vmul.f32 %v2480, %v2889
      %v2917 = vmul.f32 %v2484, %v2889
      %v2918 = vmul.f32 %v2488, %v2889
      %v2919 = vmul.f32 %v2492, %v2889
      %v2920 = vmul.f32 %v2496, %v2889
      %v2921 = vmul.f32 %v2500, %v2889
      %v2922 = vmul.f32 %v2504, %v2889
      %v2923 = vmul.f32 %v2508, %v2889
      %v2924 = vmul.f32 %v2512, %v2889
      %v2925 = vmul.f32 %v2516, %v2889
      %v2926 = vmul.f32 %v2520, %v2889
      %v2927 = vmul.f32 %v2524, %v2889
      %v2928 = vmul.f32 %v2528, %v2889
      %v2929 = vmul.f32 %v2532, %v2889
      %v2930 = vmul.f32 %v2536, %v2889
      %v2931 = vmul.f32 %v2540, %v2889
      %v2932 = vmul.f32 %v2544, %v2889
      %v2933 = vmul.f32 %v2548, %v2889
      %v2934 = vmul.f32 %v2552, %v2889
      %v2935 = vmul.f32 %v2556, %v2889
      %v2936 = vmul.f32 %v2560, %v2889
      %v2937 = vmul.f32 %v2564, %v2889
      %v2938 = vmul.f32 %v2568, %v2889
      %v2939 = vmul.f32 %v2572, %v2889
      %v2940 = vmul.f32 %v2576, %v2889
      %v2941 = vmul.f32 %v2580, %v2889
      %v2942 = vmul.f32 %v2584, %v2889
      %v2943 = vmul.f32 %v2588, %v2889
      %v2944 = vmul.f32 %v2592, %v2889
      %v2945 = vmul.f32 %v2596, %v2889
      %v2946 = vmul.f32 %v2600, %v2889
      %v2947 = vmul.f32 %v2604, %v2889
      %v2948 = vmul.f32 %v2608, %v2889
      %v2949 = vmul.f32 %v2612, %v2889
      %v2950 = vmul.f32 %v2616, %v2889
      %v2951 = vmul.f32 %v2620, %v2889
      %v2952 = vmul.f32 %v2624, %v2889
      %v2953 = vmul.f32 %v2628, %v2889
      %v2954 = vmul.f32 %v2632, %v2889
      %v2955 = vmul.f32 %v2636, %v2889
      %v2956 = vmul.f32 %v2640, %v2889
      %v2957 = vmul.f32 %v2644, %v2889
      %v2958 = vmul.f32 %v2648, %v2889
      %v2959 = vmul.f32 %v2652, %v2889
      %v2960 = vmul.f32 %v2656, %v2889
      %v2961 = vmul.f32 %v2660, %v2889
      %v2962 = vmul.f32 %v2664, %v2889
      %v2963 = vmul.f32 %v2668, %v2889
      %v2964 = vmul.f32 %v2672, %v2889
      %v2965 = vmul.f32 %v2676, %v2889
      %v2966 = vmul.f32 %v2680, %v2889
      %v2967 = vmul.f32 %v2684, %v2889
      %v2968 = vmul.f32 %v2688, %v2889
      %v2969 = vmul.f32 %v2692, %v2889
      %v2970 = vmul.f32 %v2696, %v2889
      %v2971 = vmul.f32 %v2700, %v2889
      %v2972 = vmul.f32 %v2704, %v2889
      %v2973 = vmul.f32 %v2708, %v2889
      %v2974 = vmul.f32 %v2712, %v2889
      %v2975 = vmul.f32 %v2716, %v2889
      %v2976 = vmul.f32 %v2720, %v2889
      %v2977 = vmul.f32 %v2724, %v2889
      %v2978 = vmul.f32 %v2728, %v2889
      %v2979 = vmul.f32 %v2732, %v2889
      %v2980 = vmul.f32 %v2736, %v2889
      %v2981 = vmul.f32 %v2740, %v2889
      %v2982 = vmul.f32 %v2744, %v2889
      %v2983 = vmul.f32 %v2748, %v2889
      %v2984 = vmul.f32 %v2752, %v2889
      %v2985 = vmul.f32 %v2756, %v2889
      %v2986 = vmul.f32 %v2760, %v2889
      %v2987 = vmul.f32 %v2764, %v2889
      %v2988 = vmul.f32 %v2768, %v2889
      %v2989 = vmul.f32 %v2772, %v2889
      %v2990 = vmul.f32 %v2776, %v2889
      %v2991 = vmul.f32 %v2780, %v2889
      %v2992 = vmul.f32 %v2784, %v2889
      %v2993 = vmul.f32 %v2788, %v2889
      %v2994 = vmul.f32 %v2792, %v2889
      %v2995 = vmul.f32 %v2796, %v2889
      %v2996 = vmul.f32 %v2800, %v2889
      %v2997 = vmul.f32 %v2804, %v2889
      %v2998 = vmul.f32 %v2808, %v2889
      %v2999 = vmul.f32 %v2812, %v2889
      %v3000 = vmul.f32 %v2816, %v2889
      %v3001 = vmul.f32 %v2820, %v2889
      %v3002 = vmul.f32 %v2824, %v2889
      %v3003 = vmul.f32 %v2828, %v2889
      %v3004 = vmul.f32 %v2832, %v2889
      %v3005 = vmul.f32 %v2836, %v2889
      %v3006 = vmul.f32 %v2840, %v2889
      %v3007 = vmul.f32 %v2844, %v2889
      %v3008 = vmul.f32 %v2848, %v2889
      %v3009 = vmul.f32 %v2852, %v2889
      %v3010 = vmul.f32 %v2856, %v2889
      %v3011 = vmul.f32 %v2860, %v2889
      %v3012 = vmul.f32 %v2864, %v2889
      %v3013 = vmul.f32 %v2868, %v2889
      %v3014 = vmul.f32 %v2872, %v2889
      %v3015 = vmul.f32 %v2876, %v2889
      %v3016 = vmul.f32 %v2880, %v2889
      %v3017 = vmul.f32 %v2884, %v2889
      %v3018 = vadd.f32 %v1736, %v2890
      %v3019 = vadd.f32 %v1741, %v2891
      %v3020 = vadd.f32 %v1746, %v2892
      %v3021 = vadd.f32 %v1751, %v2893
      %v3022 = vadd.f32 %v1756, %v2894
      %v3023 = vadd.f32 %v1761, %v2895
      %v3024 = vadd.f32 %v1766, %v2896
      %v3025 = vadd.f32 %v1771, %v2897
      %v3026 = vadd.f32 %v1776, %v2898
      %v3027 = vadd.f32 %v1781, %v2899
      %v3028 = vadd.f32 %v1786, %v2900
      %v3029 = vadd.f32 %v1791, %v2901
      %v3030 = vadd.f32 %v1796, %v2902
      %v3031 = vadd.f32 %v1801, %v2903
      %v3032 = vadd.f32 %v1806, %v2904
      %v3033 = vadd.f32 %v1811, %v2905
      %v3034 = vadd.f32 %v1816, %v2906
      %v3035 = vadd.f32 %v1821, %v2907
      %v3036 = vadd.f32 %v1826, %v2908
      %v3037 = vadd.f32 %v1831, %v2909
      %v3038 = vadd.f32 %v1836, %v2910
      %v3039 = vadd.f32 %v1841, %v2911
      %v3040 = vadd.f32 %v1846, %v2912
      %v3041 = vadd.f32 %v1851, %v2913
      %v3042 = vadd.f32 %v1856, %v2914
      %v3043 = vadd.f32 %v1861, %v2915
      %v3044 = vadd.f32 %v1866, %v2916
      %v3045 = vadd.f32 %v1871, %v2917
      %v3046 = vadd.f32 %v1876, %v2918
      %v3047 = vadd.f32 %v1881, %v2919
      %v3048 = vadd.f32 %v1886, %v2920
      %v3049 = vadd.f32 %v1891, %v2921
      %v3050 = vadd.f32 %v1896, %v2922
      %v3051 = vadd.f32 %v1901, %v2923
      %v3052 = vadd.f32 %v1906, %v2924
      %v3053 = vadd.f32 %v1911, %v2925
      %v3054 = vadd.f32 %v1916, %v2926
      %v3055 = vadd.f32 %v1921, %v2927
      %v3056 = vadd.f32 %v1926, %v2928
      %v3057 = vadd.f32 %v1931, %v2929
      %v3058 = vadd.f32 %v1936, %v2930
      %v3059 = vadd.f32 %v1941, %v2931
      %v3060 = vadd.f32 %v1946, %v2932
      %v3061 = vadd.f32 %v1951, %v2933
      %v3062 = vadd.f32 %v1956, %v2934
      %v3063 = vadd.f32 %v1961, %v2935
      %v3064 = vadd.f32 %v1966, %v2936
      %v3065 = vadd.f32 %v1971, %v2937
      %v3066 = vadd.f32 %v1976, %v2938
      %v3067 = vadd.f32 %v1981, %v2939
      %v3068 = vadd.f32 %v1986, %v2940
      %v3069 = vadd.f32 %v1991, %v2941
      %v3070 = vadd.f32 %v1996, %v2942
      %v3071 = vadd.f32 %v2001, %v2943
      %v3072 = vadd.f32 %v2006, %v2944
      %v3073 = vadd.f32 %v2011, %v2945
      %v3074 = vadd.f32 %v2016, %v2946
      %v3075 = vadd.f32 %v2021, %v2947
      %v3076 = vadd.f32 %v2026, %v2948
      %v3077 = vadd.f32 %v2031, %v2949
      %v3078 = vadd.f32 %v2036, %v2950
      %v3079 = vadd.f32 %v2041, %v2951
      %v3080 = vadd.f32 %v2046, %v2952
      %v3081 = vadd.f32 %v2051, %v2953
      %v3082 = vadd.f32 %v2056, %v2954
      %v3083 = vadd.f32 %v2061, %v2955
      %v3084 = vadd.f32 %v2066, %v2956
      %v3085 = vadd.f32 %v2071, %v2957
      %v3086 = vadd.f32 %v2076, %v2958
      %v3087 = vadd.f32 %v2081, %v2959
      %v3088 = vadd.f32 %v2086, %v2960
      %v3089 = vadd.f32 %v2091, %v2961
      %v3090 = vadd.f32 %v2096, %v2962
      %v3091 = vadd.f32 %v2101, %v2963
      %v3092 = vadd.f32 %v2106, %v2964
      %v3093 = vadd.f32 %v2111, %v2965
      %v3094 = vadd.f32 %v2116, %v2966
      %v3095 = vadd.f32 %v2121, %v2967
      %v3096 = vadd.f32 %v2126, %v2968
      %v3097 = vadd.f32 %v2131, %v2969
      %v3098 = vadd.f32 %v2136, %v2970
      %v3099 = vadd.f32 %v2141, %v2971
      %v3100 = vadd.f32 %v2146, %v2972
      %v3101 = vadd.f32 %v2151, %v2973
      %v3102 = vadd.f32 %v2156, %v2974
      %v3103 = vadd.f32 %v2161, %v2975
      %v3104 = vadd.f32 %v2166, %v2976
      %v3105 = vadd.f32 %v2171, %v2977
      %v3106 = vadd.f32 %v2176, %v2978
      %v3107 = vadd.f32 %v2181, %v2979
      %v3108 = vadd.f32 %v2186, %v2980
      %v3109 = vadd.f32 %v2191, %v2981
      %v3110 = vadd.f32 %v2196, %v2982
      %v3111 = vadd.f32 %v2201, %v2983
      %v3112 = vadd.f32 %v2206, %v2984
      %v3113 = vadd.f32 %v2211, %v2985
      %v3114 = vadd.f32 %v2216, %v2986
      %v3115 = vadd.f32 %v2221, %v2987
      %v3116 = vadd.f32 %v2226, %v2988
      %v3117 = vadd.f32 %v2231, %v2989
      %v3118 = vadd.f32 %v2236, %v2990
      %v3119 = vadd.f32 %v2241, %v2991
      %v3120 = vadd.f32 %v2246, %v2992
      %v3121 = vadd.f32 %v2251, %v2993
      %v3122 = vadd.f32 %v2256, %v2994
      %v3123 = vadd.f32 %v2261, %v2995
      %v3124 = vadd.f32 %v2266, %v2996
      %v3125 = vadd.f32 %v2271, %v2997
      %v3126 = vadd.f32 %v2276, %v2998
      %v3127 = vadd.f32 %v2281, %v2999
      %v3128 = vadd.f32 %v2286, %v3000
      %v3129 = vadd.f32 %v2291, %v3001
      %v3130 = vadd.f32 %v2296, %v3002
      %v3131 = vadd.f32 %v2301, %v3003
      %v3132 = vadd.f32 %v2306, %v3004
      %v3133 = vadd.f32 %v2311, %v3005
      %v3134 = vadd.f32 %v2316, %v3006
      %v3135 = vadd.f32 %v2321, %v3007
      %v3136 = vadd.f32 %v2326, %v3008
      %v3137 = vadd.f32 %v2331, %v3009
      %v3138 = vadd.f32 %v2336, %v3010
      %v3139 = vadd.f32 %v2341, %v3011
      %v3140 = vadd.f32 %v2346, %v3012
      %v3141 = vadd.f32 %v2351, %v3013
      %v3142 = vadd.f32 %v2356, %v3014
      %v3143 = vadd.f32 %v2361, %v3015
      %v3144 = vadd.f32 %v2366, %v3016
      %v3145 = vadd.f32 %v2371, %v3017
      %3146 = vset.pattern.permute.xlu0 2
      %3147 = vperm.xlu0 %3146, %v379
      %v3148 = vpop.permute.xlu0 %3147
      %3150 = vset.pattern.permute.xlu0 2
      %3151 = vperm.xlu0 %3150, %v380
      %v3152 = vpop.permute.xlu0 %3151
      %3154 = vset.pattern.permute.xlu0 2
      %3155 = vperm.xlu0 %3154, %v381
      %v3156 = vpop.permute.xlu0 %3155
      %3158 = vset.pattern.permute.xlu0 2
      %3159 = vperm.xlu0 %3158, %v382
      %v3160 = vpop.permute.xlu0 %3159
      %3162 = vset.pattern.permute.xlu0 2
      %3163 = vperm.xlu0 %3162, %v383
      %v3164 = vpop.permute.xlu0 %3163
      %3166 = vset.pattern.permute.xlu0 2
      %3167 = vperm.xlu0 %3166, %v384
      %v3168 = vpop.permute.xlu0 %3167
      %3170 = vset.pattern.permute.xlu0 2
      %3171 = vperm.xlu0 %3170, %v385
      %v3172 = vpop.permute.xlu0 %3171
      %3174 = vset.pattern.permute.xlu0 2
      %3175 = vperm.xlu0 %3174, %v386
      %v3176 = vpop.permute.xlu0 %3175
      %3178 = vset.pattern.permute.xlu0 2
      %3179 = vperm.xlu0 %3178, %v387
      %v3180 = vpop.permute.xlu0 %3179
      %3182 = vset.pattern.permute.xlu0 2
      %3183 = vperm.xlu0 %3182, %v388
      %v3184 = vpop.permute.xlu0 %3183
      %3186 = vset.pattern.permute.xlu0 2
      %3187 = vperm.xlu0 %3186, %v389
      %v3188 = vpop.permute.xlu0 %3187
      %3190 = vset.pattern.permute.xlu0 2
      %3191 = vperm.xlu0 %3190, %v390
      %v3192 = vpop.permute.xlu0 %3191
      %3194 = vset.pattern.permute.xlu0 2
      %3195 = vperm.xlu0 %3194, %v391
      %v3196 = vpop.permute.xlu0 %3195
      %3198 = vset.pattern.permute.xlu0 2
      %3199 = vperm.xlu0 %3198, %v392
      %v3200 = vpop.permute.xlu0 %3199
      %3202 = vset.pattern.permute.xlu0 2
      %3203 = vperm.xlu0 %3202, %v393
      %v3204 = vpop.permute.xlu0 %3203
      %3206 = vset.pattern.permute.xlu0 2
      %3207 = vperm.xlu0 %3206, %v394
      %v3208 = vpop.permute.xlu0 %3207
      %3210 = vset.pattern.permute.xlu0 2
      %3211 = vperm.xlu0 %3210, %v395
      %v3212 = vpop.permute.xlu0 %3211
      %3214 = vset.pattern.permute.xlu0 2
      %3215 = vperm.xlu0 %3214, %v396
      %v3216 = vpop.permute.xlu0 %3215
      %3218 = vset.pattern.permute.xlu0 2
      %3219 = vperm.xlu0 %3218, %v397
      %v3220 = vpop.permute.xlu0 %3219
      %3222 = vset.pattern.permute.xlu0 2
      %3223 = vperm.xlu0 %3222, %v398
      %v3224 = vpop.permute.xlu0 %3223
      %3226 = vset.pattern.permute.xlu0 2
      %3227 = vperm.xlu0 %3226, %v399
      %v3228 = vpop.permute.xlu0 %3227
      %3230 = vset.pattern.permute.xlu0 2
      %3231 = vperm.xlu0 %3230, %v400
      %v3232 = vpop.permute.xlu0 %3231
      %3234 = vset.pattern.permute.xlu0 2
      %3235 = vperm.xlu0 %3234, %v401
      %v3236 = vpop.permute.xlu0 %3235
      %3238 = vset.pattern.permute.xlu0 2
      %3239 = vperm.xlu0 %3238, %v402
      %v3240 = vpop.permute.xlu0 %3239
      %3242 = vset.pattern.permute.xlu0 2
      %3243 = vperm.xlu0 %3242, %v403
      %v3244 = vpop.permute.xlu0 %3243
      %3246 = vset.pattern.permute.xlu0 2
      %3247 = vperm.xlu0 %3246, %v404
      %v3248 = vpop.permute.xlu0 %3247
      %3250 = vset.pattern.permute.xlu0 2
      %3251 = vperm.xlu0 %3250, %v405
      %v3252 = vpop.permute.xlu0 %3251
      %3254 = vset.pattern.permute.xlu0 2
      %3255 = vperm.xlu0 %3254, %v406
      %v3256 = vpop.permute.xlu0 %3255
      %3258 = vset.pattern.permute.xlu0 2
      %3259 = vperm.xlu0 %3258, %v407
      %v3260 = vpop.permute.xlu0 %3259
      %3262 = vset.pattern.permute.xlu0 2
      %3263 = vperm.xlu0 %3262, %v408
      %v3264 = vpop.permute.xlu0 %3263
      %3266 = vset.pattern.permute.xlu0 2
      %3267 = vperm.xlu0 %3266, %v409
      %v3268 = vpop.permute.xlu0 %3267
      %3270 = vset.pattern.permute.xlu0 2
      %3271 = vperm.xlu0 %3270, %v410
      %v3272 = vpop.permute.xlu0 %3271
      %3274 = vset.pattern.permute.xlu0 2
      %3275 = vperm.xlu0 %3274, %v411
      %v3276 = vpop.permute.xlu0 %3275
      %3278 = vset.pattern.permute.xlu0 2
      %3279 = vperm.xlu0 %3278, %v412
      %v3280 = vpop.permute.xlu0 %3279
      %3282 = vset.pattern.permute.xlu0 2
      %3283 = vperm.xlu0 %3282, %v413
      %v3284 = vpop.permute.xlu0 %3283
      %3286 = vset.pattern.permute.xlu0 2
      %3287 = vperm.xlu0 %3286, %v414
      %v3288 = vpop.permute.xlu0 %3287
      %3290 = vset.pattern.permute.xlu0 2
      %3291 = vperm.xlu0 %3290, %v415
      %v3292 = vpop.permute.xlu0 %3291
      %3294 = vset.pattern.permute.xlu0 2
      %3295 = vperm.xlu0 %3294, %v416
      %v3296 = vpop.permute.xlu0 %3295
      %3298 = vset.pattern.permute.xlu0 2
      %3299 = vperm.xlu0 %3298, %v417
      %v3300 = vpop.permute.xlu0 %3299
      %3302 = vset.pattern.permute.xlu0 2
      %3303 = vperm.xlu0 %3302, %v418
      %v3304 = vpop.permute.xlu0 %3303
      %3306 = vset.pattern.permute.xlu0 2
      %3307 = vperm.xlu0 %3306, %v419
      %v3308 = vpop.permute.xlu0 %3307
      %3310 = vset.pattern.permute.xlu0 2
      %3311 = vperm.xlu0 %3310, %v420
      %v3312 = vpop.permute.xlu0 %3311
      %3314 = vset.pattern.permute.xlu0 2
      %3315 = vperm.xlu0 %3314, %v421
      %v3316 = vpop.permute.xlu0 %3315
      %3318 = vset.pattern.permute.xlu0 2
      %3319 = vperm.xlu0 %3318, %v422
      %v3320 = vpop.permute.xlu0 %3319
      %3322 = vset.pattern.permute.xlu0 2
      %3323 = vperm.xlu0 %3322, %v423
      %v3324 = vpop.permute.xlu0 %3323
      %3326 = vset.pattern.permute.xlu0 2
      %3327 = vperm.xlu0 %3326, %v424
      %v3328 = vpop.permute.xlu0 %3327
      %3330 = vset.pattern.permute.xlu0 2
      %3331 = vperm.xlu0 %3330, %v425
      %v3332 = vpop.permute.xlu0 %3331
      %3334 = vset.pattern.permute.xlu0 2
      %3335 = vperm.xlu0 %3334, %v426
      %v3336 = vpop.permute.xlu0 %3335
      %3338 = vset.pattern.permute.xlu0 2
      %3339 = vperm.xlu0 %3338, %v427
      %v3340 = vpop.permute.xlu0 %3339
      %3342 = vset.pattern.permute.xlu0 2
      %3343 = vperm.xlu0 %3342, %v428
      %v3344 = vpop.permute.xlu0 %3343
      %3346 = vset.pattern.permute.xlu0 2
      %3347 = vperm.xlu0 %3346, %v429
      %v3348 = vpop.permute.xlu0 %3347
      %3350 = vset.pattern.permute.xlu0 2
      %3351 = vperm.xlu0 %3350, %v430
      %v3352 = vpop.permute.xlu0 %3351
      %3354 = vset.pattern.permute.xlu0 2
      %3355 = vperm.xlu0 %3354, %v431
      %v3356 = vpop.permute.xlu0 %3355
      %3358 = vset.pattern.permute.xlu0 2
      %3359 = vperm.xlu0 %3358, %v432
      %v3360 = vpop.permute.xlu0 %3359
      %3362 = vset.pattern.permute.xlu0 2
      %3363 = vperm.xlu0 %3362, %v433
      %v3364 = vpop.permute.xlu0 %3363
      %3366 = vset.pattern.permute.xlu0 2
      %3367 = vperm.xlu0 %3366, %v434
      %v3368 = vpop.permute.xlu0 %3367
      %3370 = vset.pattern.permute.xlu0 2
      %3371 = vperm.xlu0 %3370, %v435
      %v3372 = vpop.permute.xlu0 %3371
      %3374 = vset.pattern.permute.xlu0 2
      %3375 = vperm.xlu0 %3374, %v436
      %v3376 = vpop.permute.xlu0 %3375
      %3378 = vset.pattern.permute.xlu0 2
      %3379 = vperm.xlu0 %3378, %v437
      %v3380 = vpop.permute.xlu0 %3379
      %3382 = vset.pattern.permute.xlu0 2
      %3383 = vperm.xlu0 %3382, %v438
      %v3384 = vpop.permute.xlu0 %3383
      %3386 = vset.pattern.permute.xlu0 2
      %3387 = vperm.xlu0 %3386, %v439
      %v3388 = vpop.permute.xlu0 %3387
      %3390 = vset.pattern.permute.xlu0 2
      %3391 = vperm.xlu0 %3390, %v440
      %v3392 = vpop.permute.xlu0 %3391
      %3394 = vset.pattern.permute.xlu0 2
      %3395 = vperm.xlu0 %3394, %v441
      %v3396 = vpop.permute.xlu0 %3395
      %3398 = vset.pattern.permute.xlu0 2
      %3399 = vperm.xlu0 %3398, %v442
      %v3400 = vpop.permute.xlu0 %3399
      %3402 = vset.pattern.permute.xlu0 2
      %3403 = vperm.xlu0 %3402, %v443
      %v3404 = vpop.permute.xlu0 %3403
      %3406 = vset.pattern.permute.xlu0 2
      %3407 = vperm.xlu0 %3406, %v444
      %v3408 = vpop.permute.xlu0 %3407
      %3410 = vset.pattern.permute.xlu0 2
      %3411 = vperm.xlu0 %3410, %v445
      %v3412 = vpop.permute.xlu0 %3411
      %3414 = vset.pattern.permute.xlu0 2
      %3415 = vperm.xlu0 %3414, %v446
      %v3416 = vpop.permute.xlu0 %3415
      %3418 = vset.pattern.permute.xlu0 2
      %3419 = vperm.xlu0 %3418, %v447
      %v3420 = vpop.permute.xlu0 %3419
      %3422 = vset.pattern.permute.xlu0 2
      %3423 = vperm.xlu0 %3422, %v448
      %v3424 = vpop.permute.xlu0 %3423
      %3426 = vset.pattern.permute.xlu0 2
      %3427 = vperm.xlu0 %3426, %v449
      %v3428 = vpop.permute.xlu0 %3427
      %3430 = vset.pattern.permute.xlu0 2
      %3431 = vperm.xlu0 %3430, %v450
      %v3432 = vpop.permute.xlu0 %3431
      %3434 = vset.pattern.permute.xlu0 2
      %3435 = vperm.xlu0 %3434, %v451
      %v3436 = vpop.permute.xlu0 %3435
      %3438 = vset.pattern.permute.xlu0 2
      %3439 = vperm.xlu0 %3438, %v452
      %v3440 = vpop.permute.xlu0 %3439
      %3442 = vset.pattern.permute.xlu0 2
      %3443 = vperm.xlu0 %3442, %v453
      %v3444 = vpop.permute.xlu0 %3443
      %3446 = vset.pattern.permute.xlu0 2
      %3447 = vperm.xlu0 %3446, %v454
      %v3448 = vpop.permute.xlu0 %3447
      %3450 = vset.pattern.permute.xlu0 2
      %3451 = vperm.xlu0 %3450, %v455
      %v3452 = vpop.permute.xlu0 %3451
      %3454 = vset.pattern.permute.xlu0 2
      %3455 = vperm.xlu0 %3454, %v456
      %v3456 = vpop.permute.xlu0 %3455
      %3458 = vset.pattern.permute.xlu0 2
      %3459 = vperm.xlu0 %3458, %v457
      %v3460 = vpop.permute.xlu0 %3459
      %3462 = vset.pattern.permute.xlu0 2
      %3463 = vperm.xlu0 %3462, %v458
      %v3464 = vpop.permute.xlu0 %3463
      %3466 = vset.pattern.permute.xlu0 2
      %3467 = vperm.xlu0 %3466, %v459
      %v3468 = vpop.permute.xlu0 %3467
      %3470 = vset.pattern.permute.xlu0 2
      %3471 = vperm.xlu0 %3470, %v460
      %v3472 = vpop.permute.xlu0 %3471
      %3474 = vset.pattern.permute.xlu0 2
      %3475 = vperm.xlu0 %3474, %v461
      %v3476 = vpop.permute.xlu0 %3475
      %3478 = vset.pattern.permute.xlu0 2
      %3479 = vperm.xlu0 %3478, %v462
      %v3480 = vpop.permute.xlu0 %3479
      %3482 = vset.pattern.permute.xlu0 2
      %3483 = vperm.xlu0 %3482, %v463
      %v3484 = vpop.permute.xlu0 %3483
      %3486 = vset.pattern.permute.xlu0 2
      %3487 = vperm.xlu0 %3486, %v464
      %v3488 = vpop.permute.xlu0 %3487
      %3490 = vset.pattern.permute.xlu0 2
      %3491 = vperm.xlu0 %3490, %v465
      %v3492 = vpop.permute.xlu0 %3491
      %3494 = vset.pattern.permute.xlu0 2
      %3495 = vperm.xlu0 %3494, %v466
      %v3496 = vpop.permute.xlu0 %3495
      %3498 = vset.pattern.permute.xlu0 2
      %3499 = vperm.xlu0 %3498, %v467
      %v3500 = vpop.permute.xlu0 %3499
      %3502 = vset.pattern.permute.xlu0 2
      %3503 = vperm.xlu0 %3502, %v468
      %v3504 = vpop.permute.xlu0 %3503
      %3506 = vset.pattern.permute.xlu0 2
      %3507 = vperm.xlu0 %3506, %v469
      %v3508 = vpop.permute.xlu0 %3507
      %3510 = vset.pattern.permute.xlu0 2
      %3511 = vperm.xlu0 %3510, %v470
      %v3512 = vpop.permute.xlu0 %3511
      %3514 = vset.pattern.permute.xlu0 2
      %3515 = vperm.xlu0 %3514, %v471
      %v3516 = vpop.permute.xlu0 %3515
      %3518 = vset.pattern.permute.xlu0 2
      %3519 = vperm.xlu0 %3518, %v472
      %v3520 = vpop.permute.xlu0 %3519
      %3522 = vset.pattern.permute.xlu0 2
      %3523 = vperm.xlu0 %3522, %v473
      %v3524 = vpop.permute.xlu0 %3523
      %3526 = vset.pattern.permute.xlu0 2
      %3527 = vperm.xlu0 %3526, %v474
      %v3528 = vpop.permute.xlu0 %3527
      %3530 = vset.pattern.permute.xlu0 2
      %3531 = vperm.xlu0 %3530, %v475
      %v3532 = vpop.permute.xlu0 %3531
      %3534 = vset.pattern.permute.xlu0 2
      %3535 = vperm.xlu0 %3534, %v476
      %v3536 = vpop.permute.xlu0 %3535
      %3538 = vset.pattern.permute.xlu0 2
      %3539 = vperm.xlu0 %3538, %v477
      %v3540 = vpop.permute.xlu0 %3539
      %3542 = vset.pattern.permute.xlu0 2
      %3543 = vperm.xlu0 %3542, %v478
      %v3544 = vpop.permute.xlu0 %3543
      %3546 = vset.pattern.permute.xlu0 2
      %3547 = vperm.xlu0 %3546, %v479
      %v3548 = vpop.permute.xlu0 %3547
      %3550 = vset.pattern.permute.xlu0 2
      %3551 = vperm.xlu0 %3550, %v480
      %v3552 = vpop.permute.xlu0 %3551
      %3554 = vset.pattern.permute.xlu0 2
      %3555 = vperm.xlu0 %3554, %v481
      %v3556 = vpop.permute.xlu0 %3555
      %3558 = vset.pattern.permute.xlu0 2
      %3559 = vperm.xlu0 %3558, %v482
      %v3560 = vpop.permute.xlu0 %3559
      %3562 = vset.pattern.permute.xlu0 2
      %3563 = vperm.xlu0 %3562, %v483
      %v3564 = vpop.permute.xlu0 %3563
      %3566 = vset.pattern.permute.xlu0 2
      %3567 = vperm.xlu0 %3566, %v484
      %v3568 = vpop.permute.xlu0 %3567
      %3570 = vset.pattern.permute.xlu0 2
      %3571 = vperm.xlu0 %3570, %v485
      %v3572 = vpop.permute.xlu0 %3571
      %3574 = vset.pattern.permute.xlu0 2
      %3575 = vperm.xlu0 %3574, %v486
      %v3576 = vpop.permute.xlu0 %3575
      %3578 = vset.pattern.permute.xlu0 2
      %3579 = vperm.xlu0 %3578, %v487
      %v3580 = vpop.permute.xlu0 %3579
      %3582 = vset.pattern.permute.xlu0 2
      %3583 = vperm.xlu0 %3582, %v488
      %v3584 = vpop.permute.xlu0 %3583
      %3586 = vset.pattern.permute.xlu0 2
      %3587 = vperm.xlu0 %3586, %v489
      %v3588 = vpop.permute.xlu0 %3587
      %3590 = vset.pattern.permute.xlu0 2
      %3591 = vperm.xlu0 %3590, %v490
      %v3592 = vpop.permute.xlu0 %3591
      %3594 = vset.pattern.permute.xlu0 2
      %3595 = vperm.xlu0 %3594, %v491
      %v3596 = vpop.permute.xlu0 %3595
      %3598 = vset.pattern.permute.xlu0 2
      %3599 = vperm.xlu0 %3598, %v492
      %v3600 = vpop.permute.xlu0 %3599
      %3602 = vset.pattern.permute.xlu0 2
      %3603 = vperm.xlu0 %3602, %v493
      %v3604 = vpop.permute.xlu0 %3603
      %3606 = vset.pattern.permute.xlu0 2
      %3607 = vperm.xlu0 %3606, %v494
      %v3608 = vpop.permute.xlu0 %3607
      %3610 = vset.pattern.permute.xlu0 2
      %3611 = vperm.xlu0 %3610, %v495
      %v3612 = vpop.permute.xlu0 %3611
      %3614 = vset.pattern.permute.xlu0 2
      %3615 = vperm.xlu0 %3614, %v496
      %v3616 = vpop.permute.xlu0 %3615
      %3618 = vset.pattern.permute.xlu0 2
      %3619 = vperm.xlu0 %3618, %v497
      %v3620 = vpop.permute.xlu0 %3619
      %3622 = vset.pattern.permute.xlu0 2
      %3623 = vperm.xlu0 %3622, %v498
      %v3624 = vpop.permute.xlu0 %3623
      %3626 = vset.pattern.permute.xlu0 2
      %3627 = vperm.xlu0 %3626, %v499
      %v3628 = vpop.permute.xlu0 %3627
      %3630 = vset.pattern.permute.xlu0 2
      %3631 = vperm.xlu0 %3630, %v500
      %v3632 = vpop.permute.xlu0 %3631
      %3634 = vset.pattern.permute.xlu0 2
      %3635 = vperm.xlu0 %3634, %v501
      %v3636 = vpop.permute.xlu0 %3635
      %3638 = vset.pattern.permute.xlu0 2
      %3639 = vperm.xlu0 %3638, %v502
      %v3640 = vpop.permute.xlu0 %3639
      %3642 = vset.pattern.permute.xlu0 2
      %3643 = vperm.xlu0 %3642, %v503
      %v3644 = vpop.permute.xlu0 %3643
      %3646 = vset.pattern.permute.xlu0 2
      %3647 = vperm.xlu0 %3646, %v504
      %v3648 = vpop.permute.xlu0 %3647
      %3650 = vset.pattern.permute.xlu0 2
      %3651 = vperm.xlu0 %3650, %v505
      %v3652 = vpop.permute.xlu0 %3651
      %3654 = vset.pattern.permute.xlu0 2
      %3655 = vperm.xlu0 %3654, %v506
      %v3656 = vpop.permute.xlu0 %3655
      %v3658 = vlaneseq
      %v3659 = vshrl.u32 %v3658, 7
      %v3660 = vsub.s32 2, %v3659
      %v3661 = vrot.slane %v507, %v3660
      %v3662 = vmul.f32 %v3148, %v3661
      %v3663 = vmul.f32 %v3152, %v3661
      %v3664 = vmul.f32 %v3156, %v3661
      %v3665 = vmul.f32 %v3160, %v3661
      %v3666 = vmul.f32 %v3164, %v3661
      %v3667 = vmul.f32 %v3168, %v3661
      %v3668 = vmul.f32 %v3172, %v3661
      %v3669 = vmul.f32 %v3176, %v3661
      %v3670 = vmul.f32 %v3180, %v3661
      %v3671 = vmul.f32 %v3184, %v3661
      %v3672 = vmul.f32 %v3188, %v3661
      %v3673 = vmul.f32 %v3192, %v3661
      %v3674 = vmul.f32 %v3196, %v3661
      %v3675 = vmul.f32 %v3200, %v3661
      %v3676 = vmul.f32 %v3204, %v3661
      %v3677 = vmul.f32 %v3208, %v3661
      %v3678 = vmul.f32 %v3212, %v3661
      %v3679 = vmul.f32 %v3216, %v3661
      %v3680 = vmul.f32 %v3220, %v3661
      %v3681 = vmul.f32 %v3224, %v3661
      %v3682 = vmul.f32 %v3228, %v3661
      %v3683 = vmul.f32 %v3232, %v3661
      %v3684 = vmul.f32 %v3236, %v3661
      %v3685 = vmul.f32 %v3240, %v3661
      %v3686 = vmul.f32 %v3244, %v3661
      %v3687 = vmul.f32 %v3248, %v3661
      %v3688 = vmul.f32 %v3252, %v3661
      %v3689 = vmul.f32 %v3256, %v3661
      %v3690 = vmul.f32 %v3260, %v3661
      %v3691 = vmul.f32 %v3264, %v3661
      %v3692 = vmul.f32 %v3268, %v3661
      %v3693 = vmul.f32 %v3272, %v3661
      %v3694 = vmul.f32 %v3276, %v3661
      %v3695 = vmul.f32 %v3280, %v3661
      %v3696 = vmul.f32 %v3284, %v3661
      %v3697 = vmul.f32 %v3288, %v3661
      %v3698 = vmul.f32 %v3292, %v3661
      %v3699 = vmul.f32 %v3296, %v3661
      %v3700 = vmul.f32 %v3300, %v3661
      %v3701 = vmul.f32 %v3304, %v3661
      %v3702 = vmul.f32 %v3308, %v3661
      %v3703 = vmul.f32 %v3312, %v3661
      %v3704 = vmul.f32 %v3316, %v3661
      %v3705 = vmul.f32 %v3320, %v3661
      %v3706 = vmul.f32 %v3324, %v3661
      %v3707 = vmul.f32 %v3328, %v3661
      %v3708 = vmul.f32 %v3332, %v3661
      %v3709 = vmul.f32 %v3336, %v3661
      %v3710 = vmul.f32 %v3340, %v3661
      %v3711 = vmul.f32 %v3344, %v3661
      %v3712 = vmul.f32 %v3348, %v3661
      %v3713 = vmul.f32 %v3352, %v3661
      %v3714 = vmul.f32 %v3356, %v3661
      %v3715 = vmul.f32 %v3360, %v3661
      %v3716 = vmul.f32 %v3364, %v3661
      %v3717 = vmul.f32 %v3368, %v3661
      %v3718 = vmul.f32 %v3372, %v3661
      %v3719 = vmul.f32 %v3376, %v3661
      %v3720 = vmul.f32 %v3380, %v3661
      %v3721 = vmul.f32 %v3384, %v3661
      %v3722 = vmul.f32 %v3388, %v3661
      %v3723 = vmul.f32 %v3392, %v3661
      %v3724 = vmul.f32 %v3396, %v3661
      %v3725 = vmul.f32 %v3400, %v3661
      %v3726 = vmul.f32 %v3404, %v3661
      %v3727 = vmul.f32 %v3408, %v3661
      %v3728 = vmul.f32 %v3412, %v3661
      %v3729 = vmul.f32 %v3416, %v3661
      %v3730 = vmul.f32 %v3420, %v3661
      %v3731 = vmul.f32 %v3424, %v3661
      %v3732 = vmul.f32 %v3428, %v3661
      %v3733 = vmul.f32 %v3432, %v3661
      %v3734 = vmul.f32 %v3436, %v3661
      %v3735 = vmul.f32 %v3440, %v3661
      %v3736 = vmul.f32 %v3444, %v3661
      %v3737 = vmul.f32 %v3448, %v3661
      %v3738 = vmul.f32 %v3452, %v3661
      %v3739 = vmul.f32 %v3456, %v3661
      %v3740 = vmul.f32 %v3460, %v3661
      %v3741 = vmul.f32 %v3464, %v3661
      %v3742 = vmul.f32 %v3468, %v3661
      %v3743 = vmul.f32 %v3472, %v3661
      %v3744 = vmul.f32 %v3476, %v3661
      %v3745 = vmul.f32 %v3480, %v3661
      %v3746 = vmul.f32 %v3484, %v3661
      %v3747 = vmul.f32 %v3488, %v3661
      %v3748 = vmul.f32 %v3492, %v3661
      %v3749 = vmul.f32 %v3496, %v3661
      %v3750 = vmul.f32 %v3500, %v3661
      %v3751 = vmul.f32 %v3504, %v3661
      %v3752 = vmul.f32 %v3508, %v3661
      %v3753 = vmul.f32 %v3512, %v3661
      %v3754 = vmul.f32 %v3516, %v3661
      %v3755 = vmul.f32 %v3520, %v3661
      %v3756 = vmul.f32 %v3524, %v3661
      %v3757 = vmul.f32 %v3528, %v3661
      %v3758 = vmul.f32 %v3532, %v3661
      %v3759 = vmul.f32 %v3536, %v3661
      %v3760 = vmul.f32 %v3540, %v3661
      %v3761 = vmul.f32 %v3544, %v3661
      %v3762 = vmul.f32 %v3548, %v3661
      %v3763 = vmul.f32 %v3552, %v3661
      %v3764 = vmul.f32 %v3556, %v3661
      %v3765 = vmul.f32 %v3560, %v3661
      %v3766 = vmul.f32 %v3564, %v3661
      %v3767 = vmul.f32 %v3568, %v3661
      %v3768 = vmul.f32 %v3572, %v3661
      %v3769 = vmul.f32 %v3576, %v3661
      %v3770 = vmul.f32 %v3580, %v3661
      %v3771 = vmul.f32 %v3584, %v3661
      %v3772 = vmul.f32 %v3588, %v3661
      %v3773 = vmul.f32 %v3592, %v3661
      %v3774 = vmul.f32 %v3596, %v3661
      %v3775 = vmul.f32 %v3600, %v3661
      %v3776 = vmul.f32 %v3604, %v3661
      %v3777 = vmul.f32 %v3608, %v3661
      %v3778 = vmul.f32 %v3612, %v3661
      %v3779 = vmul.f32 %v3616, %v3661
      %v3780 = vmul.f32 %v3620, %v3661
      %v3781 = vmul.f32 %v3624, %v3661
      %v3782 = vmul.f32 %v3628, %v3661
      %v3783 = vmul.f32 %v3632, %v3661
      %v3784 = vmul.f32 %v3636, %v3661
      %v3785 = vmul.f32 %v3640, %v3661
      %v3786 = vmul.f32 %v3644, %v3661
      %v3787 = vmul.f32 %v3648, %v3661
      %v3788 = vmul.f32 %v3652, %v3661
      %v3789 = vmul.f32 %v3656, %v3661
      %v3790 = vadd.f32 %v3018, %v3662
      %v3791 = vadd.f32 %v3019, %v3663
      %v3792 = vadd.f32 %v3020, %v3664
      %v3793 = vadd.f32 %v3021, %v3665
      %v3794 = vadd.f32 %v3022, %v3666
      %v3795 = vadd.f32 %v3023, %v3667
      %v3796 = vadd.f32 %v3024, %v3668
      %v3797 = vadd.f32 %v3025, %v3669
      %v3798 = vadd.f32 %v3026, %v3670
      %v3799 = vadd.f32 %v3027, %v3671
      %v3800 = vadd.f32 %v3028, %v3672
      %v3801 = vadd.f32 %v3029, %v3673
      %v3802 = vadd.f32 %v3030, %v3674
      %v3803 = vadd.f32 %v3031, %v3675
      %v3804 = vadd.f32 %v3032, %v3676
      %v3805 = vadd.f32 %v3033, %v3677
      %v3806 = vadd.f32 %v3034, %v3678
      %v3807 = vadd.f32 %v3035, %v3679
      %v3808 = vadd.f32 %v3036, %v3680
      %v3809 = vadd.f32 %v3037, %v3681
      %v3810 = vadd.f32 %v3038, %v3682
      %v3811 = vadd.f32 %v3039, %v3683
      %v3812 = vadd.f32 %v3040, %v3684
      %v3813 = vadd.f32 %v3041, %v3685
      %v3814 = vadd.f32 %v3042, %v3686
      %v3815 = vadd.f32 %v3043, %v3687
      %v3816 = vadd.f32 %v3044, %v3688
      %v3817 = vadd.f32 %v3045, %v3689
      %v3818 = vadd.f32 %v3046, %v3690
      %v3819 = vadd.f32 %v3047, %v3691
      %v3820 = vadd.f32 %v3048, %v3692
      %v3821 = vadd.f32 %v3049, %v3693
      %v3822 = vadd.f32 %v3050, %v3694
      %v3823 = vadd.f32 %v3051, %v3695
      %v3824 = vadd.f32 %v3052, %v3696
      %v3825 = vadd.f32 %v3053, %v3697
      %v3826 = vadd.f32 %v3054, %v3698
      %v3827 = vadd.f32 %v3055, %v3699
      %v3828 = vadd.f32 %v3056, %v3700
      %v3829 = vadd.f32 %v3057, %v3701
      %v3830 = vadd.f32 %v3058, %v3702
      %v3831 = vadd.f32 %v3059, %v3703
      %v3832 = vadd.f32 %v3060, %v3704
      %v3833 = vadd.f32 %v3061, %v3705
      %v3834 = vadd.f32 %v3062, %v3706
      %v3835 = vadd.f32 %v3063, %v3707
      %v3836 = vadd.f32 %v3064, %v3708
      %v3837 = vadd.f32 %v3065, %v3709
      %v3838 = vadd.f32 %v3066, %v3710
      %v3839 = vadd.f32 %v3067, %v3711
      %v3840 = vadd.f32 %v3068, %v3712
      %v3841 = vadd.f32 %v3069, %v3713
      %v3842 = vadd.f32 %v3070, %v3714
      %v3843 = vadd.f32 %v3071, %v3715
      %v3844 = vadd.f32 %v3072, %v3716
      %v3845 = vadd.f32 %v3073, %v3717
      %v3846 = vadd.f32 %v3074, %v3718
      %v3847 = vadd.f32 %v3075, %v3719
      %v3848 = vadd.f32 %v3076, %v3720
      %v3849 = vadd.f32 %v3077, %v3721
      %v3850 = vadd.f32 %v3078, %v3722
      %v3851 = vadd.f32 %v3079, %v3723
      %v3852 = vadd.f32 %v3080, %v3724
      %v3853 = vadd.f32 %v3081, %v3725
      %v3854 = vadd.f32 %v3082, %v3726
      %v3855 = vadd.f32 %v3083, %v3727
      %v3856 = vadd.f32 %v3084, %v3728
      %v3857 = vadd.f32 %v3085, %v3729
      %v3858 = vadd.f32 %v3086, %v3730
      %v3859 = vadd.f32 %v3087, %v3731
      %v3860 = vadd.f32 %v3088, %v3732
      %v3861 = vadd.f32 %v3089, %v3733
      %v3862 = vadd.f32 %v3090, %v3734
      %v3863 = vadd.f32 %v3091, %v3735
      %v3864 = vadd.f32 %v3092, %v3736
      %v3865 = vadd.f32 %v3093, %v3737
      %v3866 = vadd.f32 %v3094, %v3738
      %v3867 = vadd.f32 %v3095, %v3739
      %v3868 = vadd.f32 %v3096, %v3740
      %v3869 = vadd.f32 %v3097, %v3741
      %v3870 = vadd.f32 %v3098, %v3742
      %v3871 = vadd.f32 %v3099, %v3743
      %v3872 = vadd.f32 %v3100, %v3744
      %v3873 = vadd.f32 %v3101, %v3745
      %v3874 = vadd.f32 %v3102, %v3746
      %v3875 = vadd.f32 %v3103, %v3747
      %v3876 = vadd.f32 %v3104, %v3748
      %v3877 = vadd.f32 %v3105, %v3749
      %v3878 = vadd.f32 %v3106, %v3750
      %v3879 = vadd.f32 %v3107, %v3751
      %v3880 = vadd.f32 %v3108, %v3752
      %v3881 = vadd.f32 %v3109, %v3753
      %v3882 = vadd.f32 %v3110, %v3754
      %v3883 = vadd.f32 %v3111, %v3755
      %v3884 = vadd.f32 %v3112, %v3756
      %v3885 = vadd.f32 %v3113, %v3757
      %v3886 = vadd.f32 %v3114, %v3758
      %v3887 = vadd.f32 %v3115, %v3759
      %v3888 = vadd.f32 %v3116, %v3760
      %v3889 = vadd.f32 %v3117, %v3761
      %v3890 = vadd.f32 %v3118, %v3762
      %v3891 = vadd.f32 %v3119, %v3763
      %v3892 = vadd.f32 %v3120, %v3764
      %v3893 = vadd.f32 %v3121, %v3765
      %v3894 = vadd.f32 %v3122, %v3766
      %v3895 = vadd.f32 %v3123, %v3767
      %v3896 = vadd.f32 %v3124, %v3768
      %v3897 = vadd.f32 %v3125, %v3769
      %v3898 = vadd.f32 %v3126, %v3770
      %v3899 = vadd.f32 %v3127, %v3771
      %v3900 = vadd.f32 %v3128, %v3772
      %v3901 = vadd.f32 %v3129, %v3773
      %v3902 = vadd.f32 %v3130, %v3774
      %v3903 = vadd.f32 %v3131, %v3775
      %v3904 = vadd.f32 %v3132, %v3776
      %v3905 = vadd.f32 %v3133, %v3777
      %v3906 = vadd.f32 %v3134, %v3778
      %v3907 = vadd.f32 %v3135, %v3779
      %v3908 = vadd.f32 %v3136, %v3780
      %v3909 = vadd.f32 %v3137, %v3781
      %v3910 = vadd.f32 %v3138, %v3782
      %v3911 = vadd.f32 %v3139, %v3783
      %v3912 = vadd.f32 %v3140, %v3784
      %v3913 = vadd.f32 %v3141, %v3785
      %v3914 = vadd.f32 %v3142, %v3786
      %v3915 = vadd.f32 %v3143, %v3787
      %v3916 = vadd.f32 %v3144, %v3788
      %v3917 = vadd.f32 %v3145, %v3789
      %3918 = vset.pattern.permute.xlu0 3
      %3919 = vperm.xlu0 %3918, %v379
      %v3920 = vpop.permute.xlu0 %3919
      %3922 = vset.pattern.permute.xlu0 3
      %3923 = vperm.xlu0 %3922, %v380
      %v3924 = vpop.permute.xlu0 %3923
      %3926 = vset.pattern.permute.xlu0 3
      %3927 = vperm.xlu0 %3926, %v381
      %v3928 = vpop.permute.xlu0 %3927
      %3930 = vset.pattern.permute.xlu0 3
      %3931 = vperm.xlu0 %3930, %v382
      %v3932 = vpop.permute.xlu0 %3931
      %3934 = vset.pattern.permute.xlu0 3
      %3935 = vperm.xlu0 %3934, %v383
      %v3936 = vpop.permute.xlu0 %3935
      %3938 = vset.pattern.permute.xlu0 3
      %3939 = vperm.xlu0 %3938, %v384
      %v3940 = vpop.permute.xlu0 %3939
      %3942 = vset.pattern.permute.xlu0 3
      %3943 = vperm.xlu0 %3942, %v385
      %v3944 = vpop.permute.xlu0 %3943
      %3946 = vset.pattern.permute.xlu0 3
      %3947 = vperm.xlu0 %3946, %v386
      %v3948 = vpop.permute.xlu0 %3947
      %3950 = vset.pattern.permute.xlu0 3
      %3951 = vperm.xlu0 %3950, %v387
      %v3952 = vpop.permute.xlu0 %3951
      %3954 = vset.pattern.permute.xlu0 3
      %3955 = vperm.xlu0 %3954, %v388
      %v3956 = vpop.permute.xlu0 %3955
      %3958 = vset.pattern.permute.xlu0 3
      %3959 = vperm.xlu0 %3958, %v389
      %v3960 = vpop.permute.xlu0 %3959
      %3962 = vset.pattern.permute.xlu0 3
      %3963 = vperm.xlu0 %3962, %v390
      %v3964 = vpop.permute.xlu0 %3963
      %3966 = vset.pattern.permute.xlu0 3
      %3967 = vperm.xlu0 %3966, %v391
      %v3968 = vpop.permute.xlu0 %3967
      %3970 = vset.pattern.permute.xlu0 3
      %3971 = vperm.xlu0 %3970, %v392
      %v3972 = vpop.permute.xlu0 %3971
      %3974 = vset.pattern.permute.xlu0 3
      %3975 = vperm.xlu0 %3974, %v393
      %v3976 = vpop.permute.xlu0 %3975
      %3978 = vset.pattern.permute.xlu0 3
      %3979 = vperm.xlu0 %3978, %v394
      %v3980 = vpop.permute.xlu0 %3979
      %3982 = vset.pattern.permute.xlu0 3
      %3983 = vperm.xlu0 %3982, %v395
      %v3984 = vpop.permute.xlu0 %3983
      %3986 = vset.pattern.permute.xlu0 3
      %3987 = vperm.xlu0 %3986, %v396
      %v3988 = vpop.permute.xlu0 %3987
      %3990 = vset.pattern.permute.xlu0 3
      %3991 = vperm.xlu0 %3990, %v397
      %v3992 = vpop.permute.xlu0 %3991
      %3994 = vset.pattern.permute.xlu0 3
      %3995 = vperm.xlu0 %3994, %v398
      %v3996 = vpop.permute.xlu0 %3995
      %3998 = vset.pattern.permute.xlu0 3
      %3999 = vperm.xlu0 %3998, %v399
      %v4000 = vpop.permute.xlu0 %3999
      %4002 = vset.pattern.permute.xlu0 3
      %4003 = vperm.xlu0 %4002, %v400
      %v4004 = vpop.permute.xlu0 %4003
      %4006 = vset.pattern.permute.xlu0 3
      %4007 = vperm.xlu0 %4006, %v401
      %v4008 = vpop.permute.xlu0 %4007
      %4010 = vset.pattern.permute.xlu0 3
      %4011 = vperm.xlu0 %4010, %v402
      %v4012 = vpop.permute.xlu0 %4011
      %4014 = vset.pattern.permute.xlu0 3
      %4015 = vperm.xlu0 %4014, %v403
      %v4016 = vpop.permute.xlu0 %4015
      %4018 = vset.pattern.permute.xlu0 3
      %4019 = vperm.xlu0 %4018, %v404
      %v4020 = vpop.permute.xlu0 %4019
      %4022 = vset.pattern.permute.xlu0 3
      %4023 = vperm.xlu0 %4022, %v405
      %v4024 = vpop.permute.xlu0 %4023
      %4026 = vset.pattern.permute.xlu0 3
      %4027 = vperm.xlu0 %4026, %v406
      %v4028 = vpop.permute.xlu0 %4027
      %4030 = vset.pattern.permute.xlu0 3
      %4031 = vperm.xlu0 %4030, %v407
      %v4032 = vpop.permute.xlu0 %4031
      %4034 = vset.pattern.permute.xlu0 3
      %4035 = vperm.xlu0 %4034, %v408
      %v4036 = vpop.permute.xlu0 %4035
      %4038 = vset.pattern.permute.xlu0 3
      %4039 = vperm.xlu0 %4038, %v409
      %v4040 = vpop.permute.xlu0 %4039
      %4042 = vset.pattern.permute.xlu0 3
      %4043 = vperm.xlu0 %4042, %v410
      %v4044 = vpop.permute.xlu0 %4043
      %4046 = vset.pattern.permute.xlu0 3
      %4047 = vperm.xlu0 %4046, %v411
      %v4048 = vpop.permute.xlu0 %4047
      %4050 = vset.pattern.permute.xlu0 3
      %4051 = vperm.xlu0 %4050, %v412
      %v4052 = vpop.permute.xlu0 %4051
      %4054 = vset.pattern.permute.xlu0 3
      %4055 = vperm.xlu0 %4054, %v413
      %v4056 = vpop.permute.xlu0 %4055
      %4058 = vset.pattern.permute.xlu0 3
      %4059 = vperm.xlu0 %4058, %v414
      %v4060 = vpop.permute.xlu0 %4059
      %4062 = vset.pattern.permute.xlu0 3
      %4063 = vperm.xlu0 %4062, %v415
      %v4064 = vpop.permute.xlu0 %4063
      %4066 = vset.pattern.permute.xlu0 3
      %4067 = vperm.xlu0 %4066, %v416
      %v4068 = vpop.permute.xlu0 %4067
      %4070 = vset.pattern.permute.xlu0 3
      %4071 = vperm.xlu0 %4070, %v417
      %v4072 = vpop.permute.xlu0 %4071
      %4074 = vset.pattern.permute.xlu0 3
      %4075 = vperm.xlu0 %4074, %v418
      %v4076 = vpop.permute.xlu0 %4075
      %4078 = vset.pattern.permute.xlu0 3
      %4079 = vperm.xlu0 %4078, %v419
      %v4080 = vpop.permute.xlu0 %4079
      %4082 = vset.pattern.permute.xlu0 3
      %4083 = vperm.xlu0 %4082, %v420
      %v4084 = vpop.permute.xlu0 %4083
      %4086 = vset.pattern.permute.xlu0 3
      %4087 = vperm.xlu0 %4086, %v421
      %v4088 = vpop.permute.xlu0 %4087
      %4090 = vset.pattern.permute.xlu0 3
      %4091 = vperm.xlu0 %4090, %v422
      %v4092 = vpop.permute.xlu0 %4091
      %4094 = vset.pattern.permute.xlu0 3
      %4095 = vperm.xlu0 %4094, %v423
      %v4096 = vpop.permute.xlu0 %4095
      %4098 = vset.pattern.permute.xlu0 3
      %4099 = vperm.xlu0 %4098, %v424
      %v4100 = vpop.permute.xlu0 %4099
      %4102 = vset.pattern.permute.xlu0 3
      %4103 = vperm.xlu0 %4102, %v425
      %v4104 = vpop.permute.xlu0 %4103
      %4106 = vset.pattern.permute.xlu0 3
      %4107 = vperm.xlu0 %4106, %v426
      %v4108 = vpop.permute.xlu0 %4107
      %4110 = vset.pattern.permute.xlu0 3
      %4111 = vperm.xlu0 %4110, %v427
      %v4112 = vpop.permute.xlu0 %4111
      %4114 = vset.pattern.permute.xlu0 3
      %4115 = vperm.xlu0 %4114, %v428
      %v4116 = vpop.permute.xlu0 %4115
      %4118 = vset.pattern.permute.xlu0 3
      %4119 = vperm.xlu0 %4118, %v429
      %v4120 = vpop.permute.xlu0 %4119
      %4122 = vset.pattern.permute.xlu0 3
      %4123 = vperm.xlu0 %4122, %v430
      %v4124 = vpop.permute.xlu0 %4123
      %4126 = vset.pattern.permute.xlu0 3
      %4127 = vperm.xlu0 %4126, %v431
      %v4128 = vpop.permute.xlu0 %4127
      %4130 = vset.pattern.permute.xlu0 3
      %4131 = vperm.xlu0 %4130, %v432
      %v4132 = vpop.permute.xlu0 %4131
      %4134 = vset.pattern.permute.xlu0 3
      %4135 = vperm.xlu0 %4134, %v433
      %v4136 = vpop.permute.xlu0 %4135
      %4138 = vset.pattern.permute.xlu0 3
      %4139 = vperm.xlu0 %4138, %v434
      %v4140 = vpop.permute.xlu0 %4139
      %4142 = vset.pattern.permute.xlu0 3
      %4143 = vperm.xlu0 %4142, %v435
      %v4144 = vpop.permute.xlu0 %4143
      %4146 = vset.pattern.permute.xlu0 3
      %4147 = vperm.xlu0 %4146, %v436
      %v4148 = vpop.permute.xlu0 %4147
      %4150 = vset.pattern.permute.xlu0 3
      %4151 = vperm.xlu0 %4150, %v437
      %v4152 = vpop.permute.xlu0 %4151
      %4154 = vset.pattern.permute.xlu0 3
      %4155 = vperm.xlu0 %4154, %v438
      %v4156 = vpop.permute.xlu0 %4155
      %4158 = vset.pattern.permute.xlu0 3
      %4159 = vperm.xlu0 %4158, %v439
      %v4160 = vpop.permute.xlu0 %4159
      %4162 = vset.pattern.permute.xlu0 3
      %4163 = vperm.xlu0 %4162, %v440
      %v4164 = vpop.permute.xlu0 %4163
      %4166 = vset.pattern.permute.xlu0 3
      %4167 = vperm.xlu0 %4166, %v441
      %v4168 = vpop.permute.xlu0 %4167
      %4170 = vset.pattern.permute.xlu0 3
      %4171 = vperm.xlu0 %4170, %v442
      %v4172 = vpop.permute.xlu0 %4171
      %4174 = vset.pattern.permute.xlu0 3
      %4175 = vperm.xlu0 %4174, %v443
      %v4176 = vpop.permute.xlu0 %4175
      %4178 = vset.pattern.permute.xlu0 3
      %4179 = vperm.xlu0 %4178, %v444
      %v4180 = vpop.permute.xlu0 %4179
      %4182 = vset.pattern.permute.xlu0 3
      %4183 = vperm.xlu0 %4182, %v445
      %v4184 = vpop.permute.xlu0 %4183
      %4186 = vset.pattern.permute.xlu0 3
      %4187 = vperm.xlu0 %4186, %v446
      %v4188 = vpop.permute.xlu0 %4187
      %4190 = vset.pattern.permute.xlu0 3
      %4191 = vperm.xlu0 %4190, %v447
      %v4192 = vpop.permute.xlu0 %4191
      %4194 = vset.pattern.permute.xlu0 3
      %4195 = vperm.xlu0 %4194, %v448
      %v4196 = vpop.permute.xlu0 %4195
      %4198 = vset.pattern.permute.xlu0 3
      %4199 = vperm.xlu0 %4198, %v449
      %v4200 = vpop.permute.xlu0 %4199
      %4202 = vset.pattern.permute.xlu0 3
      %4203 = vperm.xlu0 %4202, %v450
      %v4204 = vpop.permute.xlu0 %4203
      %4206 = vset.pattern.permute.xlu0 3
      %4207 = vperm.xlu0 %4206, %v451
      %v4208 = vpop.permute.xlu0 %4207
      %4210 = vset.pattern.permute.xlu0 3
      %4211 = vperm.xlu0 %4210, %v452
      %v4212 = vpop.permute.xlu0 %4211
      %4214 = vset.pattern.permute.xlu0 3
      %4215 = vperm.xlu0 %4214, %v453
      %v4216 = vpop.permute.xlu0 %4215
      %4218 = vset.pattern.permute.xlu0 3
      %4219 = vperm.xlu0 %4218, %v454
      %v4220 = vpop.permute.xlu0 %4219
      %4222 = vset.pattern.permute.xlu0 3
      %4223 = vperm.xlu0 %4222, %v455
      %v4224 = vpop.permute.xlu0 %4223
      %4226 = vset.pattern.permute.xlu0 3
      %4227 = vperm.xlu0 %4226, %v456
      %v4228 = vpop.permute.xlu0 %4227
      %4230 = vset.pattern.permute.xlu0 3
      %4231 = vperm.xlu0 %4230, %v457
      %v4232 = vpop.permute.xlu0 %4231
      %4234 = vset.pattern.permute.xlu0 3
      %4235 = vperm.xlu0 %4234, %v458
      %v4236 = vpop.permute.xlu0 %4235
      %4238 = vset.pattern.permute.xlu0 3
      %4239 = vperm.xlu0 %4238, %v459
      %v4240 = vpop.permute.xlu0 %4239
      %4242 = vset.pattern.permute.xlu0 3
      %4243 = vperm.xlu0 %4242, %v460
      %v4244 = vpop.permute.xlu0 %4243
      %4246 = vset.pattern.permute.xlu0 3
      %4247 = vperm.xlu0 %4246, %v461
      %v4248 = vpop.permute.xlu0 %4247
      %4250 = vset.pattern.permute.xlu0 3
      %4251 = vperm.xlu0 %4250, %v462
      %v4252 = vpop.permute.xlu0 %4251
      %4254 = vset.pattern.permute.xlu0 3
      %4255 = vperm.xlu0 %4254, %v463
      %v4256 = vpop.permute.xlu0 %4255
      %4258 = vset.pattern.permute.xlu0 3
      %4259 = vperm.xlu0 %4258, %v464
      %v4260 = vpop.permute.xlu0 %4259
      %4262 = vset.pattern.permute.xlu0 3
      %4263 = vperm.xlu0 %4262, %v465
      %v4264 = vpop.permute.xlu0 %4263
      %4266 = vset.pattern.permute.xlu0 3
      %4267 = vperm.xlu0 %4266, %v466
      %v4268 = vpop.permute.xlu0 %4267
      %4270 = vset.pattern.permute.xlu0 3
      %4271 = vperm.xlu0 %4270, %v467
      %v4272 = vpop.permute.xlu0 %4271
      %4274 = vset.pattern.permute.xlu0 3
      %4275 = vperm.xlu0 %4274, %v468
      %v4276 = vpop.permute.xlu0 %4275
      %4278 = vset.pattern.permute.xlu0 3
      %4279 = vperm.xlu0 %4278, %v469
      %v4280 = vpop.permute.xlu0 %4279
      %4282 = vset.pattern.permute.xlu0 3
      %4283 = vperm.xlu0 %4282, %v470
      %v4284 = vpop.permute.xlu0 %4283
      %4286 = vset.pattern.permute.xlu0 3
      %4287 = vperm.xlu0 %4286, %v471
      %v4288 = vpop.permute.xlu0 %4287
      %4290 = vset.pattern.permute.xlu0 3
      %4291 = vperm.xlu0 %4290, %v472
      %v4292 = vpop.permute.xlu0 %4291
      %4294 = vset.pattern.permute.xlu0 3
      %4295 = vperm.xlu0 %4294, %v473
      %v4296 = vpop.permute.xlu0 %4295
      %4298 = vset.pattern.permute.xlu0 3
      %4299 = vperm.xlu0 %4298, %v474
      %v4300 = vpop.permute.xlu0 %4299
      %4302 = vset.pattern.permute.xlu0 3
      %4303 = vperm.xlu0 %4302, %v475
      %v4304 = vpop.permute.xlu0 %4303
      %4306 = vset.pattern.permute.xlu0 3
      %4307 = vperm.xlu0 %4306, %v476
      %v4308 = vpop.permute.xlu0 %4307
      %4310 = vset.pattern.permute.xlu0 3
      %4311 = vperm.xlu0 %4310, %v477
      %v4312 = vpop.permute.xlu0 %4311
      %4314 = vset.pattern.permute.xlu0 3
      %4315 = vperm.xlu0 %4314, %v478
      %v4316 = vpop.permute.xlu0 %4315
      %4318 = vset.pattern.permute.xlu0 3
      %4319 = vperm.xlu0 %4318, %v479
      %v4320 = vpop.permute.xlu0 %4319
      %4322 = vset.pattern.permute.xlu0 3
      %4323 = vperm.xlu0 %4322, %v480
      %v4324 = vpop.permute.xlu0 %4323
      %4326 = vset.pattern.permute.xlu0 3
      %4327 = vperm.xlu0 %4326, %v481
      %v4328 = vpop.permute.xlu0 %4327
      %4330 = vset.pattern.permute.xlu0 3
      %4331 = vperm.xlu0 %4330, %v482
      %v4332 = vpop.permute.xlu0 %4331
      %4334 = vset.pattern.permute.xlu0 3
      %4335 = vperm.xlu0 %4334, %v483
      %v4336 = vpop.permute.xlu0 %4335
      %4338 = vset.pattern.permute.xlu0 3
      %4339 = vperm.xlu0 %4338, %v484
      %v4340 = vpop.permute.xlu0 %4339
      %4342 = vset.pattern.permute.xlu0 3
      %4343 = vperm.xlu0 %4342, %v485
      %v4344 = vpop.permute.xlu0 %4343
      %4346 = vset.pattern.permute.xlu0 3
      %4347 = vperm.xlu0 %4346, %v486
      %v4348 = vpop.permute.xlu0 %4347
      %4350 = vset.pattern.permute.xlu0 3
      %4351 = vperm.xlu0 %4350, %v487
      %v4352 = vpop.permute.xlu0 %4351
      %4354 = vset.pattern.permute.xlu0 3
      %4355 = vperm.xlu0 %4354, %v488
      %v4356 = vpop.permute.xlu0 %4355
      %4358 = vset.pattern.permute.xlu0 3
      %4359 = vperm.xlu0 %4358, %v489
      %v4360 = vpop.permute.xlu0 %4359
      %4362 = vset.pattern.permute.xlu0 3
      %4363 = vperm.xlu0 %4362, %v490
      %v4364 = vpop.permute.xlu0 %4363
      %4366 = vset.pattern.permute.xlu0 3
      %4367 = vperm.xlu0 %4366, %v491
      %v4368 = vpop.permute.xlu0 %4367
      %4370 = vset.pattern.permute.xlu0 3
      %4371 = vperm.xlu0 %4370, %v492
      %v4372 = vpop.permute.xlu0 %4371
      %4374 = vset.pattern.permute.xlu0 3
      %4375 = vperm.xlu0 %4374, %v493
      %v4376 = vpop.permute.xlu0 %4375
      %4378 = vset.pattern.permute.xlu0 3
      %4379 = vperm.xlu0 %4378, %v494
      %v4380 = vpop.permute.xlu0 %4379
      %4382 = vset.pattern.permute.xlu0 3
      %4383 = vperm.xlu0 %4382, %v495
      %v4384 = vpop.permute.xlu0 %4383
      %4386 = vset.pattern.permute.xlu0 3
      %4387 = vperm.xlu0 %4386, %v496
      %v4388 = vpop.permute.xlu0 %4387
      %4390 = vset.pattern.permute.xlu0 3
      %4391 = vperm.xlu0 %4390, %v497
      %v4392 = vpop.permute.xlu0 %4391
      %4394 = vset.pattern.permute.xlu0 3
      %4395 = vperm.xlu0 %4394, %v498
      %v4396 = vpop.permute.xlu0 %4395
      %4398 = vset.pattern.permute.xlu0 3
      %4399 = vperm.xlu0 %4398, %v499
      %v4400 = vpop.permute.xlu0 %4399
      %4402 = vset.pattern.permute.xlu0 3
      %4403 = vperm.xlu0 %4402, %v500
      %v4404 = vpop.permute.xlu0 %4403
      %4406 = vset.pattern.permute.xlu0 3
      %4407 = vperm.xlu0 %4406, %v501
      %v4408 = vpop.permute.xlu0 %4407
      %4410 = vset.pattern.permute.xlu0 3
      %4411 = vperm.xlu0 %4410, %v502
      %v4412 = vpop.permute.xlu0 %4411
      %4414 = vset.pattern.permute.xlu0 3
      %4415 = vperm.xlu0 %4414, %v503
      %v4416 = vpop.permute.xlu0 %4415
      %4418 = vset.pattern.permute.xlu0 3
      %4419 = vperm.xlu0 %4418, %v504
      %v4420 = vpop.permute.xlu0 %4419
      %4422 = vset.pattern.permute.xlu0 3
      %4423 = vperm.xlu0 %4422, %v505
      %v4424 = vpop.permute.xlu0 %4423
      %4426 = vset.pattern.permute.xlu0 3
      %4427 = vperm.xlu0 %4426, %v506
      %v4428 = vpop.permute.xlu0 %4427
      %v4430 = vlaneseq
      %v4431 = vshrl.u32 %v4430, 7
      %v4432 = vsub.s32 3, %v4431
      %v4433 = vrot.slane %v507, %v4432
      %v4434 = vmul.f32 %v3920, %v4433
      %v4435 = vmul.f32 %v3924, %v4433
      %v4436 = vmul.f32 %v3928, %v4433
      %v4437 = vmul.f32 %v3932, %v4433
      %v4438 = vmul.f32 %v3936, %v4433
      %v4439 = vmul.f32 %v3940, %v4433
      %v4440 = vmul.f32 %v3944, %v4433
      %v4441 = vmul.f32 %v3948, %v4433
      %v4442 = vmul.f32 %v3952, %v4433
      %v4443 = vmul.f32 %v3956, %v4433
      %v4444 = vmul.f32 %v3960, %v4433
      %v4445 = vmul.f32 %v3964, %v4433
      %v4446 = vmul.f32 %v3968, %v4433
      %v4447 = vmul.f32 %v3972, %v4433
      %v4448 = vmul.f32 %v3976, %v4433
      %v4449 = vmul.f32 %v3980, %v4433
      %v4450 = vmul.f32 %v3984, %v4433
      %v4451 = vmul.f32 %v3988, %v4433
      %v4452 = vmul.f32 %v3992, %v4433
      %v4453 = vmul.f32 %v3996, %v4433
      %v4454 = vmul.f32 %v4000, %v4433
      %v4455 = vmul.f32 %v4004, %v4433
      %v4456 = vmul.f32 %v4008, %v4433
      %v4457 = vmul.f32 %v4012, %v4433
      %v4458 = vmul.f32 %v4016, %v4433
      %v4459 = vmul.f32 %v4020, %v4433
      %v4460 = vmul.f32 %v4024, %v4433
      %v4461 = vmul.f32 %v4028, %v4433
      %v4462 = vmul.f32 %v4032, %v4433
      %v4463 = vmul.f32 %v4036, %v4433
      %v4464 = vmul.f32 %v4040, %v4433
      %v4465 = vmul.f32 %v4044, %v4433
      %v4466 = vmul.f32 %v4048, %v4433
      %v4467 = vmul.f32 %v4052, %v4433
      %v4468 = vmul.f32 %v4056, %v4433
      %v4469 = vmul.f32 %v4060, %v4433
      %v4470 = vmul.f32 %v4064, %v4433
      %v4471 = vmul.f32 %v4068, %v4433
      %v4472 = vmul.f32 %v4072, %v4433
      %v4473 = vmul.f32 %v4076, %v4433
      %v4474 = vmul.f32 %v4080, %v4433
      %v4475 = vmul.f32 %v4084, %v4433
      %v4476 = vmul.f32 %v4088, %v4433
      %v4477 = vmul.f32 %v4092, %v4433
      %v4478 = vmul.f32 %v4096, %v4433
      %v4479 = vmul.f32 %v4100, %v4433
      %v4480 = vmul.f32 %v4104, %v4433
      %v4481 = vmul.f32 %v4108, %v4433
      %v4482 = vmul.f32 %v4112, %v4433
      %v4483 = vmul.f32 %v4116, %v4433
      %v4484 = vmul.f32 %v4120, %v4433
      %v4485 = vmul.f32 %v4124, %v4433
      %v4486 = vmul.f32 %v4128, %v4433
      %v4487 = vmul.f32 %v4132, %v4433
      %v4488 = vmul.f32 %v4136, %v4433
      %v4489 = vmul.f32 %v4140, %v4433
      %v4490 = vmul.f32 %v4144, %v4433
      %v4491 = vmul.f32 %v4148, %v4433
      %v4492 = vmul.f32 %v4152, %v4433
      %v4493 = vmul.f32 %v4156, %v4433
      %v4494 = vmul.f32 %v4160, %v4433
      %v4495 = vmul.f32 %v4164, %v4433
      %v4496 = vmul.f32 %v4168, %v4433
      %v4497 = vmul.f32 %v4172, %v4433
      %v4498 = vmul.f32 %v4176, %v4433
      %v4499 = vmul.f32 %v4180, %v4433
      %v4500 = vmul.f32 %v4184, %v4433
      %v4501 = vmul.f32 %v4188, %v4433
      %v4502 = vmul.f32 %v4192, %v4433
      %v4503 = vmul.f32 %v4196, %v4433
      %v4504 = vmul.f32 %v4200, %v4433
      %v4505 = vmul.f32 %v4204, %v4433
      %v4506 = vmul.f32 %v4208, %v4433
      %v4507 = vmul.f32 %v4212, %v4433
      %v4508 = vmul.f32 %v4216, %v4433
      %v4509 = vmul.f32 %v4220, %v4433
      %v4510 = vmul.f32 %v4224, %v4433
      %v4511 = vmul.f32 %v4228, %v4433
      %v4512 = vmul.f32 %v4232, %v4433
      %v4513 = vmul.f32 %v4236, %v4433
      %v4514 = vmul.f32 %v4240, %v4433
      %v4515 = vmul.f32 %v4244, %v4433
      %v4516 = vmul.f32 %v4248, %v4433
      %v4517 = vmul.f32 %v4252, %v4433
      %v4518 = vmul.f32 %v4256, %v4433
      %v4519 = vmul.f32 %v4260, %v4433
      %v4520 = vmul.f32 %v4264, %v4433
      %v4521 = vmul.f32 %v4268, %v4433
      %v4522 = vmul.f32 %v4272, %v4433
      %v4523 = vmul.f32 %v4276, %v4433
      %v4524 = vmul.f32 %v4280, %v4433
      %v4525 = vmul.f32 %v4284, %v4433
      %v4526 = vmul.f32 %v4288, %v4433
      %v4527 = vmul.f32 %v4292, %v4433
      %v4528 = vmul.f32 %v4296, %v4433
      %v4529 = vmul.f32 %v4300, %v4433
      %v4530 = vmul.f32 %v4304, %v4433
      %v4531 = vmul.f32 %v4308, %v4433
      %v4532 = vmul.f32 %v4312, %v4433
      %v4533 = vmul.f32 %v4316, %v4433
      %v4534 = vmul.f32 %v4320, %v4433
      %v4535 = vmul.f32 %v4324, %v4433
      %v4536 = vmul.f32 %v4328, %v4433
      %v4537 = vmul.f32 %v4332, %v4433
      %v4538 = vmul.f32 %v4336, %v4433
      %v4539 = vmul.f32 %v4340, %v4433
      %v4540 = vmul.f32 %v4344, %v4433
      %v4541 = vmul.f32 %v4348, %v4433
      %v4542 = vmul.f32 %v4352, %v4433
      %v4543 = vmul.f32 %v4356, %v4433
      %v4544 = vmul.f32 %v4360, %v4433
      %v4545 = vmul.f32 %v4364, %v4433
      %v4546 = vmul.f32 %v4368, %v4433
      %v4547 = vmul.f32 %v4372, %v4433
      %v4548 = vmul.f32 %v4376, %v4433
      %v4549 = vmul.f32 %v4380, %v4433
      %v4550 = vmul.f32 %v4384, %v4433
      %v4551 = vmul.f32 %v4388, %v4433
      %v4552 = vmul.f32 %v4392, %v4433
      %v4553 = vmul.f32 %v4396, %v4433
      %v4554 = vmul.f32 %v4400, %v4433
      %v4555 = vmul.f32 %v4404, %v4433
      %v4556 = vmul.f32 %v4408, %v4433
      %v4557 = vmul.f32 %v4412, %v4433
      %v4558 = vmul.f32 %v4416, %v4433
      %v4559 = vmul.f32 %v4420, %v4433
      %v4560 = vmul.f32 %v4424, %v4433
      %v4561 = vmul.f32 %v4428, %v4433
      %v4562 = vadd.f32 %v3790, %v4434
      %v4563 = vadd.f32 %v3791, %v4435
      %v4564 = vadd.f32 %v3792, %v4436
      %v4565 = vadd.f32 %v3793, %v4437
      %v4566 = vadd.f32 %v3794, %v4438
      %v4567 = vadd.f32 %v3795, %v4439
      %v4568 = vadd.f32 %v3796, %v4440
      %v4569 = vadd.f32 %v3797, %v4441
      %v4570 = vadd.f32 %v3798, %v4442
      %v4571 = vadd.f32 %v3799, %v4443
      %v4572 = vadd.f32 %v3800, %v4444
      %v4573 = vadd.f32 %v3801, %v4445
      %v4574 = vadd.f32 %v3802, %v4446
      %v4575 = vadd.f32 %v3803, %v4447
      %v4576 = vadd.f32 %v3804, %v4448
      %v4577 = vadd.f32 %v3805, %v4449
      %v4578 = vadd.f32 %v3806, %v4450
      %v4579 = vadd.f32 %v3807, %v4451
      %v4580 = vadd.f32 %v3808, %v4452
      %v4581 = vadd.f32 %v3809, %v4453
      %v4582 = vadd.f32 %v3810, %v4454
      %v4583 = vadd.f32 %v3811, %v4455
      %v4584 = vadd.f32 %v3812, %v4456
      %v4585 = vadd.f32 %v3813, %v4457
      %v4586 = vadd.f32 %v3814, %v4458
      %v4587 = vadd.f32 %v3815, %v4459
      %v4588 = vadd.f32 %v3816, %v4460
      %v4589 = vadd.f32 %v3817, %v4461
      %v4590 = vadd.f32 %v3818, %v4462
      %v4591 = vadd.f32 %v3819, %v4463
      %v4592 = vadd.f32 %v3820, %v4464
      %v4593 = vadd.f32 %v3821, %v4465
      %v4594 = vadd.f32 %v3822, %v4466
      %v4595 = vadd.f32 %v3823, %v4467
      %v4596 = vadd.f32 %v3824, %v4468
      %v4597 = vadd.f32 %v3825, %v4469
      %v4598 = vadd.f32 %v3826, %v4470
      %v4599 = vadd.f32 %v3827, %v4471
      %v4600 = vadd.f32 %v3828, %v4472
      %v4601 = vadd.f32 %v3829, %v4473
      %v4602 = vadd.f32 %v3830, %v4474
      %v4603 = vadd.f32 %v3831, %v4475
      %v4604 = vadd.f32 %v3832, %v4476
      %v4605 = vadd.f32 %v3833, %v4477
      %v4606 = vadd.f32 %v3834, %v4478
      %v4607 = vadd.f32 %v3835, %v4479
      %v4608 = vadd.f32 %v3836, %v4480
      %v4609 = vadd.f32 %v3837, %v4481
      %v4610 = vadd.f32 %v3838, %v4482
      %v4611 = vadd.f32 %v3839, %v4483
      %v4612 = vadd.f32 %v3840, %v4484
      %v4613 = vadd.f32 %v3841, %v4485
      %v4614 = vadd.f32 %v3842, %v4486
      %v4615 = vadd.f32 %v3843, %v4487
      %v4616 = vadd.f32 %v3844, %v4488
      %v4617 = vadd.f32 %v3845, %v4489
      %v4618 = vadd.f32 %v3846, %v4490
      %v4619 = vadd.f32 %v3847, %v4491
      %v4620 = vadd.f32 %v3848, %v4492
      %v4621 = vadd.f32 %v3849, %v4493
      %v4622 = vadd.f32 %v3850, %v4494
      %v4623 = vadd.f32 %v3851, %v4495
      %v4624 = vadd.f32 %v3852, %v4496
      %v4625 = vadd.f32 %v3853, %v4497
      %v4626 = vadd.f32 %v3854, %v4498
      %v4627 = vadd.f32 %v3855, %v4499
      %v4628 = vadd.f32 %v3856, %v4500
      %v4629 = vadd.f32 %v3857, %v4501
      %v4630 = vadd.f32 %v3858, %v4502
      %v4631 = vadd.f32 %v3859, %v4503
      %v4632 = vadd.f32 %v3860, %v4504
      %v4633 = vadd.f32 %v3861, %v4505
      %v4634 = vadd.f32 %v3862, %v4506
      %v4635 = vadd.f32 %v3863, %v4507
      %v4636 = vadd.f32 %v3864, %v4508
      %v4637 = vadd.f32 %v3865, %v4509
      %v4638 = vadd.f32 %v3866, %v4510
      %v4639 = vadd.f32 %v3867, %v4511
      %v4640 = vadd.f32 %v3868, %v4512
      %v4641 = vadd.f32 %v3869, %v4513
      %v4642 = vadd.f32 %v3870, %v4514
      %v4643 = vadd.f32 %v3871, %v4515
      %v4644 = vadd.f32 %v3872, %v4516
      %v4645 = vadd.f32 %v3873, %v4517
      %v4646 = vadd.f32 %v3874, %v4518
      %v4647 = vadd.f32 %v3875, %v4519
      %v4648 = vadd.f32 %v3876, %v4520
      %v4649 = vadd.f32 %v3877, %v4521
      %v4650 = vadd.f32 %v3878, %v4522
      %v4651 = vadd.f32 %v3879, %v4523
      %v4652 = vadd.f32 %v3880, %v4524
      %v4653 = vadd.f32 %v3881, %v4525
      %v4654 = vadd.f32 %v3882, %v4526
      %v4655 = vadd.f32 %v3883, %v4527
      %v4656 = vadd.f32 %v3884, %v4528
      %v4657 = vadd.f32 %v3885, %v4529
      %v4658 = vadd.f32 %v3886, %v4530
      %v4659 = vadd.f32 %v3887, %v4531
      %v4660 = vadd.f32 %v3888, %v4532
      %v4661 = vadd.f32 %v3889, %v4533
      %v4662 = vadd.f32 %v3890, %v4534
      %v4663 = vadd.f32 %v3891, %v4535
      %v4664 = vadd.f32 %v3892, %v4536
      %v4665 = vadd.f32 %v3893, %v4537
      %v4666 = vadd.f32 %v3894, %v4538
      %v4667 = vadd.f32 %v3895, %v4539
      %v4668 = vadd.f32 %v3896, %v4540
      %v4669 = vadd.f32 %v3897, %v4541
      %v4670 = vadd.f32 %v3898, %v4542
      %v4671 = vadd.f32 %v3899, %v4543
      %v4672 = vadd.f32 %v3900, %v4544
      %v4673 = vadd.f32 %v3901, %v4545
      %v4674 = vadd.f32 %v3902, %v4546
      %v4675 = vadd.f32 %v3903, %v4547
      %v4676 = vadd.f32 %v3904, %v4548
      %v4677 = vadd.f32 %v3905, %v4549
      %v4678 = vadd.f32 %v3906, %v4550
      %v4679 = vadd.f32 %v3907, %v4551
      %v4680 = vadd.f32 %v3908, %v4552
      %v4681 = vadd.f32 %v3909, %v4553
      %v4682 = vadd.f32 %v3910, %v4554
      %v4683 = vadd.f32 %v3911, %v4555
      %v4684 = vadd.f32 %v3912, %v4556
      %v4685 = vadd.f32 %v3913, %v4557
      %v4686 = vadd.f32 %v3914, %v4558
      %v4687 = vadd.f32 %v3915, %v4559
      %v4688 = vadd.f32 %v3916, %v4560
      %v4689 = vadd.f32 %v3917, %v4561
      %v4690 = vld [vmem:[%s4] sm:$0x1]
      %v4692 = vlaneseq
      %v4693 = vshrl.u32 %v4692, 7
      %v4694 = vsub.s32 0, %v4693
      %v4695 = vrot.slane %v4690, %v4694
      %v4697 = vadd.f32 %v4562, %v4695
      %v4698 = vadd.f32 %v4563, %v4695
      %v4699 = vadd.f32 %v4564, %v4695
      %v4700 = vadd.f32 %v4565, %v4695
      %v4701 = vadd.f32 %v4566, %v4695
      %v4702 = vadd.f32 %v4567, %v4695
      %v4703 = vadd.f32 %v4568, %v4695
      %v4704 = vadd.f32 %v4569, %v4695
      %v4705 = vadd.f32 %v4570, %v4695
      %v4706 = vadd.f32 %v4571, %v4695
      %v4707 = vadd.f32 %v4572, %v4695
      %v4708 = vadd.f32 %v4573, %v4695
      %v4709 = vadd.f32 %v4574, %v4695
      %v4710 = vadd.f32 %v4575, %v4695
      %v4711 = vadd.f32 %v4576, %v4695
      %v4712 = vadd.f32 %v4577, %v4695
      %v4713 = vadd.f32 %v4578, %v4695
      %v4714 = vadd.f32 %v4579, %v4695
      %v4715 = vadd.f32 %v4580, %v4695
      %v4716 = vadd.f32 %v4581, %v4695
      %v4717 = vadd.f32 %v4582, %v4695
      %v4718 = vadd.f32 %v4583, %v4695
      %v4719 = vadd.f32 %v4584, %v4695
      %v4720 = vadd.f32 %v4585, %v4695
      %v4721 = vadd.f32 %v4586, %v4695
      %v4722 = vadd.f32 %v4587, %v4695
      %v4723 = vadd.f32 %v4588, %v4695
      %v4724 = vadd.f32 %v4589, %v4695
      %v4725 = vadd.f32 %v4590, %v4695
      %v4726 = vadd.f32 %v4591, %v4695
      %v4727 = vadd.f32 %v4592, %v4695
      %v4728 = vadd.f32 %v4593, %v4695
      %v4729 = vadd.f32 %v4594, %v4695
      %v4730 = vadd.f32 %v4595, %v4695
      %v4731 = vadd.f32 %v4596, %v4695
      %v4732 = vadd.f32 %v4597, %v4695
      %v4733 = vadd.f32 %v4598, %v4695
      %v4734 = vadd.f32 %v4599, %v4695
      %v4735 = vadd.f32 %v4600, %v4695
      %v4736 = vadd.f32 %v4601, %v4695
      %v4737 = vadd.f32 %v4602, %v4695
      %v4738 = vadd.f32 %v4603, %v4695
      %v4739 = vadd.f32 %v4604, %v4695
      %v4740 = vadd.f32 %v4605, %v4695
      %v4741 = vadd.f32 %v4606, %v4695
      %v4742 = vadd.f32 %v4607, %v4695
      %v4743 = vadd.f32 %v4608, %v4695
      %v4744 = vadd.f32 %v4609, %v4695
      %v4745 = vadd.f32 %v4610, %v4695
      %v4746 = vadd.f32 %v4611, %v4695
      %v4747 = vadd.f32 %v4612, %v4695
      %v4748 = vadd.f32 %v4613, %v4695
      %v4749 = vadd.f32 %v4614, %v4695
      %v4750 = vadd.f32 %v4615, %v4695
      %v4751 = vadd.f32 %v4616, %v4695
      %v4752 = vadd.f32 %v4617, %v4695
      %v4753 = vadd.f32 %v4618, %v4695
      %v4754 = vadd.f32 %v4619, %v4695
      %v4755 = vadd.f32 %v4620, %v4695
      %v4756 = vadd.f32 %v4621, %v4695
      %v4757 = vadd.f32 %v4622, %v4695
      %v4758 = vadd.f32 %v4623, %v4695
      %v4759 = vadd.f32 %v4624, %v4695
      %v4760 = vadd.f32 %v4625, %v4695
      %v4761 = vadd.f32 %v4626, %v4695
      %v4762 = vadd.f32 %v4627, %v4695
      %v4763 = vadd.f32 %v4628, %v4695
      %v4764 = vadd.f32 %v4629, %v4695
      %v4765 = vadd.f32 %v4630, %v4695
      %v4766 = vadd.f32 %v4631, %v4695
      %v4767 = vadd.f32 %v4632, %v4695
      %v4768 = vadd.f32 %v4633, %v4695
      %v4769 = vadd.f32 %v4634, %v4695
      %v4770 = vadd.f32 %v4635, %v4695
      %v4771 = vadd.f32 %v4636, %v4695
      %v4772 = vadd.f32 %v4637, %v4695
      %v4773 = vadd.f32 %v4638, %v4695
      %v4774 = vadd.f32 %v4639, %v4695
      %v4775 = vadd.f32 %v4640, %v4695
      %v4776 = vadd.f32 %v4641, %v4695
      %v4777 = vadd.f32 %v4642, %v4695
      %v4778 = vadd.f32 %v4643, %v4695
      %v4779 = vadd.f32 %v4644, %v4695
      %v4780 = vadd.f32 %v4645, %v4695
      %v4781 = vadd.f32 %v4646, %v4695
      %v4782 = vadd.f32 %v4647, %v4695
      %v4783 = vadd.f32 %v4648, %v4695
      %v4784 = vadd.f32 %v4649, %v4695
      %v4785 = vadd.f32 %v4650, %v4695
      %v4786 = vadd.f32 %v4651, %v4695
      %v4787 = vadd.f32 %v4652, %v4695
      %v4788 = vadd.f32 %v4653, %v4695
      %v4789 = vadd.f32 %v4654, %v4695
      %v4790 = vadd.f32 %v4655, %v4695
      %v4791 = vadd.f32 %v4656, %v4695
      %v4792 = vadd.f32 %v4657, %v4695
      %v4793 = vadd.f32 %v4658, %v4695
      %v4794 = vadd.f32 %v4659, %v4695
      %v4795 = vadd.f32 %v4660, %v4695
      %v4796 = vadd.f32 %v4661, %v4695
      %v4797 = vadd.f32 %v4662, %v4695
      %v4798 = vadd.f32 %v4663, %v4695
      %v4799 = vadd.f32 %v4664, %v4695
      %v4800 = vadd.f32 %v4665, %v4695
      %v4801 = vadd.f32 %v4666, %v4695
      %v4802 = vadd.f32 %v4667, %v4695
      %v4803 = vadd.f32 %v4668, %v4695
      %v4804 = vadd.f32 %v4669, %v4695
      %v4805 = vadd.f32 %v4670, %v4695
      %v4806 = vadd.f32 %v4671, %v4695
      %v4807 = vadd.f32 %v4672, %v4695
      %v4808 = vadd.f32 %v4673, %v4695
      %v4809 = vadd.f32 %v4674, %v4695
      %v4810 = vadd.f32 %v4675, %v4695
      %v4811 = vadd.f32 %v4676, %v4695
      %v4812 = vadd.f32 %v4677, %v4695
      %v4813 = vadd.f32 %v4678, %v4695
      %v4814 = vadd.f32 %v4679, %v4695
      %v4815 = vadd.f32 %v4680, %v4695
      %v4816 = vadd.f32 %v4681, %v4695
      %v4817 = vadd.f32 %v4682, %v4695
      %v4818 = vadd.f32 %v4683, %v4695
      %v4819 = vadd.f32 %v4684, %v4695
      %v4820 = vadd.f32 %v4685, %v4695
      %v4821 = vadd.f32 %v4686, %v4695
      %v4822 = vadd.f32 %v4687, %v4695
      %v4823 = vadd.f32 %v4688, %v4695
      %v4824 = vadd.f32 %v4689, %v4695
      %vm4825 = vcmp.gt.f32.partialorder %v4697, 0.0
      %vm4826 = vcmp.gt.f32.partialorder %v4698, 0.0
      %vm4827 = vcmp.gt.f32.partialorder %v4699, 0.0
      %vm4828 = vcmp.gt.f32.partialorder %v4700, 0.0
      %vm4829 = vcmp.gt.f32.partialorder %v4701, 0.0
      %vm4830 = vcmp.gt.f32.partialorder %v4702, 0.0
      %vm4831 = vcmp.gt.f32.partialorder %v4703, 0.0
      %vm4832 = vcmp.gt.f32.partialorder %v4704, 0.0
      %vm4833 = vcmp.gt.f32.partialorder %v4705, 0.0
      %vm4834 = vcmp.gt.f32.partialorder %v4706, 0.0
      %vm4835 = vcmp.gt.f32.partialorder %v4707, 0.0
      %vm4836 = vcmp.gt.f32.partialorder %v4708, 0.0
      %vm4837 = vcmp.gt.f32.partialorder %v4709, 0.0
      %vm4838 = vcmp.gt.f32.partialorder %v4710, 0.0
      %vm4839 = vcmp.gt.f32.partialorder %v4711, 0.0
      %vm4840 = vcmp.gt.f32.partialorder %v4712, 0.0
      %vm4841 = vcmp.gt.f32.partialorder %v4713, 0.0
      %vm4842 = vcmp.gt.f32.partialorder %v4714, 0.0
      %vm4843 = vcmp.gt.f32.partialorder %v4715, 0.0
      %vm4844 = vcmp.gt.f32.partialorder %v4716, 0.0
      %vm4845 = vcmp.gt.f32.partialorder %v4717, 0.0
      %vm4846 = vcmp.gt.f32.partialorder %v4718, 0.0
      %vm4847 = vcmp.gt.f32.partialorder %v4719, 0.0
      %vm4848 = vcmp.gt.f32.partialorder %v4720, 0.0
      %vm4849 = vcmp.gt.f32.partialorder %v4721, 0.0
      %vm4850 = vcmp.gt.f32.partialorder %v4722, 0.0
      %vm4851 = vcmp.gt.f32.partialorder %v4723, 0.0
      %vm4852 = vcmp.gt.f32.partialorder %v4724, 0.0
      %vm4853 = vcmp.gt.f32.partialorder %v4725, 0.0
      %vm4854 = vcmp.gt.f32.partialorder %v4726, 0.0
      %vm4855 = vcmp.gt.f32.partialorder %v4727, 0.0
      %vm4856 = vcmp.gt.f32.partialorder %v4728, 0.0
      %vm4857 = vcmp.gt.f32.partialorder %v4729, 0.0
      %vm4858 = vcmp.gt.f32.partialorder %v4730, 0.0
      %vm4859 = vcmp.gt.f32.partialorder %v4731, 0.0
      %vm4860 = vcmp.gt.f32.partialorder %v4732, 0.0
      %vm4861 = vcmp.gt.f32.partialorder %v4733, 0.0
      %vm4862 = vcmp.gt.f32.partialorder %v4734, 0.0
      %vm4863 = vcmp.gt.f32.partialorder %v4735, 0.0
      %vm4864 = vcmp.gt.f32.partialorder %v4736, 0.0
      %vm4865 = vcmp.gt.f32.partialorder %v4737, 0.0
      %vm4866 = vcmp.gt.f32.partialorder %v4738, 0.0
      %vm4867 = vcmp.gt.f32.partialorder %v4739, 0.0
      %vm4868 = vcmp.gt.f32.partialorder %v4740, 0.0
      %vm4869 = vcmp.gt.f32.partialorder %v4741, 0.0
      %vm4870 = vcmp.gt.f32.partialorder %v4742, 0.0
      %vm4871 = vcmp.gt.f32.partialorder %v4743, 0.0
      %vm4872 = vcmp.gt.f32.partialorder %v4744, 0.0
      %vm4873 = vcmp.gt.f32.partialorder %v4745, 0.0
      %vm4874 = vcmp.gt.f32.partialorder %v4746, 0.0
      %vm4875 = vcmp.gt.f32.partialorder %v4747, 0.0
      %vm4876 = vcmp.gt.f32.partialorder %v4748, 0.0
      %vm4877 = vcmp.gt.f32.partialorder %v4749, 0.0
      %vm4878 = vcmp.gt.f32.partialorder %v4750, 0.0
      %vm4879 = vcmp.gt.f32.partialorder %v4751, 0.0
      %vm4880 = vcmp.gt.f32.partialorder %v4752, 0.0
      %vm4881 = vcmp.gt.f32.partialorder %v4753, 0.0
      %vm4882 = vcmp.gt.f32.partialorder %v4754, 0.0
      %vm4883 = vcmp.gt.f32.partialorder %v4755, 0.0
      %vm4884 = vcmp.gt.f32.partialorder %v4756, 0.0
      %vm4885 = vcmp.gt.f32.partialorder %v4757, 0.0
      %vm4886 = vcmp.gt.f32.partialorder %v4758, 0.0
      %vm4887 = vcmp.gt.f32.partialorder %v4759, 0.0
      %vm4888 = vcmp.gt.f32.partialorder %v4760, 0.0
      %vm4889 = vcmp.gt.f32.partialorder %v4761, 0.0
      %vm4890 = vcmp.gt.f32.partialorder %v4762, 0.0
      %vm4891 = vcmp.gt.f32.partialorder %v4763, 0.0
      %vm4892 = vcmp.gt.f32.partialorder %v4764, 0.0
      %vm4893 = vcmp.gt.f32.partialorder %v4765, 0.0
      %vm4894 = vcmp.gt.f32.partialorder %v4766, 0.0
      %vm4895 = vcmp.gt.f32.partialorder %v4767, 0.0
      %vm4896 = vcmp.gt.f32.partialorder %v4768, 0.0
      %vm4897 = vcmp.gt.f32.partialorder %v4769, 0.0
      %vm4898 = vcmp.gt.f32.partialorder %v4770, 0.0
      %vm4899 = vcmp.gt.f32.partialorder %v4771, 0.0
      %vm4900 = vcmp.gt.f32.partialorder %v4772, 0.0
      %vm4901 = vcmp.gt.f32.partialorder %v4773, 0.0
      %vm4902 = vcmp.gt.f32.partialorder %v4774, 0.0
      %vm4903 = vcmp.gt.f32.partialorder %v4775, 0.0
      %vm4904 = vcmp.gt.f32.partialorder %v4776, 0.0
      %vm4905 = vcmp.gt.f32.partialorder %v4777, 0.0
      %vm4906 = vcmp.gt.f32.partialorder %v4778, 0.0
      %vm4907 = vcmp.gt.f32.partialorder %v4779, 0.0
      %vm4908 = vcmp.gt.f32.partialorder %v4780, 0.0
      %vm4909 = vcmp.gt.f32.partialorder %v4781, 0.0
      %vm4910 = vcmp.gt.f32.partialorder %v4782, 0.0
      %vm4911 = vcmp.gt.f32.partialorder %v4783, 0.0
      %vm4912 = vcmp.gt.f32.partialorder %v4784, 0.0
      %vm4913 = vcmp.gt.f32.partialorder %v4785, 0.0
      %vm4914 = vcmp.gt.f32.partialorder %v4786, 0.0
      %vm4915 = vcmp.gt.f32.partialorder %v4787, 0.0
      %vm4916 = vcmp.gt.f32.partialorder %v4788, 0.0
      %vm4917 = vcmp.gt.f32.partialorder %v4789, 0.0
      %vm4918 = vcmp.gt.f32.partialorder %v4790, 0.0
      %vm4919 = vcmp.gt.f32.partialorder %v4791, 0.0
      %vm4920 = vcmp.gt.f32.partialorder %v4792, 0.0
      %vm4921 = vcmp.gt.f32.partialorder %v4793, 0.0
      %vm4922 = vcmp.gt.f32.partialorder %v4794, 0.0
      %vm4923 = vcmp.gt.f32.partialorder %v4795, 0.0
      %vm4924 = vcmp.gt.f32.partialorder %v4796, 0.0
      %vm4925 = vcmp.gt.f32.partialorder %v4797, 0.0
      %vm4926 = vcmp.gt.f32.partialorder %v4798, 0.0
      %vm4927 = vcmp.gt.f32.partialorder %v4799, 0.0
      %vm4928 = vcmp.gt.f32.partialorder %v4800, 0.0
      %vm4929 = vcmp.gt.f32.partialorder %v4801, 0.0
      %vm4930 = vcmp.gt.f32.partialorder %v4802, 0.0
      %vm4931 = vcmp.gt.f32.partialorder %v4803, 0.0
      %vm4932 = vcmp.gt.f32.partialorder %v4804, 0.0
      %vm4933 = vcmp.gt.f32.partialorder %v4805, 0.0
      %vm4934 = vcmp.gt.f32.partialorder %v4806, 0.0
      %vm4935 = vcmp.gt.f32.partialorder %v4807, 0.0
      %vm4936 = vcmp.gt.f32.partialorder %v4808, 0.0
      %vm4937 = vcmp.gt.f32.partialorder %v4809, 0.0
      %vm4938 = vcmp.gt.f32.partialorder %v4810, 0.0
      %vm4939 = vcmp.gt.f32.partialorder %v4811, 0.0
      %vm4940 = vcmp.gt.f32.partialorder %v4812, 0.0
      %vm4941 = vcmp.gt.f32.partialorder %v4813, 0.0
      %vm4942 = vcmp.gt.f32.partialorder %v4814, 0.0
      %vm4943 = vcmp.gt.f32.partialorder %v4815, 0.0
      %vm4944 = vcmp.gt.f32.partialorder %v4816, 0.0
      %vm4945 = vcmp.gt.f32.partialorder %v4817, 0.0
      %vm4946 = vcmp.gt.f32.partialorder %v4818, 0.0
      %vm4947 = vcmp.gt.f32.partialorder %v4819, 0.0
      %vm4948 = vcmp.gt.f32.partialorder %v4820, 0.0
      %vm4949 = vcmp.gt.f32.partialorder %v4821, 0.0
      %vm4950 = vcmp.gt.f32.partialorder %v4822, 0.0
      %vm4951 = vcmp.gt.f32.partialorder %v4823, 0.0
      %vm4952 = vcmp.gt.f32.partialorder %v4824, 0.0
      %v4953 = vmul.f32 %v4697, 0.2
      %v4954 = vmul.f32 %v4698, 0.2
      %v4955 = vmul.f32 %v4699, 0.2
      %v4956 = vmul.f32 %v4700, 0.2
      %v4957 = vmul.f32 %v4701, 0.2
      %v4958 = vmul.f32 %v4702, 0.2
      %v4959 = vmul.f32 %v4703, 0.2
      %v4960 = vmul.f32 %v4704, 0.2
      %v4961 = vmul.f32 %v4705, 0.2
      %v4962 = vmul.f32 %v4706, 0.2
      %v4963 = vmul.f32 %v4707, 0.2
      %v4964 = vmul.f32 %v4708, 0.2
      %v4965 = vmul.f32 %v4709, 0.2
      %v4966 = vmul.f32 %v4710, 0.2
      %v4967 = vmul.f32 %v4711, 0.2
      %v4968 = vmul.f32 %v4712, 0.2
      %v4969 = vmul.f32 %v4713, 0.2
      %v4970 = vmul.f32 %v4714, 0.2
      %v4971 = vmul.f32 %v4715, 0.2
      %v4972 = vmul.f32 %v4716, 0.2
      %v4973 = vmul.f32 %v4717, 0.2
      %v4974 = vmul.f32 %v4718, 0.2
      %v4975 = vmul.f32 %v4719, 0.2
      %v4976 = vmul.f32 %v4720, 0.2
      %v4977 = vmul.f32 %v4721, 0.2
      %v4978 = vmul.f32 %v4722, 0.2
      %v4979 = vmul.f32 %v4723, 0.2
      %v4980 = vmul.f32 %v4724, 0.2
      %v4981 = vmul.f32 %v4725, 0.2
      %v4982 = vmul.f32 %v4726, 0.2
      %v4983 = vmul.f32 %v4727, 0.2
      %v4984 = vmul.f32 %v4728, 0.2
      %v4985 = vmul.f32 %v4729, 0.2
      %v4986 = vmul.f32 %v4730, 0.2
      %v4987 = vmul.f32 %v4731, 0.2
      %v4988 = vmul.f32 %v4732, 0.2
      %v4989 = vmul.f32 %v4733, 0.2
      %v4990 = vmul.f32 %v4734, 0.2
      %v4991 = vmul.f32 %v4735, 0.2
      %v4992 = vmul.f32 %v4736, 0.2
      %v4993 = vmul.f32 %v4737, 0.2
      %v4994 = vmul.f32 %v4738, 0.2
      %v4995 = vmul.f32 %v4739, 0.2
      %v4996 = vmul.f32 %v4740, 0.2
      %v4997 = vmul.f32 %v4741, 0.2
      %v4998 = vmul.f32 %v4742, 0.2
      %v4999 = vmul.f32 %v4743, 0.2
      %v5000 = vmul.f32 %v4744, 0.2
      %v5001 = vmul.f32 %v4745, 0.2
      %v5002 = vmul.f32 %v4746, 0.2
      %v5003 = vmul.f32 %v4747, 0.2
      %v5004 = vmul.f32 %v4748, 0.2
      %v5005 = vmul.f32 %v4749, 0.2
      %v5006 = vmul.f32 %v4750, 0.2
      %v5007 = vmul.f32 %v4751, 0.2
      %v5008 = vmul.f32 %v4752, 0.2
      %v5009 = vmul.f32 %v4753, 0.2
      %v5010 = vmul.f32 %v4754, 0.2
      %v5011 = vmul.f32 %v4755, 0.2
      %v5012 = vmul.f32 %v4756, 0.2
      %v5013 = vmul.f32 %v4757, 0.2
      %v5014 = vmul.f32 %v4758, 0.2
      %v5015 = vmul.f32 %v4759, 0.2
      %v5016 = vmul.f32 %v4760, 0.2
      %v5017 = vmul.f32 %v4761, 0.2
      %v5018 = vmul.f32 %v4762, 0.2
      %v5019 = vmul.f32 %v4763, 0.2
      %v5020 = vmul.f32 %v4764, 0.2
      %v5021 = vmul.f32 %v4765, 0.2
      %v5022 = vmul.f32 %v4766, 0.2
      %v5023 = vmul.f32 %v4767, 0.2
      %v5024 = vmul.f32 %v4768, 0.2
      %v5025 = vmul.f32 %v4769, 0.2
      %v5026 = vmul.f32 %v4770, 0.2
      %v5027 = vmul.f32 %v4771, 0.2
      %v5028 = vmul.f32 %v4772, 0.2
      %v5029 = vmul.f32 %v4773, 0.2
      %v5030 = vmul.f32 %v4774, 0.2
      %v5031 = vmul.f32 %v4775, 0.2
      %v5032 = vmul.f32 %v4776, 0.2
      %v5033 = vmul.f32 %v4777, 0.2
      %v5034 = vmul.f32 %v4778, 0.2
      %v5035 = vmul.f32 %v4779, 0.2
      %v5036 = vmul.f32 %v4780, 0.2
      %v5037 = vmul.f32 %v4781, 0.2
      %v5038 = vmul.f32 %v4782, 0.2
      %v5039 = vmul.f32 %v4783, 0.2
      %v5040 = vmul.f32 %v4784, 0.2
      %v5041 = vmul.f32 %v4785, 0.2
      %v5042 = vmul.f32 %v4786, 0.2
      %v5043 = vmul.f32 %v4787, 0.2
      %v5044 = vmul.f32 %v4788, 0.2
      %v5045 = vmul.f32 %v4789, 0.2
      %v5046 = vmul.f32 %v4790, 0.2
      %v5047 = vmul.f32 %v4791, 0.2
      %v5048 = vmul.f32 %v4792, 0.2
      %v5049 = vmul.f32 %v4793, 0.2
      %v5050 = vmul.f32 %v4794, 0.2
      %v5051 = vmul.f32 %v4795, 0.2
      %v5052 = vmul.f32 %v4796, 0.2
      %v5053 = vmul.f32 %v4797, 0.2
      %v5054 = vmul.f32 %v4798, 0.2
      %v5055 = vmul.f32 %v4799, 0.2
      %v5056 = vmul.f32 %v4800, 0.2
      %v5057 = vmul.f32 %v4801, 0.2
      %v5058 = vmul.f32 %v4802, 0.2
      %v5059 = vmul.f32 %v4803, 0.2
      %v5060 = vmul.f32 %v4804, 0.2
      %v5061 = vmul.f32 %v4805, 0.2
      %v5062 = vmul.f32 %v4806, 0.2
      %v5063 = vmul.f32 %v4807, 0.2
      %v5064 = vmul.f32 %v4808, 0.2
      %v5065 = vmul.f32 %v4809, 0.2
      %v5066 = vmul.f32 %v4810, 0.2
      %v5067 = vmul.f32 %v4811, 0.2
      %v5068 = vmul.f32 %v4812, 0.2
      %v5069 = vmul.f32 %v4813, 0.2
      %v5070 = vmul.f32 %v4814, 0.2
      %v5071 = vmul.f32 %v4815, 0.2
      %v5072 = vmul.f32 %v4816, 0.2
      %v5073 = vmul.f32 %v4817, 0.2
      %v5074 = vmul.f32 %v4818, 0.2
      %v5075 = vmul.f32 %v4819, 0.2
      %v5076 = vmul.f32 %v4820, 0.2
      %v5077 = vmul.f32 %v4821, 0.2
      %v5078 = vmul.f32 %v4822, 0.2
      %v5079 = vmul.f32 %v4823, 0.2
      %v5080 = vmul.f32 %v4824, 0.2
      %v5081 = vsel %vm4825, %v4697, %v4953
      %v5082 = vsel %vm4826, %v4698, %v4954
      %v5083 = vsel %vm4827, %v4699, %v4955
      %v5084 = vsel %vm4828, %v4700, %v4956
      %v5085 = vsel %vm4829, %v4701, %v4957
      %v5086 = vsel %vm4830, %v4702, %v4958
      %v5087 = vsel %vm4831, %v4703, %v4959
      %v5088 = vsel %vm4832, %v4704, %v4960
      %v5089 = vsel %vm4833, %v4705, %v4961
      %v5090 = vsel %vm4834, %v4706, %v4962
      %v5091 = vsel %vm4835, %v4707, %v4963
      %v5092 = vsel %vm4836, %v4708, %v4964
      %v5093 = vsel %vm4837, %v4709, %v4965
      %v5094 = vsel %vm4838, %v4710, %v4966
      %v5095 = vsel %vm4839, %v4711, %v4967
      %v5096 = vsel %vm4840, %v4712, %v4968
      %v5097 = vsel %vm4841, %v4713, %v4969
      %v5098 = vsel %vm4842, %v4714, %v4970
      %v5099 = vsel %vm4843, %v4715, %v4971
      %v5100 = vsel %vm4844, %v4716, %v4972
      %v5101 = vsel %vm4845, %v4717, %v4973
      %v5102 = vsel %vm4846, %v4718, %v4974
      %v5103 = vsel %vm4847, %v4719, %v4975
      %v5104 = vsel %vm4848, %v4720, %v4976
      %v5105 = vsel %vm4849, %v4721, %v4977
      %v5106 = vsel %vm4850, %v4722, %v4978
      %v5107 = vsel %vm4851, %v4723, %v4979
      %v5108 = vsel %vm4852, %v4724, %v4980
      %v5109 = vsel %vm4853, %v4725, %v4981
      %v5110 = vsel %vm4854, %v4726, %v4982
      %v5111 = vsel %vm4855, %v4727, %v4983
      %v5112 = vsel %vm4856, %v4728, %v4984
      %v5113 = vsel %vm4857, %v4729, %v4985
      %v5114 = vsel %vm4858, %v4730, %v4986
      %v5115 = vsel %vm4859, %v4731, %v4987
      %v5116 = vsel %vm4860, %v4732, %v4988
      %v5117 = vsel %vm4861, %v4733, %v4989
      %v5118 = vsel %vm4862, %v4734, %v4990
      %v5119 = vsel %vm4863, %v4735, %v4991
      %v5120 = vsel %vm4864, %v4736, %v4992
      %v5121 = vsel %vm4865, %v4737, %v4993
      %v5122 = vsel %vm4866, %v4738, %v4994
      %v5123 = vsel %vm4867, %v4739, %v4995
      %v5124 = vsel %vm4868, %v4740, %v4996
      %v5125 = vsel %vm4869, %v4741, %v4997
      %v5126 = vsel %vm4870, %v4742, %v4998
      %v5127 = vsel %vm4871, %v4743, %v4999
      %v5128 = vsel %vm4872, %v4744, %v5000
      %v5129 = vsel %vm4873, %v4745, %v5001
      %v5130 = vsel %vm4874, %v4746, %v5002
      %v5131 = vsel %vm4875, %v4747, %v5003
      %v5132 = vsel %vm4876, %v4748, %v5004
      %v5133 = vsel %vm4877, %v4749, %v5005
      %v5134 = vsel %vm4878, %v4750, %v5006
      %v5135 = vsel %vm4879, %v4751, %v5007
      %v5136 = vsel %vm4880, %v4752, %v5008
      %v5137 = vsel %vm4881, %v4753, %v5009
      %v5138 = vsel %vm4882, %v4754, %v5010
      %v5139 = vsel %vm4883, %v4755, %v5011
      %v5140 = vsel %vm4884, %v4756, %v5012
      %v5141 = vsel %vm4885, %v4757, %v5013
      %v5142 = vsel %vm4886, %v4758, %v5014
      %v5143 = vsel %vm4887, %v4759, %v5015
      %v5144 = vsel %vm4888, %v4760, %v5016
      %v5145 = vsel %vm4889, %v4761, %v5017
      %v5146 = vsel %vm4890, %v4762, %v5018
      %v5147 = vsel %vm4891, %v4763, %v5019
      %v5148 = vsel %vm4892, %v4764, %v5020
      %v5149 = vsel %vm4893, %v4765, %v5021
      %v5150 = vsel %vm4894, %v4766, %v5022
      %v5151 = vsel %vm4895, %v4767, %v5023
      %v5152 = vsel %vm4896, %v4768, %v5024
      %v5153 = vsel %vm4897, %v4769, %v5025
      %v5154 = vsel %vm4898, %v4770, %v5026
      %v5155 = vsel %vm4899, %v4771, %v5027
      %v5156 = vsel %vm4900, %v4772, %v5028
      %v5157 = vsel %vm4901, %v4773, %v5029
      %v5158 = vsel %vm4902, %v4774, %v5030
      %v5159 = vsel %vm4903, %v4775, %v5031
      %v5160 = vsel %vm4904, %v4776, %v5032
      %v5161 = vsel %vm4905, %v4777, %v5033
      %v5162 = vsel %vm4906, %v4778, %v5034
      %v5163 = vsel %vm4907, %v4779, %v5035
      %v5164 = vsel %vm4908, %v4780, %v5036
      %v5165 = vsel %vm4909, %v4781, %v5037
      %v5166 = vsel %vm4910, %v4782, %v5038
      %v5167 = vsel %vm4911, %v4783, %v5039
      %v5168 = vsel %vm4912, %v4784, %v5040
      %v5169 = vsel %vm4913, %v4785, %v5041
      %v5170 = vsel %vm4914, %v4786, %v5042
      %v5171 = vsel %vm4915, %v4787, %v5043
      %v5172 = vsel %vm4916, %v4788, %v5044
      %v5173 = vsel %vm4917, %v4789, %v5045
      %v5174 = vsel %vm4918, %v4790, %v5046
      %v5175 = vsel %vm4919, %v4791, %v5047
      %v5176 = vsel %vm4920, %v4792, %v5048
      %v5177 = vsel %vm4921, %v4793, %v5049
      %v5178 = vsel %vm4922, %v4794, %v5050
      %v5179 = vsel %vm4923, %v4795, %v5051
      %v5180 = vsel %vm4924, %v4796, %v5052
      %v5181 = vsel %vm4925, %v4797, %v5053
      %v5182 = vsel %vm4926, %v4798, %v5054
      %v5183 = vsel %vm4927, %v4799, %v5055
      %v5184 = vsel %vm4928, %v4800, %v5056
      %v5185 = vsel %vm4929, %v4801, %v5057
      %v5186 = vsel %vm4930, %v4802, %v5058
      %v5187 = vsel %vm4931, %v4803, %v5059
      %v5188 = vsel %vm4932, %v4804, %v5060
      %v5189 = vsel %vm4933, %v4805, %v5061
      %v5190 = vsel %vm4934, %v4806, %v5062
      %v5191 = vsel %vm4935, %v4807, %v5063
      %v5192 = vsel %vm4936, %v4808, %v5064
      %v5193 = vsel %vm4937, %v4809, %v5065
      %v5194 = vsel %vm4938, %v4810, %v5066
      %v5195 = vsel %vm4939, %v4811, %v5067
      %v5196 = vsel %vm4940, %v4812, %v5068
      %v5197 = vsel %vm4941, %v4813, %v5069
      %v5198 = vsel %vm4942, %v4814, %v5070
      %v5199 = vsel %vm4943, %v4815, %v5071
      %v5200 = vsel %vm4944, %v4816, %v5072
      %v5201 = vsel %vm4945, %v4817, %v5073
      %v5202 = vsel %vm4946, %v4818, %v5074
      %v5203 = vsel %vm4947, %v4819, %v5075
      %v5204 = vsel %vm4948, %v4820, %v5076
      %v5205 = vsel %vm4949, %v4821, %v5077
      %v5206 = vsel %vm4950, %v4822, %v5078
      %v5207 = vsel %vm4951, %v4823, %v5079
      %v5208 = vsel %vm4952, %v4824, %v5080
      %vm5209 = vcmask 64512
      %5210 = vst.msk [vmem:[%s248] sm:$0xff] %vm5209, %v5081
      %5211 = vst.msk [vmem:[%s248 + $0x8] sm:$0xff] %vm5209, %v5082
      %5212 = vst.msk [vmem:[%s248 + $0x10] sm:$0xff] %vm5209, %v5083
      %5213 = vst.msk [vmem:[%s248 + $0x18] sm:$0xff] %vm5209, %v5084
      %5214 = vst.msk [vmem:[%s248 + $0x20] sm:$0xff] %vm5209, %v5085
      %5215 = vst.msk [vmem:[%s248 + $0x28] sm:$0xff] %vm5209, %v5086
      %5216 = vst.msk [vmem:[%s248 + $0x30] sm:$0xff] %vm5209, %v5087
      %5217 = vst.msk [vmem:[%s248 + $0x38] sm:$0xff] %vm5209, %v5088
      %5218 = vst.msk [vmem:[%s248 + $0x40] sm:$0xff] %vm5209, %v5089
      %5219 = vst.msk [vmem:[%s248 + $0x48] sm:$0xff] %vm5209, %v5090
      %5220 = vst.msk [vmem:[%s248 + $0x50] sm:$0xff] %vm5209, %v5091
      %5221 = vst.msk [vmem:[%s248 + $0x58] sm:$0xff] %vm5209, %v5092
      %5222 = vst.msk [vmem:[%s248 + $0x60] sm:$0xff] %vm5209, %v5093
      %5223 = vst.msk [vmem:[%s248 + $0x68] sm:$0xff] %vm5209, %v5094
      %5224 = vst.msk [vmem:[%s248 + $0x70] sm:$0xff] %vm5209, %v5095
      %5225 = vst.msk [vmem:[%s248 + $0x78] sm:$0xff] %vm5209, %v5096
      %5226 = vst.msk [vmem:[%s248 + $0x80] sm:$0xff] %vm5209, %v5097
      %5227 = vst.msk [vmem:[%s248 + $0x88] sm:$0xff] %vm5209, %v5098
      %5228 = vst.msk [vmem:[%s248 + $0x90] sm:$0xff] %vm5209, %v5099
      %5229 = vst.msk [vmem:[%s248 + $0x98] sm:$0xff] %vm5209, %v5100
      %5230 = vst.msk [vmem:[%s248 + $0xa0] sm:$0xff] %vm5209, %v5101
      %5231 = vst.msk [vmem:[%s248 + $0xa8] sm:$0xff] %vm5209, %v5102
      %5232 = vst.msk [vmem:[%s248 + $0xb0] sm:$0xff] %vm5209, %v5103
      %5233 = vst.msk [vmem:[%s248 + $0xb8] sm:$0xff] %vm5209, %v5104
      %5234 = vst.msk [vmem:[%s248 + $0xc0] sm:$0xff] %vm5209, %v5105
      %5235 = vst.msk [vmem:[%s248 + $0xc8] sm:$0xff] %vm5209, %v5106
      %5236 = vst.msk [vmem:[%s248 + $0xd0] sm:$0xff] %vm5209, %v5107
      %5237 = vst.msk [vmem:[%s248 + $0xd8] sm:$0xff] %vm5209, %v5108
      %5238 = vst.msk [vmem:[%s248 + $0xe0] sm:$0xff] %vm5209, %v5109
      %5239 = vst.msk [vmem:[%s248 + $0xe8] sm:$0xff] %vm5209, %v5110
      %5240 = vst.msk [vmem:[%s248 + $0xf0] sm:$0xff] %vm5209, %v5111
      %5241 = vst.msk [vmem:[%s248 + $0xf8] sm:$0xff] %vm5209, %v5112
      %5242 = vst.msk [vmem:[%s248 + $0x100] sm:$0xff] %vm5209, %v5113
      %5243 = vst.msk [vmem:[%s248 + $0x108] sm:$0xff] %vm5209, %v5114
      %5244 = vst.msk [vmem:[%s248 + $0x110] sm:$0xff] %vm5209, %v5115
      %5245 = vst.msk [vmem:[%s248 + $0x118] sm:$0xff] %vm5209, %v5116
      %5246 = vst.msk [vmem:[%s248 + $0x120] sm:$0xff] %vm5209, %v5117
      %5247 = vst.msk [vmem:[%s248 + $0x128] sm:$0xff] %vm5209, %v5118
      %5248 = vst.msk [vmem:[%s248 + $0x130] sm:$0xff] %vm5209, %v5119
      %5249 = vst.msk [vmem:[%s248 + $0x138] sm:$0xff] %vm5209, %v5120
      %5250 = vst.msk [vmem:[%s248 + $0x140] sm:$0xff] %vm5209, %v5121
      %5251 = vst.msk [vmem:[%s248 + $0x148] sm:$0xff] %vm5209, %v5122
      %5252 = vst.msk [vmem:[%s248 + $0x150] sm:$0xff] %vm5209, %v5123
      %5253 = vst.msk [vmem:[%s248 + $0x158] sm:$0xff] %vm5209, %v5124
      %5254 = vst.msk [vmem:[%s248 + $0x160] sm:$0xff] %vm5209, %v5125
      %5255 = vst.msk [vmem:[%s248 + $0x168] sm:$0xff] %vm5209, %v5126
      %5256 = vst.msk [vmem:[%s248 + $0x170] sm:$0xff] %vm5209, %v5127
      %5257 = vst.msk [vmem:[%s248 + $0x178] sm:$0xff] %vm5209, %v5128
      %5258 = vst.msk [vmem:[%s248 + $0x180] sm:$0xff] %vm5209, %v5129
      %5259 = vst.msk [vmem:[%s248 + $0x188] sm:$0xff] %vm5209, %v5130
      %5260 = vst.msk [vmem:[%s248 + $0x190] sm:$0xff] %vm5209, %v5131
      %5261 = vst.msk [vmem:[%s248 + $0x198] sm:$0xff] %vm5209, %v5132
      %5262 = vst.msk [vmem:[%s248 + $0x1a0] sm:$0xff] %vm5209, %v5133
      %5263 = vst.msk [vmem:[%s248 + $0x1a8] sm:$0xff] %vm5209, %v5134
      %5264 = vst.msk [vmem:[%s248 + $0x1b0] sm:$0xff] %vm5209, %v5135
      %5265 = vst.msk [vmem:[%s248 + $0x1b8] sm:$0xff] %vm5209, %v5136
      %5266 = vst.msk [vmem:[%s248 + $0x1c0] sm:$0xff] %vm5209, %v5137
      %5267 = vst.msk [vmem:[%s248 + $0x1c8] sm:$0xff] %vm5209, %v5138
      %5268 = vst.msk [vmem:[%s248 + $0x1d0] sm:$0xff] %vm5209, %v5139
      %5269 = vst.msk [vmem:[%s248 + $0x1d8] sm:$0xff] %vm5209, %v5140
      %5270 = vst.msk [vmem:[%s248 + $0x1e0] sm:$0xff] %vm5209, %v5141
      %5271 = vst.msk [vmem:[%s248 + $0x1e8] sm:$0xff] %vm5209, %v5142
      %5272 = vst.msk [vmem:[%s248 + $0x1f0] sm:$0xff] %vm5209, %v5143
      %5273 = vst.msk [vmem:[%s248 + $0x1f8] sm:$0xff] %vm5209, %v5144
      %5274 = vst.msk [vmem:[%s248 + $0x200] sm:$0xff] %vm5209, %v5145
      %5275 = vst.msk [vmem:[%s248 + $0x208] sm:$0xff] %vm5209, %v5146
      %5276 = vst.msk [vmem:[%s248 + $0x210] sm:$0xff] %vm5209, %v5147
      %5277 = vst.msk [vmem:[%s248 + $0x218] sm:$0xff] %vm5209, %v5148
      %5278 = vst.msk [vmem:[%s248 + $0x220] sm:$0xff] %vm5209, %v5149
      %5279 = vst.msk [vmem:[%s248 + $0x228] sm:$0xff] %vm5209, %v5150
      %5280 = vst.msk [vmem:[%s248 + $0x230] sm:$0xff] %vm5209, %v5151
      %5281 = vst.msk [vmem:[%s248 + $0x238] sm:$0xff] %vm5209, %v5152
      %5282 = vst.msk [vmem:[%s248 + $0x240] sm:$0xff] %vm5209, %v5153
      %5283 = vst.msk [vmem:[%s248 + $0x248] sm:$0xff] %vm5209, %v5154
      %5284 = vst.msk [vmem:[%s248 + $0x250] sm:$0xff] %vm5209, %v5155
      %5285 = vst.msk [vmem:[%s248 + $0x258] sm:$0xff] %vm5209, %v5156
      %5286 = vst.msk [vmem:[%s248 + $0x260] sm:$0xff] %vm5209, %v5157
      %5287 = vst.msk [vmem:[%s248 + $0x268] sm:$0xff] %vm5209, %v5158
      %5288 = vst.msk [vmem:[%s248 + $0x270] sm:$0xff] %vm5209, %v5159
      %5289 = vst.msk [vmem:[%s248 + $0x278] sm:$0xff] %vm5209, %v5160
      %5290 = vst.msk [vmem:[%s248 + $0x280] sm:$0xff] %vm5209, %v5161
      %5291 = vst.msk [vmem:[%s248 + $0x288] sm:$0xff] %vm5209, %v5162
      %5292 = vst.msk [vmem:[%s248 + $0x290] sm:$0xff] %vm5209, %v5163
      %5293 = vst.msk [vmem:[%s248 + $0x298] sm:$0xff] %vm5209, %v5164
      %5294 = vst.msk [vmem:[%s248 + $0x2a0] sm:$0xff] %vm5209, %v5165
      %5295 = vst.msk [vmem:[%s248 + $0x2a8] sm:$0xff] %vm5209, %v5166
      %5296 = vst.msk [vmem:[%s248 + $0x2b0] sm:$0xff] %vm5209, %v5167
      %5297 = vst.msk [vmem:[%s248 + $0x2b8] sm:$0xff] %vm5209, %v5168
      %5298 = vst.msk [vmem:[%s248 + $0x2c0] sm:$0xff] %vm5209, %v5169
      %5299 = vst.msk [vmem:[%s248 + $0x2c8] sm:$0xff] %vm5209, %v5170
      %5300 = vst.msk [vmem:[%s248 + $0x2d0] sm:$0xff] %vm5209, %v5171
      %5301 = vst.msk [vmem:[%s248 + $0x2d8] sm:$0xff] %vm5209, %v5172
      %5302 = vst.msk [vmem:[%s248 + $0x2e0] sm:$0xff] %vm5209, %v5173
      %5303 = vst.msk [vmem:[%s248 + $0x2e8] sm:$0xff] %vm5209, %v5174
      %5304 = vst.msk [vmem:[%s248 + $0x2f0] sm:$0xff] %vm5209, %v5175
      %5305 = vst.msk [vmem:[%s248 + $0x2f8] sm:$0xff] %vm5209, %v5176
      %5306 = vst.msk [vmem:[%s248 + $0x300] sm:$0xff] %vm5209, %v5177
      %5307 = vst.msk [vmem:[%s248 + $0x308] sm:$0xff] %vm5209, %v5178
      %5308 = vst.msk [vmem:[%s248 + $0x310] sm:$0xff] %vm5209, %v5179
      %5309 = vst.msk [vmem:[%s248 + $0x318] sm:$0xff] %vm5209, %v5180
      %5310 = vst.msk [vmem:[%s248 + $0x320] sm:$0xff] %vm5209, %v5181
      %5311 = vst.msk [vmem:[%s248 + $0x328] sm:$0xff] %vm5209, %v5182
      %5312 = vst.msk [vmem:[%s248 + $0x330] sm:$0xff] %vm5209, %v5183
      %5313 = vst.msk [vmem:[%s248 + $0x338] sm:$0xff] %vm5209, %v5184
      %5314 = vst.msk [vmem:[%s248 + $0x340] sm:$0xff] %vm5209, %v5185
      %5315 = vst.msk [vmem:[%s248 + $0x348] sm:$0xff] %vm5209, %v5186
      %5316 = vst.msk [vmem:[%s248 + $0x350] sm:$0xff] %vm5209, %v5187
      %5317 = vst.msk [vmem:[%s248 + $0x358] sm:$0xff] %vm5209, %v5188
      %5318 = vst.msk [vmem:[%s248 + $0x360] sm:$0xff] %vm5209, %v5189
      %5319 = vst.msk [vmem:[%s248 + $0x368] sm:$0xff] %vm5209, %v5190
      %5320 = vst.msk [vmem:[%s248 + $0x370] sm:$0xff] %vm5209, %v5191
      %5321 = vst.msk [vmem:[%s248 + $0x378] sm:$0xff] %vm5209, %v5192
      %5322 = vst.msk [vmem:[%s248 + $0x380] sm:$0xff] %vm5209, %v5193
      %5323 = vst.msk [vmem:[%s248 + $0x388] sm:$0xff] %vm5209, %v5194
      %5324 = vst.msk [vmem:[%s248 + $0x390] sm:$0xff] %vm5209, %v5195
      %5325 = vst.msk [vmem:[%s248 + $0x398] sm:$0xff] %vm5209, %v5196
      %5326 = vst.msk [vmem:[%s248 + $0x3a0] sm:$0xff] %vm5209, %v5197
      %5327 = vst.msk [vmem:[%s248 + $0x3a8] sm:$0xff] %vm5209, %v5198
      %5328 = vst.msk [vmem:[%s248 + $0x3b0] sm:$0xff] %vm5209, %v5199
      %5329 = vst.msk [vmem:[%s248 + $0x3b8] sm:$0xff] %vm5209, %v5200
      %5330 = vst.msk [vmem:[%s248 + $0x3c0] sm:$0xff] %vm5209, %v5201
      %5331 = vst.msk [vmem:[%s248 + $0x3c8] sm:$0xff] %vm5209, %v5202
      %5332 = vst.msk [vmem:[%s248 + $0x3d0] sm:$0xff] %vm5209, %v5203
      %5333 = vst.msk [vmem:[%s248 + $0x3d8] sm:$0xff] %vm5209, %v5204
      %5334 = vst.msk [vmem:[%s248 + $0x3e0] sm:$0xff] %vm5209, %v5205
      %5335 = vst.msk [vmem:[%s248 + $0x3e8] sm:$0xff] %vm5209, %v5206
      %5336 = vst.msk [vmem:[%s248 + $0x3f0] sm:$0xff] %vm5209, %v5207
      %5337 = vst.msk [vmem:[%s248 + $0x3f8] sm:$0xff] %vm5209, %v5208
      %s5338 = smul.u32 128, %s16
      %p5339 = scmp.lt.s32.totalorder %s5338, 255
      %s5340 = scalar_select %p5339, %s5338, 255
      %s5341 = smul.addr %s5340, 8
      %s5342 = scalar_lea.vmem %s5, %s5341
      // Predicated region
      $region41: #{tpu_custom_call.1} parent=39 // pred_check
        %p5343 = pneg %p149
      $region42: #{tpu_custom_call.1} parent=39 // pred_check_branch
        %5345 = sbr.rel (%p5343) target = $region44
      $region43: #{tpu_custom_call.1} parent=39 // pred_region
        %s5346 = smul.u32 128, %s16
      $region44: #{tpu_custom_call.1} parent=39 // pred_fallthru
        _
    $region40: #{tpu_custom_call.1} parent=5 // pred_fallthru
      _
    %p5347 = scmp.le.s32.totalorder 2, %s11
    // Predicated region
    $region45: #{tpu_custom_call.1} parent=5 // pred_check
      %p5348 = pneg %p5347
    $region46: #{tpu_custom_call.1} parent=5 // pred_check_branch
      %5350 = sbr.rel (%p5348) target = $region48
    $region47: #{tpu_custom_call.1} parent=5 // pred_region
      %s5351 = ssub.s32 %s11, 2
      // Predicated region
      $region49: #{tpu_custom_call.1} parent=47 // pred_check
        %p5352 = pneg %p155
      $region50: #{tpu_custom_call.1} parent=47 // pred_check_branch
        %5354 = sbr.rel (%p5352) target = $region52
      $region51: #{tpu_custom_call.1} parent=47 // pred_region
        %s5355 = smul.u32 128, %s17
        %p5356 = scmp.lt.s32.totalorder %s5355, 255
        %s5357 = scalar_select %p5356, %s5355, 255
        %s5358 = smul.addr %s5357, 8
        %s5359 = scalar_lea.vmem %s5, %s5358
      $region52: #{tpu_custom_call.1} parent=47 // pred_fallthru
        _
    $region48: #{tpu_custom_call.1} parent=5 // pred_fallthru
      _
  $region6: #{tpu_custom_call.1} parent=0 // loop_footer
    %s15 = sadd.s32 1, %s11
  $region7: #{tpu_custom_call.1} parent=0 // loop_footer_branch
    %10 = sbr.rel target = $region3
  $region8: #{tpu_custom_call.1} parent=0 // loop_exit
    _

</llo_original>
